<compile_context>
chip_gen: v7x
topology: tpu7x:2x2x1
jax: 0.10.0
libtpu: 0.0.40
codegen_flags: <defaults>
</compile_context>

<pallas_src>
import jax
import jax.numpy as jnp
from jax import lax
from jax.experimental import pallas as pl
from jax.experimental.pallas import tpu as pltpu

EPS = 1e-5   # PyTorch InstanceNorm2d default eps (affine=False, no running stats)
_W0 = 8      # sublane-aligned column offset of the interior inside the pad scratch


def residual_block_kernel(x_ref, w1_ref, w2_ref, o_ref, pad_ref):
    _, H, W, C = x_ref.shape
    HW = H * W
    pdt = pad_ref.dtype  # matmul dtype (bf16 by default)

    def reflect_pad_into(a):
        """Write ReflectionPad2d(1)(a) into pad_ref.

        a: (H, W, C) value already in pad_ref dtype.  The padded image occupies
        rows 0..H+1 and columns _W0-1 .. _W0+W (interior at column _W0).
        Columns 0.._W0-2 of the scratch are never written nor read.
        """
        pad_ref[1:H + 1, _W0:_W0 + W, :] = a                       # interior (aligned)
        pad_ref[0:1, _W0:_W0 + W, :] = a[1:2]                      # top    <- row 1
        pad_ref[H + 1:H + 2, _W0:_W0 + W, :] = a[H - 2:H - 1]      # bottom <- row H-2
        # Left / right columns (corners included: border rows already written,
        # so whole-column copies reproduce the corner reflection).
        pad_ref[:, _W0 - 1:_W0, :] = pad_ref[:, _W0 + 1:_W0 + 2, :]                 # <- col 1
        pad_ref[:, _W0 + W:_W0 + W + 1, :] = pad_ref[:, _W0 + W - 2:_W0 + W - 1, :]  # <- col W-2

    def conv3x3(a_hwc, w_ref):
        # Reflection-pad into the reused scratch (in matmul dtype), then one
        # im2col MXU matmul with K = 9*C.
        reflect_pad_into(a_hwc.astype(pdt))
        # Hoist the dx column slices: 3 slabs (H+2, W, C); only dx=0 and dx=2
        # start sublane-unaligned.  The 9 taps are then free leading-dim slices.
        slabs = [pad_ref[:, _W0 - 1 + dx:_W0 - 1 + dx + W, :] for dx in range(3)]
        taps = [slabs[dx][dy:dy + H] for dy in range(3) for dx in range(3)]
        patches = jnp.concatenate(taps, axis=-1).reshape(HW, 9 * C)
        # No bias: it is cancelled exactly by the following InstanceNorm.
        return jnp.dot(patches, w_ref[...], preferred_element_type=jnp.float32)

    def inorm_stats(a):
        # One-pass InstanceNorm statistics in f32: var = E[x^2] - mean^2.
        # (Clamped >= 0; slight drift vs. PyTorch's two-pass variance is well
        # within test tolerances.)
        inv_n = 1.0 / a.shape[0]
        mean = jnp.sum(a, axis=0, keepdims=True) * inv_n
        ex2 = jnp.sum(a * a, axis=0, keepdims=True) * inv_n
        var = jnp.maximum(ex2 - mean * mean, 0.0)
        return mean, lax.rsqrt(var + EPS)

    x = x_ref[0].astype(jnp.float32)                               # (H, W, C) f32

    # conv1 -> InstanceNorm -> ReLU (norm + relu fused into one elementwise pass)
    y = conv3x3(x, w1_ref)
    mean, inv_std = inorm_stats(y)
    y = jnp.maximum((y - mean) * inv_std, 0.0)

    # conv2 -> InstanceNorm -> residual add (fused)
    y = conv3x3(y.reshape(H, W, C), w2_ref)
    mean, inv_std = inorm_stats(y)
    out = x.reshape(HW, C) + (y - mean) * inv_std

    o_ref[0] = out.reshape(H, W, C).astype(o_ref.dtype)


def residual_block(x_nchw, w1, b1, w2, b2, *, matmul_dtype=jnp.bfloat16):
    """Fused ResidualBlock forward.

    x_nchw: (B, C, H, W); conv weights in PyTorch layout (Cout, Cin, 3, 3).
    b1/b2 are accepted for interface parity with the PyTorch module but are
    mathematically cancelled by InstanceNorm(affine=False), so they are never
    sent to the kernel.  matmul_dtype=bf16 is the recommended path on all
    generations (v5e's MXU is bf16-native); pass jnp.float32 for exact math.
    """
    B, C, H, W = x_nchw.shape
    assert H >= 2 and W >= 2, "ReflectionPad2d(1) requires H >= 2 and W >= 2"
    assert w1.shape == (C, C, 3, 3) and w2.shape == (C, C, 3, 3), "Cin must equal Cout"
    del b1, b2  # cancelled exactly by InstanceNorm(affine=False)

    x = jnp.transpose(x_nchw, (0, 2, 3, 1))                       # NCHW -> NHWC

    def prep_w(w):
        # (Cout, Cin, 3, 3) -> (3, 3, Cin, Cout) -> single (9*Cin, Cout) MXU slab.
        return jnp.transpose(w, (2, 3, 1, 0)).reshape(9 * C, C).astype(matmul_dtype)

    w1_k, w2_k = prep_w(w1), prep_w(w2)

    const = lambda shape: pl.BlockSpec(shape, lambda b: (0,) * len(shape))

    w_itemsize = jnp.dtype(matmul_dtype).itemsize
    x_itemsize = jnp.dtype(x.dtype).itemsize

    # Per-grid-step VMEM footprint -> scoped VMEM limit (instead of a fixed 64 MiB).
    io_bytes = 2 * 2 * H * W * C * x_itemsize                     # double-buffered in + out blocks
    wt_bytes = 2 * 2 * 9 * C * C * w_itemsize                     # two resident weight slabs (buffered)
    pad_bytes = (H + 2) * (_W0 + W + 1) * C * w_itemsize          # pad scratch
    patch_bytes = H * W * 9 * C * w_itemsize                      # im2col materialization
    f32_bytes = 3 * H * W * C * 4                                 # x, conv output, result (f32)
    vmem_needed = io_bytes + wt_bytes + pad_bytes + patch_bytes + f32_bytes
    vmem_limit = max(16 << 20, min(2 * vmem_needed, 100 << 20))

    cost = pl.CostEstimate(
        flops=2 * (2 * H * W * (9 * C) * C) * B,                  # two im2col matmuls per image
        transcendentals=2 * B * C,                                # rsqrt per channel per norm
        bytes_accessed=2 * B * H * W * C * x_itemsize + 2 * 9 * C * C * w_itemsize,
    )

    out = pl.pallas_call(
        residual_block_kernel,
        out_shape=jax.ShapeDtypeStruct((B, H, W, C), x.dtype),
        grid_spec=pltpu.PrefetchScalarGridSpec(
            num_scalar_prefetch=0,
            grid=(B,),
            in_specs=[
                pl.BlockSpec((1, H, W, C), lambda b: (b, 0, 0, 0)),
                const((9 * C, C)),
                const((9 * C, C)),
            ],
            out_specs=pl.BlockSpec((1, H, W, C), lambda b: (b, 0, 0, 0)),
            scratch_shapes=[pltpu.VMEM((H + 2, _W0 + W + 1, C), matmul_dtype)],
        ),
        compiler_params=pltpu.CompilerParams(
            dimension_semantics=("parallel",),
            vmem_limit_bytes=int(vmem_limit),
        ),
        cost_estimate=cost,
    )(x, w1_k, w2_k)

    return jnp.transpose(out, (0, 3, 1, 2))                       # NHWC -> NCHW


def _reference(x_nchw, w1, b1, w2, b2):
    """Pure-JAX reference (NCHW, mirrors PyTorch semantics, bias included)."""
    def conv(a, w, b):
        ap = jnp.pad(a, ((0, 0), (0, 0), (1, 1), (1, 1)), mode="reflect")
        y = lax.conv_general_dilated(
            ap, w, window_strides=(1, 1), padding="VALID",
            dimension_numbers=("NCHW", "OIHW", "NCHW"))
        return y + b[None, :, None, None]

    def inorm(a):
        mean = jnp.mean(a, axis=(2, 3), keepdims=True)
        var = jnp.mean((a - mean) ** 2, axis=(2, 3), keepdims=True)
        return (a - mean) * lax.rsqrt(var + EPS)

    y = conv(x_nchw, w1, b1)
    y = jnp.maximum(inorm(y), 0.0)
    y = conv(y, w2, b2)
    y = inorm(y)
    return x_nchw + y


if __name__ == "__main__":
    B, C, H, W = 2, 4, 16, 16
    key = jax.random.PRNGKey(0)
    kx, kw1, kb1, kw2, kb2 = jax.random.split(key, 5)

    x = jax.random.normal(kx, (B, C, H, W), dtype=jnp.float32)
    # Conv2d weights in PyTorch layout (Cout, Cin, kH, kW), deterministic init
    w1 = jax.random.normal(kw1, (C, C, 3, 3), dtype=jnp.float32) * 0.1
    b1 = jax.random.normal(kb1, (C,), dtype=jnp.float32) * 0.1
    w2 = jax.random.normal(kw2, (C, C, 3, 3), dtype=jnp.float32) * 0.1
    b2 = jax.random.normal(kb2, (C,), dtype=jnp.float32) * 0.1

    ref = jax.block_until_ready(_reference(x, w1, b1, w2, b2))

    # Exact-precision path (f32 MXU inputs): must match the f32 reference tightly.
    out_f32 = jax.block_until_ready(
        residual_block(x, w1, b1, w2, b2, matmul_dtype=jnp.float32))
    assert out_f32.shape == (B, C, H, W)
    assert jnp.max(jnp.abs(out_f32 - ref)) < 1e-4, "f32 path mismatch vs reference"

    # Default fast path: bf16 im2col / MXU inputs, f32 accumulation / norm math.
    out_bf16 = jax.block_until_ready(residual_block(x, w1, b1, w2, b2))
    assert out_bf16.shape == (B, C, H, W)
    assert jnp.max(jnp.abs(out_bf16 - ref)) < 5e-2, "bf16 path mismatch vs reference"

    print("KERNEL_OK")
</pallas_src>

<mosaic_0001>
module attributes {stable_mosaic.version = 11 : i64} {
  func.func @residual_block_kernel(%arg0: i32, %arg1: memref<1x16x16x4xf32, #tpu.memory_space<vmem>>, %arg2: memref<36x4xf32, #tpu.memory_space<vmem>>, %arg3: memref<36x4xf32, #tpu.memory_space<vmem>>, %arg4: memref<1x16x16x4xf32, #tpu.memory_space<vmem>>, %arg5: memref<18x25x4xf32, #tpu.memory_space<vmem>>) attributes {dimension_semantics = [#tpu.dimension_semantics<parallel>], iteration_bounds = array<i64: 2>, scalar_prefetch = 0 : i64, scratch_operands = 1 : i64, tpu.core_type = #tpu.core_type<tc>, window_params = [{transform_indices = @transform_0, window_bounds = array<i64: 1, 16, 16, 4>}, {pipeline_mode = #tpu.pipeline_mode<synchronous>, transform_indices = @transform_1, window_bounds = array<i64: 36, 4>}, {pipeline_mode = #tpu.pipeline_mode<synchronous>, transform_indices = @transform_2, window_bounds = array<i64: 36, 4>}, {transform_indices = @transform_3, window_bounds = array<i64: 1, 16, 16, 4>}]} {
    %c0 = arith.constant 0 : index
    %c0_0 = arith.constant 0 : index
    %c0_1 = arith.constant 0 : index
    %c0_2 = arith.constant 0 : index
    %0 = vector.load %arg1[%c0, %c0_0, %c0_1, %c0_2] : memref<1x16x16x4xf32, #tpu.memory_space<vmem>>, vector<1x16x16x4xf32>
    %1 = vector.shape_cast %0 : vector<1x16x16x4xf32> to vector<16x16x4xf32>
    %c1 = arith.constant 1 : index
    %c8 = arith.constant 8 : index
    %c0_3 = arith.constant 0 : index
    %2 = vector.load %arg5[%c1, %c8, %c0_3] : memref<18x25x4xf32, #tpu.memory_space<vmem>>, vector<16x16x4xf32>
    tpu.vector_store %arg5[%c1, %c8, %c0_3], %1 {strides = array<i32>} : memref<18x25x4xf32, #tpu.memory_space<vmem>>, vector<16x16x4xf32>,
    %3 = vector.extract_strided_slice %1 {offsets = [1, 0, 0], sizes = [1, 16, 4], strides = [1, 1, 1]} : vector<16x16x4xf32> to vector<1x16x4xf32>
    %c0_4 = arith.constant 0 : index
    %c8_5 = arith.constant 8 : index
    %c0_6 = arith.constant 0 : index
    %4 = vector.load %arg5[%c0_4, %c8_5, %c0_6] : memref<18x25x4xf32, #tpu.memory_space<vmem>>, vector<1x16x4xf32>
    tpu.vector_store %arg5[%c0_4, %c8_5, %c0_6], %3 {strides = array<i32>} : memref<18x25x4xf32, #tpu.memory_space<vmem>>, vector<1x16x4xf32>,
    %5 = vector.extract_strided_slice %1 {offsets = [14, 0, 0], sizes = [1, 16, 4], strides = [1, 1, 1]} : vector<16x16x4xf32> to vector<1x16x4xf32>
    %c17 = arith.constant 17 : index
    %c8_7 = arith.constant 8 : index
    %c0_8 = arith.constant 0 : index
    %6 = vector.load %arg5[%c17, %c8_7, %c0_8] : memref<18x25x4xf32, #tpu.memory_space<vmem>>, vector<1x16x4xf32>
    tpu.vector_store %arg5[%c17, %c8_7, %c0_8], %5 {strides = array<i32>} : memref<18x25x4xf32, #tpu.memory_space<vmem>>, vector<1x16x4xf32>,
    %c0_9 = arith.constant 0 : index
    %c9 = arith.constant 9 : index
    %c0_10 = arith.constant 0 : index
    %7 = vector.load %arg5[%c0_9, %c9, %c0_10] : memref<18x25x4xf32, #tpu.memory_space<vmem>>, vector<18x1x4xf32>
    %c0_11 = arith.constant 0 : index
    %c7 = arith.constant 7 : index
    %c0_12 = arith.constant 0 : index
    %8 = vector.load %arg5[%c0_11, %c7, %c0_12] : memref<18x25x4xf32, #tpu.memory_space<vmem>>, vector<18x1x4xf32>
    tpu.vector_store %arg5[%c0_11, %c7, %c0_12], %7 {strides = array<i32>} : memref<18x25x4xf32, #tpu.memory_space<vmem>>, vector<18x1x4xf32>,
    %c0_13 = arith.constant 0 : index
    %c22 = arith.constant 22 : index
    %c0_14 = arith.constant 0 : index
    %9 = vector.load %arg5[%c0_13, %c22, %c0_14] : memref<18x25x4xf32, #tpu.memory_space<vmem>>, vector<18x1x4xf32>
    %c0_15 = arith.constant 0 : index
    %c24 = arith.constant 24 : index
    %c0_16 = arith.constant 0 : index
    %10 = vector.load %arg5[%c0_15, %c24, %c0_16] : memref<18x25x4xf32, #tpu.memory_space<vmem>>, vector<18x1x4xf32>
    tpu.vector_store %arg5[%c0_15, %c24, %c0_16], %9 {strides = array<i32>} : memref<18x25x4xf32, #tpu.memory_space<vmem>>, vector<18x1x4xf32>,
    %c0_17 = arith.constant 0 : index
    %c7_18 = arith.constant 7 : index
    %c0_19 = arith.constant 0 : index
    %11 = vector.load %arg5[%c0_17, %c7_18, %c0_19] : memref<18x25x4xf32, #tpu.memory_space<vmem>>, vector<18x16x4xf32>
    %c0_20 = arith.constant 0 : index
    %c8_21 = arith.constant 8 : index
    %c0_22 = arith.constant 0 : index
    %12 = vector.load %arg5[%c0_20, %c8_21, %c0_22] : memref<18x25x4xf32, #tpu.memory_space<vmem>>, vector<18x16x4xf32>
    %c0_23 = arith.constant 0 : index
    %c9_24 = arith.constant 9 : index
    %c0_25 = arith.constant 0 : index
    %13 = vector.load %arg5[%c0_23, %c9_24, %c0_25] : memref<18x25x4xf32, #tpu.memory_space<vmem>>, vector<18x16x4xf32>
    %14 = vector.extract_strided_slice %11 {offsets = [0, 0, 0], sizes = [16, 16, 4], strides = [1, 1, 1]} : vector<18x16x4xf32> to vector<16x16x4xf32>
    %15 = vector.extract_strided_slice %12 {offsets = [0, 0, 0], sizes = [16, 16, 4], strides = [1, 1, 1]} : vector<18x16x4xf32> to vector<16x16x4xf32>
    %16 = vector.extract_strided_slice %13 {offsets = [0, 0, 0], sizes = [16, 16, 4], strides = [1, 1, 1]} : vector<18x16x4xf32> to vector<16x16x4xf32>
    %17 = vector.extract_strided_slice %11 {offsets = [1, 0, 0], sizes = [16, 16, 4], strides = [1, 1, 1]} : vector<18x16x4xf32> to vector<16x16x4xf32>
    %18 = vector.extract_strided_slice %12 {offsets = [1, 0, 0], sizes = [16, 16, 4], strides = [1, 1, 1]} : vector<18x16x4xf32> to vector<16x16x4xf32>
    %19 = vector.extract_strided_slice %13 {offsets = [1, 0, 0], sizes = [16, 16, 4], strides = [1, 1, 1]} : vector<18x16x4xf32> to vector<16x16x4xf32>
    %20 = vector.extract_strided_slice %11 {offsets = [2, 0, 0], sizes = [16, 16, 4], strides = [1, 1, 1]} : vector<18x16x4xf32> to vector<16x16x4xf32>
    %21 = vector.extract_strided_slice %12 {offsets = [2, 0, 0], sizes = [16, 16, 4], strides = [1, 1, 1]} : vector<18x16x4xf32> to vector<16x16x4xf32>
    %22 = vector.extract_strided_slice %13 {offsets = [2, 0, 0], sizes = [16, 16, 4], strides = [1, 1, 1]} : vector<18x16x4xf32> to vector<16x16x4xf32>
    %23 = tpu.concatenate %14, %15, %16, %17, %18, %19, %20, %21, %22 in 2 : vector<16x16x4xf32>, vector<16x16x4xf32>, vector<16x16x4xf32>, vector<16x16x4xf32>, vector<16x16x4xf32>, vector<16x16x4xf32>, vector<16x16x4xf32>, vector<16x16x4xf32>, vector<16x16x4xf32> -> vector<16x16x36xf32>
    %24 = vector.shape_cast %23 : vector<16x16x36xf32> to vector<256x36xf32>
    %c0_26 = arith.constant 0 : index
    %c0_27 = arith.constant 0 : index
    %25 = vector.load %arg2[%c0_26, %c0_27] : memref<36x4xf32, #tpu.memory_space<vmem>>, vector<36x4xf32>
    %cst = arith.constant dense<0.000000e+00> : vector<256x4xf32>
    %26 = tpu.matmul %24, %25, %cst {dimension_numbers = #tpu.dot_dimension_numbers<[1], [0], [0], [1], [0, 0, 1, 1], [], []>} : vector<256x36xf32>, vector<36x4xf32>, vector<256x4xf32> -> vector<256x4xf32>
    %cst_28 = arith.constant dense<0.000000e+00> : vector<4xf32>
    %27 = vector.multi_reduction <add>, %26, %cst_28 [0] : vector<256x4xf32> to vector<4xf32>
    %28 = vector.shape_cast %27 : vector<4xf32> to vector<1x4xf32>
    %cst_29 = arith.constant 3.906250e-03 : f32
    %29 = vector.broadcast %cst_29 : f32 to vector<1x4xf32>
    %30 = arith.mulf %28, %29 : vector<1x4xf32>
    %31 = arith.mulf %26, %26 : vector<256x4xf32>
    %cst_30 = arith.constant dense<0.000000e+00> : vector<4xf32>
    %32 = vector.multi_reduction <add>, %31, %cst_30 [0] : vector<256x4xf32> to vector<4xf32>
    %33 = vector.shape_cast %32 : vector<4xf32> to vector<1x4xf32>
    %cst_31 = arith.constant 3.906250e-03 : f32
    %34 = vector.broadcast %cst_31 : f32 to vector<1x4xf32>
    %35 = arith.mulf %33, %34 : vector<1x4xf32>
    %36 = arith.mulf %30, %30 : vector<1x4xf32>
    %37 = arith.subf %35, %36 : vector<1x4xf32>
    %cst_32 = arith.constant 0.000000e+00 : f32
    %38 = vector.broadcast %cst_32 : f32 to vector<1x4xf32>
    %39 = arith.maximumf %37, %38 : vector<1x4xf32>
    %cst_33 = arith.constant 9.99999974E-6 : f32
    %40 = vector.broadcast %cst_33 : f32 to vector<1x4xf32>
    %41 = arith.addf %39, %40 : vector<1x4xf32>
    %42 = math.rsqrt %41 : vector<1x4xf32>
    %43 = vector.broadcast %30 : vector<1x4xf32> to vector<256x4xf32>
    %44 = arith.subf %26, %43 : vector<256x4xf32>
    %45 = vector.broadcast %42 : vector<1x4xf32> to vector<256x4xf32>
    %46 = arith.mulf %44, %45 : vector<256x4xf32>
    %cst_34 = arith.constant 0.000000e+00 : f32
    %47 = vector.broadcast %cst_34 : f32 to vector<256x4xf32>
    %48 = arith.maximumf %46, %47 : vector<256x4xf32>
    %49 = vector.shape_cast %48 : vector<256x4xf32> to vector<16x16x4xf32>
    %c1_35 = arith.constant 1 : index
    %c8_36 = arith.constant 8 : index
    %c0_37 = arith.constant 0 : index
    %50 = vector.load %arg5[%c1_35, %c8_36, %c0_37] : memref<18x25x4xf32, #tpu.memory_space<vmem>>, vector<16x16x4xf32>
    tpu.vector_store %arg5[%c1_35, %c8_36, %c0_37], %49 {strides = array<i32>} : memref<18x25x4xf32, #tpu.memory_space<vmem>>, vector<16x16x4xf32>,
    %51 = vector.extract_strided_slice %49 {offsets = [1, 0, 0], sizes = [1, 16, 4], strides = [1, 1, 1]} : vector<16x16x4xf32> to vector<1x16x4xf32>
    %c0_38 = arith.constant 0 : index
    %c8_39 = arith.constant 8 : index
    %c0_40 = arith.constant 0 : index
    %52 = vector.load %arg5[%c0_38, %c8_39, %c0_40] : memref<18x25x4xf32, #tpu.memory_space<vmem>>, vector<1x16x4xf32>
    tpu.vector_store %arg5[%c0_38, %c8_39, %c0_40], %51 {strides = array<i32>} : memref<18x25x4xf32, #tpu.memory_space<vmem>>, vector<1x16x4xf32>,
    %53 = vector.extract_strided_slice %49 {offsets = [14, 0, 0], sizes = [1, 16, 4], strides = [1, 1, 1]} : vector<16x16x4xf32> to vector<1x16x4xf32>
    %c17_41 = arith.constant 17 : index
    %c8_42 = arith.constant 8 : index
    %c0_43 = arith.constant 0 : index
    %54 = vector.load %arg5[%c17_41, %c8_42, %c0_43] : memref<18x25x4xf32, #tpu.memory_space<vmem>>, vector<1x16x4xf32>
    tpu.vector_store %arg5[%c17_41, %c8_42, %c0_43], %53 {strides = array<i32>} : memref<18x25x4xf32, #tpu.memory_space<vmem>>, vector<1x16x4xf32>,
    %c0_44 = arith.constant 0 : index
    %c9_45 = arith.constant 9 : index
    %c0_46 = arith.constant 0 : index
    %55 = vector.load %arg5[%c0_44, %c9_45, %c0_46] : memref<18x25x4xf32, #tpu.memory_space<vmem>>, vector<18x1x4xf32>
    %c0_47 = arith.constant 0 : index
    %c7_48 = arith.constant 7 : index
    %c0_49 = arith.constant 0 : index
    %56 = vector.load %arg5[%c0_47, %c7_48, %c0_49] : memref<18x25x4xf32, #tpu.memory_space<vmem>>, vector<18x1x4xf32>
    tpu.vector_store %arg5[%c0_47, %c7_48, %c0_49], %55 {strides = array<i32>} : memref<18x25x4xf32, #tpu.memory_space<vmem>>, vector<18x1x4xf32>,
    %c0_50 = arith.constant 0 : index
    %c22_51 = arith.constant 22 : index
    %c0_52 = arith.constant 0 : index
    %57 = vector.load %arg5[%c0_50, %c22_51, %c0_52] : memref<18x25x4xf32, #tpu.memory_space<vmem>>, vector<18x1x4xf32>
    %c0_53 = arith.constant 0 : index
    %c24_54 = arith.constant 24 : index
    %c0_55 = arith.constant 0 : index
    %58 = vector.load %arg5[%c0_53, %c24_54, %c0_55] : memref<18x25x4xf32, #tpu.memory_space<vmem>>, vector<18x1x4xf32>
    tpu.vector_store %arg5[%c0_53, %c24_54, %c0_55], %57 {strides = array<i32>} : memref<18x25x4xf32, #tpu.memory_space<vmem>>, vector<18x1x4xf32>,
    %c0_56 = arith.constant 0 : index
    %c7_57 = arith.constant 7 : index
    %c0_58 = arith.constant 0 : index
    %59 = vector.load %arg5[%c0_56, %c7_57, %c0_58] : memref<18x25x4xf32, #tpu.memory_space<vmem>>, vector<18x16x4xf32>
    %c0_59 = arith.constant 0 : index
    %c8_60 = arith.constant 8 : index
    %c0_61 = arith.constant 0 : index
    %60 = vector.load %arg5[%c0_59, %c8_60, %c0_61] : memref<18x25x4xf32, #tpu.memory_space<vmem>>, vector<18x16x4xf32>
    %c0_62 = arith.constant 0 : index
    %c9_63 = arith.constant 9 : index
    %c0_64 = arith.constant 0 : index
    %61 = vector.load %arg5[%c0_62, %c9_63, %c0_64] : memref<18x25x4xf32, #tpu.memory_space<vmem>>, vector<18x16x4xf32>
    %62 = vector.extract_strided_slice %59 {offsets = [0, 0, 0], sizes = [16, 16, 4], strides = [1, 1, 1]} : vector<18x16x4xf32> to vector<16x16x4xf32>
    %63 = vector.extract_strided_slice %60 {offsets = [0, 0, 0], sizes = [16, 16, 4], strides = [1, 1, 1]} : vector<18x16x4xf32> to vector<16x16x4xf32>
    %64 = vector.extract_strided_slice %61 {offsets = [0, 0, 0], sizes = [16, 16, 4], strides = [1, 1, 1]} : vector<18x16x4xf32> to vector<16x16x4xf32>
    %65 = vector.extract_strided_slice %59 {offsets = [1, 0, 0], sizes = [16, 16, 4], strides = [1, 1, 1]} : vector<18x16x4xf32> to vector<16x16x4xf32>
    %66 = vector.extract_strided_slice %60 {offsets = [1, 0, 0], sizes = [16, 16, 4], strides = [1, 1, 1]} : vector<18x16x4xf32> to vector<16x16x4xf32>
    %67 = vector.extract_strided_slice %61 {offsets = [1, 0, 0], sizes = [16, 16, 4], strides = [1, 1, 1]} : vector<18x16x4xf32> to vector<16x16x4xf32>
    %68 = vector.extract_strided_slice %59 {offsets = [2, 0, 0], sizes = [16, 16, 4], strides = [1, 1, 1]} : vector<18x16x4xf32> to vector<16x16x4xf32>
    %69 = vector.extract_strided_slice %60 {offsets = [2, 0, 0], sizes = [16, 16, 4], strides = [1, 1, 1]} : vector<18x16x4xf32> to vector<16x16x4xf32>
    %70 = vector.extract_strided_slice %61 {offsets = [2, 0, 0], sizes = [16, 16, 4], strides = [1, 1, 1]} : vector<18x16x4xf32> to vector<16x16x4xf32>
    %71 = tpu.concatenate %62, %63, %64, %65, %66, %67, %68, %69, %70 in 2 : vector<16x16x4xf32>, vector<16x16x4xf32>, vector<16x16x4xf32>, vector<16x16x4xf32>, vector<16x16x4xf32>, vector<16x16x4xf32>, vector<16x16x4xf32>, vector<16x16x4xf32>, vector<16x16x4xf32> -> vector<16x16x36xf32>
    %72 = vector.shape_cast %71 : vector<16x16x36xf32> to vector<256x36xf32>
    %c0_65 = arith.constant 0 : index
    %c0_66 = arith.constant 0 : index
    %73 = vector.load %arg3[%c0_65, %c0_66] : memref<36x4xf32, #tpu.memory_space<vmem>>, vector<36x4xf32>
    %cst_67 = arith.constant dense<0.000000e+00> : vector<256x4xf32>
    %74 = tpu.matmul %72, %73, %cst_67 {dimension_numbers = #tpu.dot_dimension_numbers<[1], [0], [0], [1], [0, 0, 1, 1], [], []>} : vector<256x36xf32>, vector<36x4xf32>, vector<256x4xf32> -> vector<256x4xf32>
    %cst_68 = arith.constant dense<0.000000e+00> : vector<4xf32>
    %75 = vector.multi_reduction <add>, %74, %cst_68 [0] : vector<256x4xf32> to vector<4xf32>
    %76 = vector.shape_cast %75 : vector<4xf32> to vector<1x4xf32>
    %cst_69 = arith.constant 3.906250e-03 : f32
    %77 = vector.broadcast %cst_69 : f32 to vector<1x4xf32>
    %78 = arith.mulf %76, %77 : vector<1x4xf32>
    %79 = arith.mulf %74, %74 : vector<256x4xf32>
    %cst_70 = arith.constant dense<0.000000e+00> : vector<4xf32>
    %80 = vector.multi_reduction <add>, %79, %cst_70 [0] : vector<256x4xf32> to vector<4xf32>
    %81 = vector.shape_cast %80 : vector<4xf32> to vector<1x4xf32>
    %cst_71 = arith.constant 3.906250e-03 : f32
    %82 = vector.broadcast %cst_71 : f32 to vector<1x4xf32>
    %83 = arith.mulf %81, %82 : vector<1x4xf32>
    %84 = arith.mulf %78, %78 : vector<1x4xf32>
    %85 = arith.subf %83, %84 : vector<1x4xf32>
    %cst_72 = arith.constant 0.000000e+00 : f32
    %86 = vector.broadcast %cst_72 : f32 to vector<1x4xf32>
    %87 = arith.maximumf %85, %86 : vector<1x4xf32>
    %cst_73 = arith.constant 9.99999974E-6 : f32
    %88 = vector.broadcast %cst_73 : f32 to vector<1x4xf32>
    %89 = arith.addf %87, %88 : vector<1x4xf32>
    %90 = math.rsqrt %89 : vector<1x4xf32>
    %91 = vector.shape_cast %1 : vector<16x16x4xf32> to vector<256x4xf32>
    %92 = vector.broadcast %78 : vector<1x4xf32> to vector<256x4xf32>
    %93 = arith.subf %74, %92 : vector<256x4xf32>
    %94 = vector.broadcast %90 : vector<1x4xf32> to vector<256x4xf32>
    %95 = arith.mulf %93, %94 : vector<256x4xf32>
    %96 = arith.addf %91, %95 : vector<256x4xf32>
    %97 = vector.shape_cast %96 : vector<256x4xf32> to vector<16x16x4xf32>
    %c0_74 = arith.constant 0 : index
    %c0_75 = arith.constant 0 : index
    %c0_76 = arith.constant 0 : index
    %c0_77 = arith.constant 0 : index
    %98 = vector.load %arg4[%c0_74, %c0_75, %c0_76, %c0_77] : memref<1x16x16x4xf32, #tpu.memory_space<vmem>>, vector<1x16x16x4xf32>
    %99 = vector.shape_cast %98 : vector<1x16x16x4xf32> to vector<16x16x4xf32>
    %100 = vector.shape_cast %97 : vector<16x16x4xf32> to vector<1x16x16x4xf32>
    tpu.vector_store %arg4[%c0_74, %c0_75, %c0_76, %c0_77], %100 {strides = array<i32>} : memref<1x16x16x4xf32, #tpu.memory_space<vmem>>, vector<1x16x16x4xf32>,
    return
  }
  func.func @transform_0(%arg0: i32) -> (i32, i32, i32, i32) {
    %c0_i32 = arith.constant 0 : i32
    %c0_i32_0 = arith.constant 0 : i32
    %c0_i32_1 = arith.constant 0 : i32
    %c0_i32_2 = arith.constant 0 : i32
    return %arg0, %c0_i32, %c0_i32_0, %c0_i32_1 : i32, i32, i32, i32
  }
  func.func @transform_1(%arg0: i32) -> (i32, i32) {
    %c0_i32 = arith.constant 0 : i32
    %c0_i32_0 = arith.constant 0 : i32
    %c0_i32_1 = arith.constant 0 : i32
    return %c0_i32, %c0_i32_0 : i32, i32
  }
  func.func @transform_2(%arg0: i32) -> (i32, i32) {
    %c0_i32 = arith.constant 0 : i32
    %c0_i32_0 = arith.constant 0 : i32
    %c0_i32_1 = arith.constant 0 : i32
    return %c0_i32, %c0_i32_0 : i32, i32
  }
  func.func @transform_3(%arg0: i32) -> (i32, i32, i32, i32) {
    %c0_i32 = arith.constant 0 : i32
    %c0_i32_0 = arith.constant 0 : i32
    %c0_i32_1 = arith.constant 0 : i32
    %c0_i32_2 = arith.constant 0 : i32
    return %arg0, %c0_i32, %c0_i32_0, %c0_i32_1 : i32, i32, i32, i32
  }
}

</mosaic_0001>

<llo_original>
// kernel: tpu_custom_call.1
$region0: #{tpu_custom_call.1}
  #allocation0 [shape = 'u32[]', space=smem, size = 0x4, offset = 0x4, fixed_abs, tag = 'smem constant byte address 0x4 - core index']
  #allocation1 [shape = 'u32[144,128]{1,0:T(1,128)}', space=vmem, size = 0x12000, scoped, tag = 'internal scratch']
  #allocation2 [shape = 'f32[18,25,4]{2,1,0:T(8,128)}', space=vmem, size = 0x48000, scoped, tag = 'scratch operand']
  %s0 = inlined_call_operand.vmem [shape: f32[2,16,16,4], index: 0, kind: input, shape index: {}]
  %s1 = inlined_call_operand.vmem [shape: f32[36,4], index: 1, kind: input, shape index: {}]
  %s2 = inlined_call_operand.vmem [shape: f32[36,4], index: 2, kind: input, shape index: {}]
  %s3 = inlined_call_operand.vmem [shape: f32[2,16,16,4], index: 3, kind: output, shape index: {}]
  %s4 = sld [smem:[#allocation0]]
  $region45: #{tpu_custom_call.1} parent=0
    _
  %s6 = ssub.s32 1, %s4
  %s7 = scalar_select 0, %s6, %s4
  loop: start=0, step=1, limit=4
  $region2: #{tpu_custom_call.1} parent=0 // loop_pre_header
    _
  $region3: #{tpu_custom_call.1} parent=0 // loop_header
    %s9 = sphi 0, %s13
    %p10 = scmp.ge.s32.totalorder %s9, 4
    %s19 = sphi 0, %s21
    %s22 = sphi 0, %s19
    %s23 = sphi 0, %s22
    %s39 = sphi 0, %s23
    %s43 = sphi 0, %s43
    %s45 = sphi 0, %s43
    %s46 = sphi 0, %s45
    %s60 = sphi 0, %s46
    %s64 = sphi 0, %s64
    %s66 = sphi 0, %s64
    %s67 = sphi 0, %s66
    %s81 = sphi 0, %s67
    %s87 = sphi 0, %s89
    %s90 = sphi 0, %s87
    %s91 = sphi 0, %s90
    %s107 = sphi 0, %s91
  $region4: #{tpu_custom_call.1} parent=0 // loop_header_branch
    %12 = sbr.rel (%p10) target = $region8
  $region5: #{tpu_custom_call.1} parent=0 // loop_body
    %s14 = ssub.s32 %s9, 1
    %s15 = ssub.s32 %s9, 2
    %s16 = sadd.s32 %s9, 1
    %s17 = ssub.s32 %s9, %s16
    %p18 = scmp.eq.s32.totalorder %s17, 0
    %s20 = sadd.s32 %s19, 1
    %s21 = scalar_select %p18, %s19, %s20
    %p24 = pneg %p18
    %p25 = scmp.eq.s32.totalorder %s9, 1
    %p26 = por %p24, %p25
    %p27 = scmp.ne.s32.totalorder %s19, %s22
    %p28 = scmp.eq.s32.totalorder %s9, 0
    %p29 = por %p27, %p28
    %p30 = scmp.ne.s32.totalorder %s19, %s22
    %p31 = scmp.eq.s32.totalorder %s14, 1
    %p32 = por %p30, %p31
    %p33 = scmp.ne.s32.totalorder %s22, %s23
    %p34 = scmp.eq.s32.totalorder %s14, 0
    %p35 = por %p33, %p34
    %p36 = scmp.ne.s32.totalorder %s22, %s23
    %p37 = scmp.eq.s32.totalorder %s15, 1
    %p38 = por %p36, %p37
    %p40 = scmp.ne.s32.totalorder %s23, %s39
    %p41 = scmp.eq.s32.totalorder %s15, 0
    %p42 = por %p40, %p41
    %s44 = sadd.s32 %s43, 1
    %p47 = scmp.eq.s32.totalorder %s9, 1
    %p48 = scmp.ne.s32.totalorder %s43, %s45
    %p49 = scmp.eq.s32.totalorder %s9, 0
    %p50 = por %p48, %p49
    %p51 = scmp.ne.s32.totalorder %s43, %s45
    %p52 = scmp.eq.s32.totalorder %s14, 1
    %p53 = por %p51, %p52
    %p54 = scmp.ne.s32.totalorder %s45, %s46
    %p55 = scmp.eq.s32.totalorder %s14, 0
    %p56 = por %p54, %p55
    %p57 = scmp.ne.s32.totalorder %s45, %s46
    %p58 = scmp.eq.s32.totalorder %s15, 1
    %p59 = por %p57, %p58
    %p61 = scmp.ne.s32.totalorder %s46, %s60
    %p62 = scmp.eq.s32.totalorder %s15, 0
    %p63 = por %p61, %p62
    %s65 = sadd.s32 %s64, 1
    %p68 = scmp.eq.s32.totalorder %s9, 1
    %p69 = scmp.ne.s32.totalorder %s64, %s66
    %p70 = scmp.eq.s32.totalorder %s9, 0
    %p71 = por %p69, %p70
    %p72 = scmp.ne.s32.totalorder %s64, %s66
    %p73 = scmp.eq.s32.totalorder %s14, 1
    %p74 = por %p72, %p73
    %p75 = scmp.ne.s32.totalorder %s66, %s67
    %p76 = scmp.eq.s32.totalorder %s14, 0
    %p77 = por %p75, %p76
    %p78 = scmp.ne.s32.totalorder %s66, %s67
    %p79 = scmp.eq.s32.totalorder %s15, 1
    %p80 = por %p78, %p79
    %p82 = scmp.ne.s32.totalorder %s67, %s81
    %p83 = scmp.eq.s32.totalorder %s15, 0
    %p84 = por %p82, %p83
    %s85 = ssub.s32 %s9, %s16
    %p86 = scmp.eq.s32.totalorder %s85, 0
    %s88 = sadd.s32 %s87, 1
    %s89 = scalar_select %p86, %s87, %s88
    %p92 = pneg %p86
    %p93 = scmp.eq.s32.totalorder %s9, 1
    %p94 = por %p92, %p93
    %p95 = scmp.ne.s32.totalorder %s87, %s90
    %p96 = scmp.eq.s32.totalorder %s9, 0
    %p97 = por %p95, %p96
    %p98 = scmp.ne.s32.totalorder %s87, %s90
    %p99 = scmp.eq.s32.totalorder %s14, 1
    %p100 = por %p98, %p99
    %p101 = scmp.ne.s32.totalorder %s90, %s91
    %p102 = scmp.eq.s32.totalorder %s14, 0
    %p103 = por %p101, %p102
    %p104 = scmp.ne.s32.totalorder %s90, %s91
    %p105 = scmp.eq.s32.totalorder %s15, 1
    %p106 = por %p104, %p105
    %p108 = scmp.ne.s32.totalorder %s91, %s107
    %p109 = scmp.eq.s32.totalorder %s15, 0
    %p110 = por %p108, %p109
    %p111 = scmp.le.s32.totalorder 1, %s9
    %p112 = scmp.lt.s32.totalorder %s9, 3
    %p113 = pnand %p111, %p112
    %p114 = pneg %p113
    // Predicated region
    $region9: #{tpu_custom_call.1} parent=5 // pred_check
      _
    $region10: #{tpu_custom_call.1} parent=5 // pred_check_branch
      %116 = sbr.rel (%p113) target = $region12
    $region11: #{tpu_custom_call.1} parent=5 // pred_region
      %s117 = ssub.s32 %s9, 1
      // Predicated region
      $region13: #{tpu_custom_call.1} parent=11 // pred_check
        %p118 = pneg %p56
      $region14: #{tpu_custom_call.1} parent=11 // pred_check_branch
        %120 = sbr.rel (%p118) target = $region16
      $region15: #{tpu_custom_call.1} parent=11 // pred_region
        _
      $region16: #{tpu_custom_call.1} parent=11 // pred_fallthru
        _
      // Predicated region
      $region17: #{tpu_custom_call.1} parent=11 // pred_check
        %p121 = pneg %p77
      $region18: #{tpu_custom_call.1} parent=11 // pred_check_branch
        %123 = sbr.rel (%p121) target = $region20
      $region19: #{tpu_custom_call.1} parent=11 // pred_region
        _
      $region20: #{tpu_custom_call.1} parent=11 // pred_fallthru
        _
    $region12: #{tpu_custom_call.1} parent=5 // pred_fallthru
      _
    %p124 = scmp.lt.s32.totalorder %s9, 2
    // Predicated region
    $region21: #{tpu_custom_call.1} parent=5 // pred_check
      %p125 = pneg %p124
    $region22: #{tpu_custom_call.1} parent=5 // pred_check_branch
      %127 = sbr.rel (%p125) target = $region24
    $region23: #{tpu_custom_call.1} parent=5 // pred_region
      // Predicated region
      $region25: #{tpu_custom_call.1} parent=23 // pred_check
        %p128 = pneg %p29
      $region26: #{tpu_custom_call.1} parent=23 // pred_check_branch
        %130 = sbr.rel (%p128) target = $region28
      $region27: #{tpu_custom_call.1} parent=23 // pred_region
        %p131 = scmp.lt.s32.totalorder %s9, 1
        %s132 = scalar_select %p131, %s9, 1
        %s133 = smul.addr %s132, 32
        %s134 = smul.addr %s133, 8
        %s135 = scalar_lea.vmem %s0, %s134
      $region28: #{tpu_custom_call.1} parent=23 // pred_fallthru
        _
    $region24: #{tpu_custom_call.1} parent=5 // pred_fallthru
      _
    %p136 = scmp.le.s32.totalorder 1, %s9
    %p137 = scmp.lt.s32.totalorder %s9, 3
    %p138 = pnand %p136, %p137
    %p139 = pneg %p138
    // Predicated region
    $region29: #{tpu_custom_call.1} parent=5 // pred_check
      _
    $region30: #{tpu_custom_call.1} parent=5 // pred_check_branch
      %141 = sbr.rel (%p138) target = $region32
    $region31: #{tpu_custom_call.1} parent=5 // pred_region
      %s142 = ssub.s32 %s9, 1
      %p143 = scmp.lt.s32.totalorder %s14, 1
      %s144 = scalar_select %p143, %s14, 1
      %s145 = smul.addr %s144, 32
      %s146 = smul.addr %s145, 8
      %s147 = scalar_lea.vmem %s0, %s146
      %p148 = pneg %p35
      %p149 = pneg %p32
      %p150 = pneg %p56
      %p151 = pneg %p53
      %p152 = pneg %p77
      %p153 = pneg %p74
      %p154 = pneg %p103
      %p155 = pneg %p100
      %p156 = scmp.lt.s32.totalorder %s14, 1
      %s157 = scalar_select %p156, %s14, 1
      %s158 = smul.addr %s157, 32
      %s159 = smul.addr %s158, 8
      %s160 = scalar_lea.vmem %s3, %s159
      %p161 = scmp.lt.s32.totalorder %s14, 1
      %s162 = scalar_select %p161, %s14, 1
      %s163 = smul.addr %s162, 32
      %s164 = smul.addr %s163, 8
      %s165 = scalar_lea.vmem %s0, %s164
      %p166 = scmp.lt.s32.totalorder %s14, 1
      %s167 = scalar_select %p166, %s14, 1
      %s168 = smul.addr %s167, 32
      %s169 = smul.addr %s168, 8
      %s170 = scalar_lea.vmem %s3, %s169
      %v171 = vld [vmem:[%s165] sm:$0xff]
      %v172 = vld [vmem:[%s165 + $0x8] sm:$0xff]
      %v173 = vld [vmem:[%s165 + $0x10] sm:$0xff]
      %v174 = vld [vmem:[%s165 + $0x18] sm:$0xff]
      %v175 = vld [vmem:[%s165 + $0x20] sm:$0xff]
      %v176 = vld [vmem:[%s165 + $0x28] sm:$0xff]
      %v177 = vld [vmem:[%s165 + $0x30] sm:$0xff]
      %v178 = vld [vmem:[%s165 + $0x38] sm:$0xff]
      %v179 = vld [vmem:[%s165 + $0x40] sm:$0xff]
      %v180 = vld [vmem:[%s165 + $0x48] sm:$0xff]
      %v181 = vld [vmem:[%s165 + $0x50] sm:$0xff]
      %v182 = vld [vmem:[%s165 + $0x58] sm:$0xff]
      %v183 = vld [vmem:[%s165 + $0x60] sm:$0xff]
      %v184 = vld [vmem:[%s165 + $0x68] sm:$0xff]
      %v185 = vld [vmem:[%s165 + $0x70] sm:$0xff]
      %v186 = vld [vmem:[%s165 + $0x78] sm:$0xff]
      %v187 = vld [vmem:[%s165 + $0x80] sm:$0xff]
      %v188 = vld [vmem:[%s165 + $0x88] sm:$0xff]
      %v189 = vld [vmem:[%s165 + $0x90] sm:$0xff]
      %v190 = vld [vmem:[%s165 + $0x98] sm:$0xff]
      %v191 = vld [vmem:[%s165 + $0xa0] sm:$0xff]
      %v192 = vld [vmem:[%s165 + $0xa8] sm:$0xff]
      %v193 = vld [vmem:[%s165 + $0xb0] sm:$0xff]
      %v194 = vld [vmem:[%s165 + $0xb8] sm:$0xff]
      %v195 = vld [vmem:[%s165 + $0xc0] sm:$0xff]
      %v196 = vld [vmem:[%s165 + $0xc8] sm:$0xff]
      %v197 = vld [vmem:[%s165 + $0xd0] sm:$0xff]
      %v198 = vld [vmem:[%s165 + $0xd8] sm:$0xff]
      %v199 = vld [vmem:[%s165 + $0xe0] sm:$0xff]
      %v200 = vld [vmem:[%s165 + $0xe8] sm:$0xff]
      %v201 = vld [vmem:[%s165 + $0xf0] sm:$0xff]
      %v202 = vld [vmem:[%s165 + $0xf8] sm:$0xff]
      %s203 = scalar_lea.vmem [#allocation2], 32
      %vm204 = vcmask 31744
      %205 = vst.msk [vmem:[%s203 + $0x8] sm:$0xff] %vm204, %v171
      %206 = vst.msk [vmem:[%s203 + $0x10] sm:$0xff] %vm204, %v172
      %207 = vst.msk [vmem:[%s203 + $0x28] sm:$0xff] %vm204, %v173
      %208 = vst.msk [vmem:[%s203 + $0x30] sm:$0xff] %vm204, %v174
      %209 = vst.msk [vmem:[%s203 + $0x48] sm:$0xff] %vm204, %v175
      %210 = vst.msk [vmem:[%s203 + $0x50] sm:$0xff] %vm204, %v176
      %211 = vst.msk [vmem:[%s203 + $0x68] sm:$0xff] %vm204, %v177
      %212 = vst.msk [vmem:[%s203 + $0x70] sm:$0xff] %vm204, %v178
      %213 = vst.msk [vmem:[%s203 + $0x88] sm:$0xff] %vm204, %v179
      %214 = vst.msk [vmem:[%s203 + $0x90] sm:$0xff] %vm204, %v180
      %215 = vst.msk [vmem:[%s203 + $0xa8] sm:$0xff] %vm204, %v181
      %216 = vst.msk [vmem:[%s203 + $0xb0] sm:$0xff] %vm204, %v182
      %217 = vst.msk [vmem:[%s203 + $0xc8] sm:$0xff] %vm204, %v183
      %218 = vst.msk [vmem:[%s203 + $0xd0] sm:$0xff] %vm204, %v184
      %219 = vst.msk [vmem:[%s203 + $0xe8] sm:$0xff] %vm204, %v185
      %220 = vst.msk [vmem:[%s203 + $0xf0] sm:$0xff] %vm204, %v186
      %221 = vst.msk [vmem:[%s203 + $0x108] sm:$0xff] %vm204, %v187
      %222 = vst.msk [vmem:[%s203 + $0x110] sm:$0xff] %vm204, %v188
      %223 = vst.msk [vmem:[%s203 + $0x128] sm:$0xff] %vm204, %v189
      %224 = vst.msk [vmem:[%s203 + $0x130] sm:$0xff] %vm204, %v190
      %225 = vst.msk [vmem:[%s203 + $0x148] sm:$0xff] %vm204, %v191
      %226 = vst.msk [vmem:[%s203 + $0x150] sm:$0xff] %vm204, %v192
      %227 = vst.msk [vmem:[%s203 + $0x168] sm:$0xff] %vm204, %v193
      %228 = vst.msk [vmem:[%s203 + $0x170] sm:$0xff] %vm204, %v194
      %229 = vst.msk [vmem:[%s203 + $0x188] sm:$0xff] %vm204, %v195
      %230 = vst.msk [vmem:[%s203 + $0x190] sm:$0xff] %vm204, %v196
      %231 = vst.msk [vmem:[%s203 + $0x1a8] sm:$0xff] %vm204, %v197
      %232 = vst.msk [vmem:[%s203 + $0x1b0] sm:$0xff] %vm204, %v198
      %233 = vst.msk [vmem:[%s203 + $0x1c8] sm:$0xff] %vm204, %v199
      %234 = vst.msk [vmem:[%s203 + $0x1d0] sm:$0xff] %vm204, %v200
      %235 = vst.msk [vmem:[%s203 + $0x1e8] sm:$0xff] %vm204, %v201
      %236 = vst.msk [vmem:[%s203 + $0x1f0] sm:$0xff] %vm204, %v202
      %237 = vst.msk [vmem:[#allocation2 + $0x8] sm:$0xff] %vm204, %v173
      %238 = vst.msk [vmem:[#allocation2 + $0x10] sm:$0xff] %vm204, %v174
      %s239 = scalar_lea.vmem [#allocation2], 544
      %240 = vst.msk [vmem:[%s239 + $0x8] sm:$0xff] %vm204, %v199
      %241 = vst.msk [vmem:[%s239 + $0x10] sm:$0xff] %vm204, %v200
      %v242 = vld [vmem:[#allocation2 + $0x9] sm:$0x1]
      %v243 = vld [vmem:[#allocation2 + $0x29] sm:$0x1]
      %v244 = vld [vmem:[#allocation2 + $0x49] sm:$0x1]
      %v245 = vld [vmem:[#allocation2 + $0x69] sm:$0x1]
      %v246 = vld [vmem:[#allocation2 + $0x89] sm:$0x1]
      %v247 = vld [vmem:[#allocation2 + $0xa9] sm:$0x1]
      %v248 = vld [vmem:[#allocation2 + $0xc9] sm:$0x1]
      %v249 = vld [vmem:[#allocation2 + $0xe9] sm:$0x1]
      %v250 = vld [vmem:[#allocation2 + $0x109] sm:$0x1]
      %v251 = vld [vmem:[#allocation2 + $0x129] sm:$0x1]
      %v252 = vld [vmem:[#allocation2 + $0x149] sm:$0x1]
      %v253 = vld [vmem:[#allocation2 + $0x169] sm:$0x1]
      %v254 = vld [vmem:[#allocation2 + $0x189] sm:$0x1]
      %v255 = vld [vmem:[#allocation2 + $0x1a9] sm:$0x1]
      %v256 = vld [vmem:[#allocation2 + $0x1c9] sm:$0x1]
      %v257 = vld [vmem:[#allocation2 + $0x1e9] sm:$0x1]
      %v258 = vld [vmem:[#allocation2 + $0x209] sm:$0x1]
      %v259 = vld [vmem:[#allocation2 + $0x229] sm:$0x1]
      %vm260 = vcmask 24576
      %261 = vst.msk [vmem:[#allocation2 + $0x7] sm:$0x1] %vm260, %v242
      %262 = vst.msk [vmem:[#allocation2 + $0x27] sm:$0x1] %vm260, %v243
      %263 = vst.msk [vmem:[#allocation2 + $0x47] sm:$0x1] %vm260, %v244
      %264 = vst.msk [vmem:[#allocation2 + $0x67] sm:$0x1] %vm260, %v245
      %265 = vst.msk [vmem:[#allocation2 + $0x87] sm:$0x1] %vm260, %v246
      %266 = vst.msk [vmem:[#allocation2 + $0xa7] sm:$0x1] %vm260, %v247
      %267 = vst.msk [vmem:[#allocation2 + $0xc7] sm:$0x1] %vm260, %v248
      %268 = vst.msk [vmem:[#allocation2 + $0xe7] sm:$0x1] %vm260, %v249
      %269 = vst.msk [vmem:[#allocation2 + $0x107] sm:$0x1] %vm260, %v250
      %270 = vst.msk [vmem:[#allocation2 + $0x127] sm:$0x1] %vm260, %v251
      %271 = vst.msk [vmem:[#allocation2 + $0x147] sm:$0x1] %vm260, %v252
      %272 = vst.msk [vmem:[#allocation2 + $0x167] sm:$0x1] %vm260, %v253
      %273 = vst.msk [vmem:[#allocation2 + $0x187] sm:$0x1] %vm260, %v254
      %274 = vst.msk [vmem:[#allocation2 + $0x1a7] sm:$0x1] %vm260, %v255
      %275 = vst.msk [vmem:[#allocation2 + $0x1c7] sm:$0x1] %vm260, %v256
      %276 = vst.msk [vmem:[#allocation2 + $0x1e7] sm:$0x1] %vm260, %v257
      %277 = vst.msk [vmem:[#allocation2 + $0x207] sm:$0x1] %vm260, %v258
      %278 = vst.msk [vmem:[#allocation2 + $0x227] sm:$0x1] %vm260, %v259
      %v279 = vld [vmem:[#allocation2 + $0x16] sm:$0x1]
      %v280 = vld [vmem:[#allocation2 + $0x36] sm:$0x1]
      %v281 = vld [vmem:[#allocation2 + $0x56] sm:$0x1]
      %v282 = vld [vmem:[#allocation2 + $0x76] sm:$0x1]
      %v283 = vld [vmem:[#allocation2 + $0x96] sm:$0x1]
      %v284 = vld [vmem:[#allocation2 + $0xb6] sm:$0x1]
      %v285 = vld [vmem:[#allocation2 + $0xd6] sm:$0x1]
      %v286 = vld [vmem:[#allocation2 + $0xf6] sm:$0x1]
      %v287 = vld [vmem:[#allocation2 + $0x116] sm:$0x1]
      %v288 = vld [vmem:[#allocation2 + $0x136] sm:$0x1]
      %v289 = vld [vmem:[#allocation2 + $0x156] sm:$0x1]
      %v290 = vld [vmem:[#allocation2 + $0x176] sm:$0x1]
      %v291 = vld [vmem:[#allocation2 + $0x196] sm:$0x1]
      %v292 = vld [vmem:[#allocation2 + $0x1b6] sm:$0x1]
      %v293 = vld [vmem:[#allocation2 + $0x1d6] sm:$0x1]
      %v294 = vld [vmem:[#allocation2 + $0x1f6] sm:$0x1]
      %v295 = vld [vmem:[#allocation2 + $0x216] sm:$0x1]
      %v296 = vld [vmem:[#allocation2 + $0x236] sm:$0x1]
      %297 = vst.msk [vmem:[#allocation2 + $0x18] sm:$0x1] %vm260, %v279
      %298 = vst.msk [vmem:[#allocation2 + $0x38] sm:$0x1] %vm260, %v280
      %299 = vst.msk [vmem:[#allocation2 + $0x58] sm:$0x1] %vm260, %v281
      %300 = vst.msk [vmem:[#allocation2 + $0x78] sm:$0x1] %vm260, %v282
      %301 = vst.msk [vmem:[#allocation2 + $0x98] sm:$0x1] %vm260, %v283
      %302 = vst.msk [vmem:[#allocation2 + $0xb8] sm:$0x1] %vm260, %v284
      %303 = vst.msk [vmem:[#allocation2 + $0xd8] sm:$0x1] %vm260, %v285
      %304 = vst.msk [vmem:[#allocation2 + $0xf8] sm:$0x1] %vm260, %v286
      %305 = vst.msk [vmem:[#allocation2 + $0x118] sm:$0x1] %vm260, %v287
      %306 = vst.msk [vmem:[#allocation2 + $0x138] sm:$0x1] %vm260, %v288
      %307 = vst.msk [vmem:[#allocation2 + $0x158] sm:$0x1] %vm260, %v289
      %308 = vst.msk [vmem:[#allocation2 + $0x178] sm:$0x1] %vm260, %v290
      %309 = vst.msk [vmem:[#allocation2 + $0x198] sm:$0x1] %vm260, %v291
      %310 = vst.msk [vmem:[#allocation2 + $0x1b8] sm:$0x1] %vm260, %v292
      %311 = vst.msk [vmem:[#allocation2 + $0x1d8] sm:$0x1] %vm260, %v293
      %312 = vst.msk [vmem:[#allocation2 + $0x1f8] sm:$0x1] %vm260, %v294
      %313 = vst.msk [vmem:[#allocation2 + $0x218] sm:$0x1] %vm260, %v295
      %314 = vst.msk [vmem:[#allocation2 + $0x238] sm:$0x1] %vm260, %v296
      %v315 = vld [vmem:[#allocation2 + $0x7] sm:$0xff]
      %v316 = vld [vmem:[#allocation2 + $0xf] sm:$0xff]
      %v317 = vld [vmem:[#allocation2 + $0x27] sm:$0xff]
      %v318 = vld [vmem:[#allocation2 + $0x2f] sm:$0xff]
      %v319 = vld [vmem:[#allocation2 + $0x47] sm:$0xff]
      %v320 = vld [vmem:[#allocation2 + $0x4f] sm:$0xff]
      %v321 = vld [vmem:[#allocation2 + $0x67] sm:$0xff]
      %v322 = vld [vmem:[#allocation2 + $0x6f] sm:$0xff]
      %v323 = vld [vmem:[#allocation2 + $0x87] sm:$0xff]
      %v324 = vld [vmem:[#allocation2 + $0x8f] sm:$0xff]
      %v325 = vld [vmem:[#allocation2 + $0xa7] sm:$0xff]
      %v326 = vld [vmem:[#allocation2 + $0xaf] sm:$0xff]
      %v327 = vld [vmem:[#allocation2 + $0xc7] sm:$0xff]
      %v328 = vld [vmem:[#allocation2 + $0xcf] sm:$0xff]
      %v329 = vld [vmem:[#allocation2 + $0xe7] sm:$0xff]
      %v330 = vld [vmem:[#allocation2 + $0xef] sm:$0xff]
      %v331 = vld [vmem:[#allocation2 + $0x107] sm:$0xff]
      %v332 = vld [vmem:[#allocation2 + $0x10f] sm:$0xff]
      %v333 = vld [vmem:[#allocation2 + $0x127] sm:$0xff]
      %v334 = vld [vmem:[#allocation2 + $0x12f] sm:$0xff]
      %v335 = vld [vmem:[#allocation2 + $0x147] sm:$0xff]
      %v336 = vld [vmem:[#allocation2 + $0x14f] sm:$0xff]
      %v337 = vld [vmem:[#allocation2 + $0x167] sm:$0xff]
      %v338 = vld [vmem:[#allocation2 + $0x16f] sm:$0xff]
      %v339 = vld [vmem:[#allocation2 + $0x187] sm:$0xff]
      %v340 = vld [vmem:[#allocation2 + $0x18f] sm:$0xff]
      %v341 = vld [vmem:[#allocation2 + $0x1a7] sm:$0xff]
      %v342 = vld [vmem:[#allocation2 + $0x1af] sm:$0xff]
      %v343 = vld [vmem:[#allocation2 + $0x1c7] sm:$0xff]
      %v344 = vld [vmem:[#allocation2 + $0x1cf] sm:$0xff]
      %v345 = vld [vmem:[#allocation2 + $0x1e7] sm:$0xff]
      %v346 = vld [vmem:[#allocation2 + $0x1ef] sm:$0xff]
      %v347 = vld [vmem:[#allocation2 + $0x207] sm:$0xff]
      %v348 = vld [vmem:[#allocation2 + $0x20f] sm:$0xff]
      %v349 = vld [vmem:[#allocation2 + $0x227] sm:$0xff]
      %v350 = vld [vmem:[#allocation2 + $0x22f] sm:$0xff]
      %v351 = vld [vmem:[#allocation2 + $0x8] sm:$0xff]
      %v352 = vld [vmem:[#allocation2 + $0x10] sm:$0xff]
      %v353 = vld [vmem:[#allocation2 + $0x28] sm:$0xff]
      %v354 = vld [vmem:[#allocation2 + $0x30] sm:$0xff]
      %v355 = vld [vmem:[#allocation2 + $0x48] sm:$0xff]
      %v356 = vld [vmem:[#allocation2 + $0x50] sm:$0xff]
      %v357 = vld [vmem:[#allocation2 + $0x68] sm:$0xff]
      %v358 = vld [vmem:[#allocation2 + $0x70] sm:$0xff]
      %v359 = vld [vmem:[#allocation2 + $0x88] sm:$0xff]
      %v360 = vld [vmem:[#allocation2 + $0x90] sm:$0xff]
      %v361 = vld [vmem:[#allocation2 + $0xa8] sm:$0xff]
      %v362 = vld [vmem:[#allocation2 + $0xb0] sm:$0xff]
      %v363 = vld [vmem:[#allocation2 + $0xc8] sm:$0xff]
      %v364 = vld [vmem:[#allocation2 + $0xd0] sm:$0xff]
      %v365 = vld [vmem:[#allocation2 + $0xe8] sm:$0xff]
      %v366 = vld [vmem:[#allocation2 + $0xf0] sm:$0xff]
      %v367 = vld [vmem:[#allocation2 + $0x108] sm:$0xff]
      %v368 = vld [vmem:[#allocation2 + $0x110] sm:$0xff]
      %v369 = vld [vmem:[#allocation2 + $0x128] sm:$0xff]
      %v370 = vld [vmem:[#allocation2 + $0x130] sm:$0xff]
      %v371 = vld [vmem:[#allocation2 + $0x148] sm:$0xff]
      %v372 = vld [vmem:[#allocation2 + $0x150] sm:$0xff]
      %v373 = vld [vmem:[#allocation2 + $0x168] sm:$0xff]
      %v374 = vld [vmem:[#allocation2 + $0x170] sm:$0xff]
      %v375 = vld [vmem:[#allocation2 + $0x188] sm:$0xff]
      %v376 = vld [vmem:[#allocation2 + $0x190] sm:$0xff]
      %v377 = vld [vmem:[#allocation2 + $0x1a8] sm:$0xff]
      %v378 = vld [vmem:[#allocation2 + $0x1b0] sm:$0xff]
      %v379 = vld [vmem:[#allocation2 + $0x1c8] sm:$0xff]
      %v380 = vld [vmem:[#allocation2 + $0x1d0] sm:$0xff]
      %v381 = vld [vmem:[#allocation2 + $0x1e8] sm:$0xff]
      %v382 = vld [vmem:[#allocation2 + $0x1f0] sm:$0xff]
      %v383 = vld [vmem:[#allocation2 + $0x208] sm:$0xff]
      %v384 = vld [vmem:[#allocation2 + $0x210] sm:$0xff]
      %v385 = vld [vmem:[#allocation2 + $0x228] sm:$0xff]
      %v386 = vld [vmem:[#allocation2 + $0x230] sm:$0xff]
      %v387 = vld [vmem:[#allocation2 + $0x9] sm:$0xff]
      %v388 = vld [vmem:[#allocation2 + $0x11] sm:$0xff]
      %v389 = vld [vmem:[#allocation2 + $0x29] sm:$0xff]
      %v390 = vld [vmem:[#allocation2 + $0x31] sm:$0xff]
      %v391 = vld [vmem:[#allocation2 + $0x49] sm:$0xff]
      %v392 = vld [vmem:[#allocation2 + $0x51] sm:$0xff]
      %v393 = vld [vmem:[#allocation2 + $0x69] sm:$0xff]
      %v394 = vld [vmem:[#allocation2 + $0x71] sm:$0xff]
      %v395 = vld [vmem:[#allocation2 + $0x89] sm:$0xff]
      %v396 = vld [vmem:[#allocation2 + $0x91] sm:$0xff]
      %v397 = vld [vmem:[#allocation2 + $0xa9] sm:$0xff]
      %v398 = vld [vmem:[#allocation2 + $0xb1] sm:$0xff]
      %v399 = vld [vmem:[#allocation2 + $0xc9] sm:$0xff]
      %v400 = vld [vmem:[#allocation2 + $0xd1] sm:$0xff]
      %v401 = vld [vmem:[#allocation2 + $0xe9] sm:$0xff]
      %v402 = vld [vmem:[#allocation2 + $0xf1] sm:$0xff]
      %v403 = vld [vmem:[#allocation2 + $0x109] sm:$0xff]
      %v404 = vld [vmem:[#allocation2 + $0x111] sm:$0xff]
      %v405 = vld [vmem:[#allocation2 + $0x129] sm:$0xff]
      %v406 = vld [vmem:[#allocation2 + $0x131] sm:$0xff]
      %v407 = vld [vmem:[#allocation2 + $0x149] sm:$0xff]
      %v408 = vld [vmem:[#allocation2 + $0x151] sm:$0xff]
      %v409 = vld [vmem:[#allocation2 + $0x169] sm:$0xff]
      %v410 = vld [vmem:[#allocation2 + $0x171] sm:$0xff]
      %v411 = vld [vmem:[#allocation2 + $0x189] sm:$0xff]
      %v412 = vld [vmem:[#allocation2 + $0x191] sm:$0xff]
      %v413 = vld [vmem:[#allocation2 + $0x1a9] sm:$0xff]
      %v414 = vld [vmem:[#allocation2 + $0x1b1] sm:$0xff]
      %v415 = vld [vmem:[#allocation2 + $0x1c9] sm:$0xff]
      %v416 = vld [vmem:[#allocation2 + $0x1d1] sm:$0xff]
      %v417 = vld [vmem:[#allocation2 + $0x1e9] sm:$0xff]
      %v418 = vld [vmem:[#allocation2 + $0x1f1] sm:$0xff]
      %v419 = vld [vmem:[#allocation2 + $0x209] sm:$0xff]
      %v420 = vld [vmem:[#allocation2 + $0x211] sm:$0xff]
      %v421 = vld [vmem:[#allocation2 + $0x229] sm:$0xff]
      %v422 = vld [vmem:[#allocation2 + $0x231] sm:$0xff]
      %455 = vrot.lane.b32.xlu0 %v351, 4
      %v456 = vpop.permute.xlu0 %455
      %457 = vrot.lane.b32.xlu0 %v352, 4
      %v458 = vpop.permute.xlu0 %457
      %459 = vrot.lane.b32.xlu0 %v353, 4
      %v460 = vpop.permute.xlu0 %459
      %461 = vrot.lane.b32.xlu0 %v354, 4
      %v462 = vpop.permute.xlu0 %461
      %463 = vrot.lane.b32.xlu0 %v355, 4
      %v464 = vpop.permute.xlu0 %463
      %465 = vrot.lane.b32.xlu0 %v356, 4
      %v466 = vpop.permute.xlu0 %465
      %467 = vrot.lane.b32.xlu0 %v357, 4
      %v468 = vpop.permute.xlu0 %467
      %469 = vrot.lane.b32.xlu0 %v358, 4
      %v470 = vpop.permute.xlu0 %469
      %471 = vrot.lane.b32.xlu0 %v359, 4
      %v472 = vpop.permute.xlu0 %471
      %473 = vrot.lane.b32.xlu0 %v360, 4
      %v474 = vpop.permute.xlu0 %473
      %475 = vrot.lane.b32.xlu0 %v361, 4
      %v476 = vpop.permute.xlu0 %475
      %477 = vrot.lane.b32.xlu0 %v362, 4
      %v478 = vpop.permute.xlu0 %477
      %479 = vrot.lane.b32.xlu0 %v363, 4
      %v480 = vpop.permute.xlu0 %479
      %481 = vrot.lane.b32.xlu0 %v364, 4
      %v482 = vpop.permute.xlu0 %481
      %483 = vrot.lane.b32.xlu0 %v365, 4
      %v484 = vpop.permute.xlu0 %483
      %485 = vrot.lane.b32.xlu0 %v366, 4
      %v486 = vpop.permute.xlu0 %485
      %487 = vrot.lane.b32.xlu0 %v367, 4
      %v488 = vpop.permute.xlu0 %487
      %489 = vrot.lane.b32.xlu0 %v368, 4
      %v490 = vpop.permute.xlu0 %489
      %491 = vrot.lane.b32.xlu0 %v369, 4
      %v492 = vpop.permute.xlu0 %491
      %493 = vrot.lane.b32.xlu0 %v370, 4
      %v494 = vpop.permute.xlu0 %493
      %495 = vrot.lane.b32.xlu0 %v371, 4
      %v496 = vpop.permute.xlu0 %495
      %497 = vrot.lane.b32.xlu0 %v372, 4
      %v498 = vpop.permute.xlu0 %497
      %499 = vrot.lane.b32.xlu0 %v373, 4
      %v500 = vpop.permute.xlu0 %499
      %501 = vrot.lane.b32.xlu0 %v374, 4
      %v502 = vpop.permute.xlu0 %501
      %503 = vrot.lane.b32.xlu0 %v375, 4
      %v504 = vpop.permute.xlu0 %503
      %505 = vrot.lane.b32.xlu0 %v376, 4
      %v506 = vpop.permute.xlu0 %505
      %507 = vrot.lane.b32.xlu0 %v377, 4
      %v508 = vpop.permute.xlu0 %507
      %509 = vrot.lane.b32.xlu0 %v378, 4
      %v510 = vpop.permute.xlu0 %509
      %511 = vrot.lane.b32.xlu0 %v379, 4
      %v512 = vpop.permute.xlu0 %511
      %513 = vrot.lane.b32.xlu0 %v380, 4
      %v514 = vpop.permute.xlu0 %513
      %515 = vrot.lane.b32.xlu0 %v381, 4
      %v516 = vpop.permute.xlu0 %515
      %517 = vrot.lane.b32.xlu0 %v382, 4
      %v518 = vpop.permute.xlu0 %517
      %583 = vrot.lane.b32.xlu0 %v387, 8
      %v584 = vpop.permute.xlu0 %583
      %585 = vrot.lane.b32.xlu0 %v388, 8
      %v586 = vpop.permute.xlu0 %585
      %587 = vrot.lane.b32.xlu0 %v389, 8
      %v588 = vpop.permute.xlu0 %587
      %589 = vrot.lane.b32.xlu0 %v390, 8
      %v590 = vpop.permute.xlu0 %589
      %591 = vrot.lane.b32.xlu0 %v391, 8
      %v592 = vpop.permute.xlu0 %591
      %593 = vrot.lane.b32.xlu0 %v392, 8
      %v594 = vpop.permute.xlu0 %593
      %595 = vrot.lane.b32.xlu0 %v393, 8
      %v596 = vpop.permute.xlu0 %595
      %597 = vrot.lane.b32.xlu0 %v394, 8
      %v598 = vpop.permute.xlu0 %597
      %599 = vrot.lane.b32.xlu0 %v395, 8
      %v600 = vpop.permute.xlu0 %599
      %601 = vrot.lane.b32.xlu0 %v396, 8
      %v602 = vpop.permute.xlu0 %601
      %603 = vrot.lane.b32.xlu0 %v397, 8
      %v604 = vpop.permute.xlu0 %603
      %605 = vrot.lane.b32.xlu0 %v398, 8
      %v606 = vpop.permute.xlu0 %605
      %607 = vrot.lane.b32.xlu0 %v399, 8
      %v608 = vpop.permute.xlu0 %607
      %609 = vrot.lane.b32.xlu0 %v400, 8
      %v610 = vpop.permute.xlu0 %609
      %611 = vrot.lane.b32.xlu0 %v401, 8
      %v612 = vpop.permute.xlu0 %611
      %613 = vrot.lane.b32.xlu0 %v402, 8
      %v614 = vpop.permute.xlu0 %613
      %615 = vrot.lane.b32.xlu0 %v403, 8
      %v616 = vpop.permute.xlu0 %615
      %617 = vrot.lane.b32.xlu0 %v404, 8
      %v618 = vpop.permute.xlu0 %617
      %619 = vrot.lane.b32.xlu0 %v405, 8
      %v620 = vpop.permute.xlu0 %619
      %621 = vrot.lane.b32.xlu0 %v406, 8
      %v622 = vpop.permute.xlu0 %621
      %623 = vrot.lane.b32.xlu0 %v407, 8
      %v624 = vpop.permute.xlu0 %623
      %625 = vrot.lane.b32.xlu0 %v408, 8
      %v626 = vpop.permute.xlu0 %625
      %627 = vrot.lane.b32.xlu0 %v409, 8
      %v628 = vpop.permute.xlu0 %627
      %629 = vrot.lane.b32.xlu0 %v410, 8
      %v630 = vpop.permute.xlu0 %629
      %631 = vrot.lane.b32.xlu0 %v411, 8
      %v632 = vpop.permute.xlu0 %631
      %633 = vrot.lane.b32.xlu0 %v412, 8
      %v634 = vpop.permute.xlu0 %633
      %635 = vrot.lane.b32.xlu0 %v413, 8
      %v636 = vpop.permute.xlu0 %635
      %637 = vrot.lane.b32.xlu0 %v414, 8
      %v638 = vpop.permute.xlu0 %637
      %639 = vrot.lane.b32.xlu0 %v415, 8
      %v640 = vpop.permute.xlu0 %639
      %641 = vrot.lane.b32.xlu0 %v416, 8
      %v642 = vpop.permute.xlu0 %641
      %643 = vrot.lane.b32.xlu0 %v417, 8
      %v644 = vpop.permute.xlu0 %643
      %645 = vrot.lane.b32.xlu0 %v418, 8
      %v646 = vpop.permute.xlu0 %645
      %711 = vrot.lane.b32.xlu0 %v317, 12
      %v712 = vpop.permute.xlu0 %711
      %713 = vrot.lane.b32.xlu0 %v318, 12
      %v714 = vpop.permute.xlu0 %713
      %715 = vrot.lane.b32.xlu0 %v319, 12
      %v716 = vpop.permute.xlu0 %715
      %717 = vrot.lane.b32.xlu0 %v320, 12
      %v718 = vpop.permute.xlu0 %717
      %719 = vrot.lane.b32.xlu0 %v321, 12
      %v720 = vpop.permute.xlu0 %719
      %721 = vrot.lane.b32.xlu0 %v322, 12
      %v722 = vpop.permute.xlu0 %721
      %723 = vrot.lane.b32.xlu0 %v323, 12
      %v724 = vpop.permute.xlu0 %723
      %725 = vrot.lane.b32.xlu0 %v324, 12
      %v726 = vpop.permute.xlu0 %725
      %727 = vrot.lane.b32.xlu0 %v325, 12
      %v728 = vpop.permute.xlu0 %727
      %729 = vrot.lane.b32.xlu0 %v326, 12
      %v730 = vpop.permute.xlu0 %729
      %731 = vrot.lane.b32.xlu0 %v327, 12
      %v732 = vpop.permute.xlu0 %731
      %733 = vrot.lane.b32.xlu0 %v328, 12
      %v734 = vpop.permute.xlu0 %733
      %735 = vrot.lane.b32.xlu0 %v329, 12
      %v736 = vpop.permute.xlu0 %735
      %737 = vrot.lane.b32.xlu0 %v330, 12
      %v738 = vpop.permute.xlu0 %737
      %739 = vrot.lane.b32.xlu0 %v331, 12
      %v740 = vpop.permute.xlu0 %739
      %741 = vrot.lane.b32.xlu0 %v332, 12
      %v742 = vpop.permute.xlu0 %741
      %743 = vrot.lane.b32.xlu0 %v333, 12
      %v744 = vpop.permute.xlu0 %743
      %745 = vrot.lane.b32.xlu0 %v334, 12
      %v746 = vpop.permute.xlu0 %745
      %747 = vrot.lane.b32.xlu0 %v335, 12
      %v748 = vpop.permute.xlu0 %747
      %749 = vrot.lane.b32.xlu0 %v336, 12
      %v750 = vpop.permute.xlu0 %749
      %751 = vrot.lane.b32.xlu0 %v337, 12
      %v752 = vpop.permute.xlu0 %751
      %753 = vrot.lane.b32.xlu0 %v338, 12
      %v754 = vpop.permute.xlu0 %753
      %755 = vrot.lane.b32.xlu0 %v339, 12
      %v756 = vpop.permute.xlu0 %755
      %757 = vrot.lane.b32.xlu0 %v340, 12
      %v758 = vpop.permute.xlu0 %757
      %759 = vrot.lane.b32.xlu0 %v341, 12
      %v760 = vpop.permute.xlu0 %759
      %761 = vrot.lane.b32.xlu0 %v342, 12
      %v762 = vpop.permute.xlu0 %761
      %763 = vrot.lane.b32.xlu0 %v343, 12
      %v764 = vpop.permute.xlu0 %763
      %765 = vrot.lane.b32.xlu0 %v344, 12
      %v766 = vpop.permute.xlu0 %765
      %767 = vrot.lane.b32.xlu0 %v345, 12
      %v768 = vpop.permute.xlu0 %767
      %769 = vrot.lane.b32.xlu0 %v346, 12
      %v770 = vpop.permute.xlu0 %769
      %771 = vrot.lane.b32.xlu0 %v347, 12
      %v772 = vpop.permute.xlu0 %771
      %773 = vrot.lane.b32.xlu0 %v348, 12
      %v774 = vpop.permute.xlu0 %773
      %809 = vrot.lane.b32.xlu0 %v353, 16
      %v810 = vpop.permute.xlu0 %809
      %811 = vrot.lane.b32.xlu0 %v354, 16
      %v812 = vpop.permute.xlu0 %811
      %813 = vrot.lane.b32.xlu0 %v355, 16
      %v814 = vpop.permute.xlu0 %813
      %815 = vrot.lane.b32.xlu0 %v356, 16
      %v816 = vpop.permute.xlu0 %815
      %817 = vrot.lane.b32.xlu0 %v357, 16
      %v818 = vpop.permute.xlu0 %817
      %819 = vrot.lane.b32.xlu0 %v358, 16
      %v820 = vpop.permute.xlu0 %819
      %821 = vrot.lane.b32.xlu0 %v359, 16
      %v822 = vpop.permute.xlu0 %821
      %823 = vrot.lane.b32.xlu0 %v360, 16
      %v824 = vpop.permute.xlu0 %823
      %825 = vrot.lane.b32.xlu0 %v361, 16
      %v826 = vpop.permute.xlu0 %825
      %827 = vrot.lane.b32.xlu0 %v362, 16
      %v828 = vpop.permute.xlu0 %827
      %829 = vrot.lane.b32.xlu0 %v363, 16
      %v830 = vpop.permute.xlu0 %829
      %831 = vrot.lane.b32.xlu0 %v364, 16
      %v832 = vpop.permute.xlu0 %831
      %833 = vrot.lane.b32.xlu0 %v365, 16
      %v834 = vpop.permute.xlu0 %833
      %835 = vrot.lane.b32.xlu0 %v366, 16
      %v836 = vpop.permute.xlu0 %835
      %837 = vrot.lane.b32.xlu0 %v367, 16
      %v838 = vpop.permute.xlu0 %837
      %839 = vrot.lane.b32.xlu0 %v368, 16
      %v840 = vpop.permute.xlu0 %839
      %841 = vrot.lane.b32.xlu0 %v369, 16
      %v842 = vpop.permute.xlu0 %841
      %843 = vrot.lane.b32.xlu0 %v370, 16
      %v844 = vpop.permute.xlu0 %843
      %845 = vrot.lane.b32.xlu0 %v371, 16
      %v846 = vpop.permute.xlu0 %845
      %847 = vrot.lane.b32.xlu0 %v372, 16
      %v848 = vpop.permute.xlu0 %847
      %849 = vrot.lane.b32.xlu0 %v373, 16
      %v850 = vpop.permute.xlu0 %849
      %851 = vrot.lane.b32.xlu0 %v374, 16
      %v852 = vpop.permute.xlu0 %851
      %853 = vrot.lane.b32.xlu0 %v375, 16
      %v854 = vpop.permute.xlu0 %853
      %855 = vrot.lane.b32.xlu0 %v376, 16
      %v856 = vpop.permute.xlu0 %855
      %857 = vrot.lane.b32.xlu0 %v377, 16
      %v858 = vpop.permute.xlu0 %857
      %859 = vrot.lane.b32.xlu0 %v378, 16
      %v860 = vpop.permute.xlu0 %859
      %861 = vrot.lane.b32.xlu0 %v379, 16
      %v862 = vpop.permute.xlu0 %861
      %863 = vrot.lane.b32.xlu0 %v380, 16
      %v864 = vpop.permute.xlu0 %863
      %865 = vrot.lane.b32.xlu0 %v381, 16
      %v866 = vpop.permute.xlu0 %865
      %867 = vrot.lane.b32.xlu0 %v382, 16
      %v868 = vpop.permute.xlu0 %867
      %869 = vrot.lane.b32.xlu0 %v383, 16
      %v870 = vpop.permute.xlu0 %869
      %871 = vrot.lane.b32.xlu0 %v384, 16
      %v872 = vpop.permute.xlu0 %871
      %907 = vrot.lane.b32.xlu0 %v389, 20
      %v908 = vpop.permute.xlu0 %907
      %909 = vrot.lane.b32.xlu0 %v390, 20
      %v910 = vpop.permute.xlu0 %909
      %911 = vrot.lane.b32.xlu0 %v391, 20
      %v912 = vpop.permute.xlu0 %911
      %913 = vrot.lane.b32.xlu0 %v392, 20
      %v914 = vpop.permute.xlu0 %913
      %915 = vrot.lane.b32.xlu0 %v393, 20
      %v916 = vpop.permute.xlu0 %915
      %917 = vrot.lane.b32.xlu0 %v394, 20
      %v918 = vpop.permute.xlu0 %917
      %919 = vrot.lane.b32.xlu0 %v395, 20
      %v920 = vpop.permute.xlu0 %919
      %921 = vrot.lane.b32.xlu0 %v396, 20
      %v922 = vpop.permute.xlu0 %921
      %923 = vrot.lane.b32.xlu0 %v397, 20
      %v924 = vpop.permute.xlu0 %923
      %925 = vrot.lane.b32.xlu0 %v398, 20
      %v926 = vpop.permute.xlu0 %925
      %927 = vrot.lane.b32.xlu0 %v399, 20
      %v928 = vpop.permute.xlu0 %927
      %929 = vrot.lane.b32.xlu0 %v400, 20
      %v930 = vpop.permute.xlu0 %929
      %931 = vrot.lane.b32.xlu0 %v401, 20
      %v932 = vpop.permute.xlu0 %931
      %933 = vrot.lane.b32.xlu0 %v402, 20
      %v934 = vpop.permute.xlu0 %933
      %935 = vrot.lane.b32.xlu0 %v403, 20
      %v936 = vpop.permute.xlu0 %935
      %937 = vrot.lane.b32.xlu0 %v404, 20
      %v938 = vpop.permute.xlu0 %937
      %939 = vrot.lane.b32.xlu0 %v405, 20
      %v940 = vpop.permute.xlu0 %939
      %941 = vrot.lane.b32.xlu0 %v406, 20
      %v942 = vpop.permute.xlu0 %941
      %943 = vrot.lane.b32.xlu0 %v407, 20
      %v944 = vpop.permute.xlu0 %943
      %945 = vrot.lane.b32.xlu0 %v408, 20
      %v946 = vpop.permute.xlu0 %945
      %947 = vrot.lane.b32.xlu0 %v409, 20
      %v948 = vpop.permute.xlu0 %947
      %949 = vrot.lane.b32.xlu0 %v410, 20
      %v950 = vpop.permute.xlu0 %949
      %951 = vrot.lane.b32.xlu0 %v411, 20
      %v952 = vpop.permute.xlu0 %951
      %953 = vrot.lane.b32.xlu0 %v412, 20
      %v954 = vpop.permute.xlu0 %953
      %955 = vrot.lane.b32.xlu0 %v413, 20
      %v956 = vpop.permute.xlu0 %955
      %957 = vrot.lane.b32.xlu0 %v414, 20
      %v958 = vpop.permute.xlu0 %957
      %959 = vrot.lane.b32.xlu0 %v415, 20
      %v960 = vpop.permute.xlu0 %959
      %961 = vrot.lane.b32.xlu0 %v416, 20
      %v962 = vpop.permute.xlu0 %961
      %963 = vrot.lane.b32.xlu0 %v417, 20
      %v964 = vpop.permute.xlu0 %963
      %965 = vrot.lane.b32.xlu0 %v418, 20
      %v966 = vpop.permute.xlu0 %965
      %967 = vrot.lane.b32.xlu0 %v419, 20
      %v968 = vpop.permute.xlu0 %967
      %969 = vrot.lane.b32.xlu0 %v420, 20
      %v970 = vpop.permute.xlu0 %969
      %1005 = vrot.lane.b32.xlu0 %v319, 24
      %v1006 = vpop.permute.xlu0 %1005
      %1007 = vrot.lane.b32.xlu0 %v320, 24
      %v1008 = vpop.permute.xlu0 %1007
      %1009 = vrot.lane.b32.xlu0 %v321, 24
      %v1010 = vpop.permute.xlu0 %1009
      %1011 = vrot.lane.b32.xlu0 %v322, 24
      %v1012 = vpop.permute.xlu0 %1011
      %1013 = vrot.lane.b32.xlu0 %v323, 24
      %v1014 = vpop.permute.xlu0 %1013
      %1015 = vrot.lane.b32.xlu0 %v324, 24
      %v1016 = vpop.permute.xlu0 %1015
      %1017 = vrot.lane.b32.xlu0 %v325, 24
      %v1018 = vpop.permute.xlu0 %1017
      %1019 = vrot.lane.b32.xlu0 %v326, 24
      %v1020 = vpop.permute.xlu0 %1019
      %1021 = vrot.lane.b32.xlu0 %v327, 24
      %v1022 = vpop.permute.xlu0 %1021
      %1023 = vrot.lane.b32.xlu0 %v328, 24
      %v1024 = vpop.permute.xlu0 %1023
      %1025 = vrot.lane.b32.xlu0 %v329, 24
      %v1026 = vpop.permute.xlu0 %1025
      %1027 = vrot.lane.b32.xlu0 %v330, 24
      %v1028 = vpop.permute.xlu0 %1027
      %1029 = vrot.lane.b32.xlu0 %v331, 24
      %v1030 = vpop.permute.xlu0 %1029
      %1031 = vrot.lane.b32.xlu0 %v332, 24
      %v1032 = vpop.permute.xlu0 %1031
      %1033 = vrot.lane.b32.xlu0 %v333, 24
      %v1034 = vpop.permute.xlu0 %1033
      %1035 = vrot.lane.b32.xlu0 %v334, 24
      %v1036 = vpop.permute.xlu0 %1035
      %1037 = vrot.lane.b32.xlu0 %v335, 24
      %v1038 = vpop.permute.xlu0 %1037
      %1039 = vrot.lane.b32.xlu0 %v336, 24
      %v1040 = vpop.permute.xlu0 %1039
      %1041 = vrot.lane.b32.xlu0 %v337, 24
      %v1042 = vpop.permute.xlu0 %1041
      %1043 = vrot.lane.b32.xlu0 %v338, 24
      %v1044 = vpop.permute.xlu0 %1043
      %1045 = vrot.lane.b32.xlu0 %v339, 24
      %v1046 = vpop.permute.xlu0 %1045
      %1047 = vrot.lane.b32.xlu0 %v340, 24
      %v1048 = vpop.permute.xlu0 %1047
      %1049 = vrot.lane.b32.xlu0 %v341, 24
      %v1050 = vpop.permute.xlu0 %1049
      %1051 = vrot.lane.b32.xlu0 %v342, 24
      %v1052 = vpop.permute.xlu0 %1051
      %1053 = vrot.lane.b32.xlu0 %v343, 24
      %v1054 = vpop.permute.xlu0 %1053
      %1055 = vrot.lane.b32.xlu0 %v344, 24
      %v1056 = vpop.permute.xlu0 %1055
      %1057 = vrot.lane.b32.xlu0 %v345, 24
      %v1058 = vpop.permute.xlu0 %1057
      %1059 = vrot.lane.b32.xlu0 %v346, 24
      %v1060 = vpop.permute.xlu0 %1059
      %1061 = vrot.lane.b32.xlu0 %v347, 24
      %v1062 = vpop.permute.xlu0 %1061
      %1063 = vrot.lane.b32.xlu0 %v348, 24
      %v1064 = vpop.permute.xlu0 %1063
      %1065 = vrot.lane.b32.xlu0 %v349, 24
      %v1066 = vpop.permute.xlu0 %1065
      %1067 = vrot.lane.b32.xlu0 %v350, 24
      %v1068 = vpop.permute.xlu0 %1067
      %1103 = vrot.lane.b32.xlu0 %v355, 28
      %v1104 = vpop.permute.xlu0 %1103
      %1105 = vrot.lane.b32.xlu0 %v356, 28
      %v1106 = vpop.permute.xlu0 %1105
      %1107 = vrot.lane.b32.xlu0 %v357, 28
      %v1108 = vpop.permute.xlu0 %1107
      %1109 = vrot.lane.b32.xlu0 %v358, 28
      %v1110 = vpop.permute.xlu0 %1109
      %1111 = vrot.lane.b32.xlu0 %v359, 28
      %v1112 = vpop.permute.xlu0 %1111
      %1113 = vrot.lane.b32.xlu0 %v360, 28
      %v1114 = vpop.permute.xlu0 %1113
      %1115 = vrot.lane.b32.xlu0 %v361, 28
      %v1116 = vpop.permute.xlu0 %1115
      %1117 = vrot.lane.b32.xlu0 %v362, 28
      %v1118 = vpop.permute.xlu0 %1117
      %1119 = vrot.lane.b32.xlu0 %v363, 28
      %v1120 = vpop.permute.xlu0 %1119
      %1121 = vrot.lane.b32.xlu0 %v364, 28
      %v1122 = vpop.permute.xlu0 %1121
      %1123 = vrot.lane.b32.xlu0 %v365, 28
      %v1124 = vpop.permute.xlu0 %1123
      %1125 = vrot.lane.b32.xlu0 %v366, 28
      %v1126 = vpop.permute.xlu0 %1125
      %1127 = vrot.lane.b32.xlu0 %v367, 28
      %v1128 = vpop.permute.xlu0 %1127
      %1129 = vrot.lane.b32.xlu0 %v368, 28
      %v1130 = vpop.permute.xlu0 %1129
      %1131 = vrot.lane.b32.xlu0 %v369, 28
      %v1132 = vpop.permute.xlu0 %1131
      %1133 = vrot.lane.b32.xlu0 %v370, 28
      %v1134 = vpop.permute.xlu0 %1133
      %1135 = vrot.lane.b32.xlu0 %v371, 28
      %v1136 = vpop.permute.xlu0 %1135
      %1137 = vrot.lane.b32.xlu0 %v372, 28
      %v1138 = vpop.permute.xlu0 %1137
      %1139 = vrot.lane.b32.xlu0 %v373, 28
      %v1140 = vpop.permute.xlu0 %1139
      %1141 = vrot.lane.b32.xlu0 %v374, 28
      %v1142 = vpop.permute.xlu0 %1141
      %1143 = vrot.lane.b32.xlu0 %v375, 28
      %v1144 = vpop.permute.xlu0 %1143
      %1145 = vrot.lane.b32.xlu0 %v376, 28
      %v1146 = vpop.permute.xlu0 %1145
      %1147 = vrot.lane.b32.xlu0 %v377, 28
      %v1148 = vpop.permute.xlu0 %1147
      %1149 = vrot.lane.b32.xlu0 %v378, 28
      %v1150 = vpop.permute.xlu0 %1149
      %1151 = vrot.lane.b32.xlu0 %v379, 28
      %v1152 = vpop.permute.xlu0 %1151
      %1153 = vrot.lane.b32.xlu0 %v380, 28
      %v1154 = vpop.permute.xlu0 %1153
      %1155 = vrot.lane.b32.xlu0 %v381, 28
      %v1156 = vpop.permute.xlu0 %1155
      %1157 = vrot.lane.b32.xlu0 %v382, 28
      %v1158 = vpop.permute.xlu0 %1157
      %1159 = vrot.lane.b32.xlu0 %v383, 28
      %v1160 = vpop.permute.xlu0 %1159
      %1161 = vrot.lane.b32.xlu0 %v384, 28
      %v1162 = vpop.permute.xlu0 %1161
      %1163 = vrot.lane.b32.xlu0 %v385, 28
      %v1164 = vpop.permute.xlu0 %1163
      %1165 = vrot.lane.b32.xlu0 %v386, 28
      %v1166 = vpop.permute.xlu0 %1165
      %1201 = vrot.lane.b32.xlu0 %v391, 32
      %v1202 = vpop.permute.xlu0 %1201
      %1203 = vrot.lane.b32.xlu0 %v392, 32
      %v1204 = vpop.permute.xlu0 %1203
      %1205 = vrot.lane.b32.xlu0 %v393, 32
      %v1206 = vpop.permute.xlu0 %1205
      %1207 = vrot.lane.b32.xlu0 %v394, 32
      %v1208 = vpop.permute.xlu0 %1207
      %1209 = vrot.lane.b32.xlu0 %v395, 32
      %v1210 = vpop.permute.xlu0 %1209
      %1211 = vrot.lane.b32.xlu0 %v396, 32
      %v1212 = vpop.permute.xlu0 %1211
      %1213 = vrot.lane.b32.xlu0 %v397, 32
      %v1214 = vpop.permute.xlu0 %1213
      %1215 = vrot.lane.b32.xlu0 %v398, 32
      %v1216 = vpop.permute.xlu0 %1215
      %1217 = vrot.lane.b32.xlu0 %v399, 32
      %v1218 = vpop.permute.xlu0 %1217
      %1219 = vrot.lane.b32.xlu0 %v400, 32
      %v1220 = vpop.permute.xlu0 %1219
      %1221 = vrot.lane.b32.xlu0 %v401, 32
      %v1222 = vpop.permute.xlu0 %1221
      %1223 = vrot.lane.b32.xlu0 %v402, 32
      %v1224 = vpop.permute.xlu0 %1223
      %1225 = vrot.lane.b32.xlu0 %v403, 32
      %v1226 = vpop.permute.xlu0 %1225
      %1227 = vrot.lane.b32.xlu0 %v404, 32
      %v1228 = vpop.permute.xlu0 %1227
      %1229 = vrot.lane.b32.xlu0 %v405, 32
      %v1230 = vpop.permute.xlu0 %1229
      %1231 = vrot.lane.b32.xlu0 %v406, 32
      %v1232 = vpop.permute.xlu0 %1231
      %1233 = vrot.lane.b32.xlu0 %v407, 32
      %v1234 = vpop.permute.xlu0 %1233
      %1235 = vrot.lane.b32.xlu0 %v408, 32
      %v1236 = vpop.permute.xlu0 %1235
      %1237 = vrot.lane.b32.xlu0 %v409, 32
      %v1238 = vpop.permute.xlu0 %1237
      %1239 = vrot.lane.b32.xlu0 %v410, 32
      %v1240 = vpop.permute.xlu0 %1239
      %1241 = vrot.lane.b32.xlu0 %v411, 32
      %v1242 = vpop.permute.xlu0 %1241
      %1243 = vrot.lane.b32.xlu0 %v412, 32
      %v1244 = vpop.permute.xlu0 %1243
      %1245 = vrot.lane.b32.xlu0 %v413, 32
      %v1246 = vpop.permute.xlu0 %1245
      %1247 = vrot.lane.b32.xlu0 %v414, 32
      %v1248 = vpop.permute.xlu0 %1247
      %1249 = vrot.lane.b32.xlu0 %v415, 32
      %v1250 = vpop.permute.xlu0 %1249
      %1251 = vrot.lane.b32.xlu0 %v416, 32
      %v1252 = vpop.permute.xlu0 %1251
      %1253 = vrot.lane.b32.xlu0 %v417, 32
      %v1254 = vpop.permute.xlu0 %1253
      %1255 = vrot.lane.b32.xlu0 %v418, 32
      %v1256 = vpop.permute.xlu0 %1255
      %1257 = vrot.lane.b32.xlu0 %v419, 32
      %v1258 = vpop.permute.xlu0 %1257
      %1259 = vrot.lane.b32.xlu0 %v420, 32
      %v1260 = vpop.permute.xlu0 %1259
      %1261 = vrot.lane.b32.xlu0 %v421, 32
      %v1262 = vpop.permute.xlu0 %1261
      %1263 = vrot.lane.b32.xlu0 %v422, 32
      %v1264 = vpop.permute.xlu0 %1263
      %v1297 = vsel %vm204, %v315, %v456
      %v1298 = vsel %vm204, %v316, %v458
      %v1299 = vsel %vm204, %v317, %v460
      %v1300 = vsel %vm204, %v318, %v462
      %v1301 = vsel %vm204, %v319, %v464
      %v1302 = vsel %vm204, %v320, %v466
      %v1303 = vsel %vm204, %v321, %v468
      %v1304 = vsel %vm204, %v322, %v470
      %v1305 = vsel %vm204, %v323, %v472
      %v1306 = vsel %vm204, %v324, %v474
      %v1307 = vsel %vm204, %v325, %v476
      %v1308 = vsel %vm204, %v326, %v478
      %v1309 = vsel %vm204, %v327, %v480
      %v1310 = vsel %vm204, %v328, %v482
      %v1311 = vsel %vm204, %v329, %v484
      %v1312 = vsel %vm204, %v330, %v486
      %v1313 = vsel %vm204, %v331, %v488
      %v1314 = vsel %vm204, %v332, %v490
      %v1315 = vsel %vm204, %v333, %v492
      %v1316 = vsel %vm204, %v334, %v494
      %v1317 = vsel %vm204, %v335, %v496
      %v1318 = vsel %vm204, %v336, %v498
      %v1319 = vsel %vm204, %v337, %v500
      %v1320 = vsel %vm204, %v338, %v502
      %v1321 = vsel %vm204, %v339, %v504
      %v1322 = vsel %vm204, %v340, %v506
      %v1323 = vsel %vm204, %v341, %v508
      %v1324 = vsel %vm204, %v342, %v510
      %v1325 = vsel %vm204, %v343, %v512
      %v1326 = vsel %vm204, %v344, %v514
      %v1327 = vsel %vm204, %v345, %v516
      %v1328 = vsel %vm204, %v346, %v518
      %vm1329 = vcmask 64512
      %v1330 = vsel %vm1329, %v1297, %v584
      %v1331 = vsel %vm1329, %v1298, %v586
      %v1332 = vsel %vm1329, %v1299, %v588
      %v1333 = vsel %vm1329, %v1300, %v590
      %v1334 = vsel %vm1329, %v1301, %v592
      %v1335 = vsel %vm1329, %v1302, %v594
      %v1336 = vsel %vm1329, %v1303, %v596
      %v1337 = vsel %vm1329, %v1304, %v598
      %v1338 = vsel %vm1329, %v1305, %v600
      %v1339 = vsel %vm1329, %v1306, %v602
      %v1340 = vsel %vm1329, %v1307, %v604
      %v1341 = vsel %vm1329, %v1308, %v606
      %v1342 = vsel %vm1329, %v1309, %v608
      %v1343 = vsel %vm1329, %v1310, %v610
      %v1344 = vsel %vm1329, %v1311, %v612
      %v1345 = vsel %vm1329, %v1312, %v614
      %v1346 = vsel %vm1329, %v1313, %v616
      %v1347 = vsel %vm1329, %v1314, %v618
      %v1348 = vsel %vm1329, %v1315, %v620
      %v1349 = vsel %vm1329, %v1316, %v622
      %v1350 = vsel %vm1329, %v1317, %v624
      %v1351 = vsel %vm1329, %v1318, %v626
      %v1352 = vsel %vm1329, %v1319, %v628
      %v1353 = vsel %vm1329, %v1320, %v630
      %v1354 = vsel %vm1329, %v1321, %v632
      %v1355 = vsel %vm1329, %v1322, %v634
      %v1356 = vsel %vm1329, %v1323, %v636
      %v1357 = vsel %vm1329, %v1324, %v638
      %v1358 = vsel %vm1329, %v1325, %v640
      %v1359 = vsel %vm1329, %v1326, %v642
      %v1360 = vsel %vm1329, %v1327, %v644
      %v1361 = vsel %vm1329, %v1328, %v646
      %vm1362 = vcmask 97280
      %v1363 = vsel %vm1362, %v1330, %v712
      %v1364 = vsel %vm1362, %v1331, %v714
      %v1365 = vsel %vm1362, %v1332, %v716
      %v1366 = vsel %vm1362, %v1333, %v718
      %v1367 = vsel %vm1362, %v1334, %v720
      %v1368 = vsel %vm1362, %v1335, %v722
      %v1369 = vsel %vm1362, %v1336, %v724
      %v1370 = vsel %vm1362, %v1337, %v726
      %v1371 = vsel %vm1362, %v1338, %v728
      %v1372 = vsel %vm1362, %v1339, %v730
      %v1373 = vsel %vm1362, %v1340, %v732
      %v1374 = vsel %vm1362, %v1341, %v734
      %v1375 = vsel %vm1362, %v1342, %v736
      %v1376 = vsel %vm1362, %v1343, %v738
      %v1377 = vsel %vm1362, %v1344, %v740
      %v1378 = vsel %vm1362, %v1345, %v742
      %v1379 = vsel %vm1362, %v1346, %v744
      %v1380 = vsel %vm1362, %v1347, %v746
      %v1381 = vsel %vm1362, %v1348, %v748
      %v1382 = vsel %vm1362, %v1349, %v750
      %v1383 = vsel %vm1362, %v1350, %v752
      %v1384 = vsel %vm1362, %v1351, %v754
      %v1385 = vsel %vm1362, %v1352, %v756
      %v1386 = vsel %vm1362, %v1353, %v758
      %v1387 = vsel %vm1362, %v1354, %v760
      %v1388 = vsel %vm1362, %v1355, %v762
      %v1389 = vsel %vm1362, %v1356, %v764
      %v1390 = vsel %vm1362, %v1357, %v766
      %v1391 = vsel %vm1362, %v1358, %v768
      %v1392 = vsel %vm1362, %v1359, %v770
      %v1393 = vsel %vm1362, %v1360, %v772
      %v1394 = vsel %vm1362, %v1361, %v774
      %vm1395 = vcmask 130048
      %v1396 = vsel %vm1395, %v1363, %v810
      %v1397 = vsel %vm1395, %v1364, %v812
      %v1398 = vsel %vm1395, %v1365, %v814
      %v1399 = vsel %vm1395, %v1366, %v816
      %v1400 = vsel %vm1395, %v1367, %v818
      %v1401 = vsel %vm1395, %v1368, %v820
      %v1402 = vsel %vm1395, %v1369, %v822
      %v1403 = vsel %vm1395, %v1370, %v824
      %v1404 = vsel %vm1395, %v1371, %v826
      %v1405 = vsel %vm1395, %v1372, %v828
      %v1406 = vsel %vm1395, %v1373, %v830
      %v1407 = vsel %vm1395, %v1374, %v832
      %v1408 = vsel %vm1395, %v1375, %v834
      %v1409 = vsel %vm1395, %v1376, %v836
      %v1410 = vsel %vm1395, %v1377, %v838
      %v1411 = vsel %vm1395, %v1378, %v840
      %v1412 = vsel %vm1395, %v1379, %v842
      %v1413 = vsel %vm1395, %v1380, %v844
      %v1414 = vsel %vm1395, %v1381, %v846
      %v1415 = vsel %vm1395, %v1382, %v848
      %v1416 = vsel %vm1395, %v1383, %v850
      %v1417 = vsel %vm1395, %v1384, %v852
      %v1418 = vsel %vm1395, %v1385, %v854
      %v1419 = vsel %vm1395, %v1386, %v856
      %v1420 = vsel %vm1395, %v1387, %v858
      %v1421 = vsel %vm1395, %v1388, %v860
      %v1422 = vsel %vm1395, %v1389, %v862
      %v1423 = vsel %vm1395, %v1390, %v864
      %v1424 = vsel %vm1395, %v1391, %v866
      %v1425 = vsel %vm1395, %v1392, %v868
      %v1426 = vsel %vm1395, %v1393, %v870
      %v1427 = vsel %vm1395, %v1394, %v872
      %vm1428 = vcmask 162816
      %v1429 = vsel %vm1428, %v1396, %v908
      %v1430 = vsel %vm1428, %v1397, %v910
      %v1431 = vsel %vm1428, %v1398, %v912
      %v1432 = vsel %vm1428, %v1399, %v914
      %v1433 = vsel %vm1428, %v1400, %v916
      %v1434 = vsel %vm1428, %v1401, %v918
      %v1435 = vsel %vm1428, %v1402, %v920
      %v1436 = vsel %vm1428, %v1403, %v922
      %v1437 = vsel %vm1428, %v1404, %v924
      %v1438 = vsel %vm1428, %v1405, %v926
      %v1439 = vsel %vm1428, %v1406, %v928
      %v1440 = vsel %vm1428, %v1407, %v930
      %v1441 = vsel %vm1428, %v1408, %v932
      %v1442 = vsel %vm1428, %v1409, %v934
      %v1443 = vsel %vm1428, %v1410, %v936
      %v1444 = vsel %vm1428, %v1411, %v938
      %v1445 = vsel %vm1428, %v1412, %v940
      %v1446 = vsel %vm1428, %v1413, %v942
      %v1447 = vsel %vm1428, %v1414, %v944
      %v1448 = vsel %vm1428, %v1415, %v946
      %v1449 = vsel %vm1428, %v1416, %v948
      %v1450 = vsel %vm1428, %v1417, %v950
      %v1451 = vsel %vm1428, %v1418, %v952
      %v1452 = vsel %vm1428, %v1419, %v954
      %v1453 = vsel %vm1428, %v1420, %v956
      %v1454 = vsel %vm1428, %v1421, %v958
      %v1455 = vsel %vm1428, %v1422, %v960
      %v1456 = vsel %vm1428, %v1423, %v962
      %v1457 = vsel %vm1428, %v1424, %v964
      %v1458 = vsel %vm1428, %v1425, %v966
      %v1459 = vsel %vm1428, %v1426, %v968
      %v1460 = vsel %vm1428, %v1427, %v970
      %vm1461 = vcmask 195584
      %v1462 = vsel %vm1461, %v1429, %v1006
      %v1463 = vsel %vm1461, %v1430, %v1008
      %v1464 = vsel %vm1461, %v1431, %v1010
      %v1465 = vsel %vm1461, %v1432, %v1012
      %v1466 = vsel %vm1461, %v1433, %v1014
      %v1467 = vsel %vm1461, %v1434, %v1016
      %v1468 = vsel %vm1461, %v1435, %v1018
      %v1469 = vsel %vm1461, %v1436, %v1020
      %v1470 = vsel %vm1461, %v1437, %v1022
      %v1471 = vsel %vm1461, %v1438, %v1024
      %v1472 = vsel %vm1461, %v1439, %v1026
      %v1473 = vsel %vm1461, %v1440, %v1028
      %v1474 = vsel %vm1461, %v1441, %v1030
      %v1475 = vsel %vm1461, %v1442, %v1032
      %v1476 = vsel %vm1461, %v1443, %v1034
      %v1477 = vsel %vm1461, %v1444, %v1036
      %v1478 = vsel %vm1461, %v1445, %v1038
      %v1479 = vsel %vm1461, %v1446, %v1040
      %v1480 = vsel %vm1461, %v1447, %v1042
      %v1481 = vsel %vm1461, %v1448, %v1044
      %v1482 = vsel %vm1461, %v1449, %v1046
      %v1483 = vsel %vm1461, %v1450, %v1048
      %v1484 = vsel %vm1461, %v1451, %v1050
      %v1485 = vsel %vm1461, %v1452, %v1052
      %v1486 = vsel %vm1461, %v1453, %v1054
      %v1487 = vsel %vm1461, %v1454, %v1056
      %v1488 = vsel %vm1461, %v1455, %v1058
      %v1489 = vsel %vm1461, %v1456, %v1060
      %v1490 = vsel %vm1461, %v1457, %v1062
      %v1491 = vsel %vm1461, %v1458, %v1064
      %v1492 = vsel %vm1461, %v1459, %v1066
      %v1493 = vsel %vm1461, %v1460, %v1068
      %vm1494 = vcmask 228352
      %v1495 = vsel %vm1494, %v1462, %v1104
      %v1496 = vsel %vm1494, %v1463, %v1106
      %v1497 = vsel %vm1494, %v1464, %v1108
      %v1498 = vsel %vm1494, %v1465, %v1110
      %v1499 = vsel %vm1494, %v1466, %v1112
      %v1500 = vsel %vm1494, %v1467, %v1114
      %v1501 = vsel %vm1494, %v1468, %v1116
      %v1502 = vsel %vm1494, %v1469, %v1118
      %v1503 = vsel %vm1494, %v1470, %v1120
      %v1504 = vsel %vm1494, %v1471, %v1122
      %v1505 = vsel %vm1494, %v1472, %v1124
      %v1506 = vsel %vm1494, %v1473, %v1126
      %v1507 = vsel %vm1494, %v1474, %v1128
      %v1508 = vsel %vm1494, %v1475, %v1130
      %v1509 = vsel %vm1494, %v1476, %v1132
      %v1510 = vsel %vm1494, %v1477, %v1134
      %v1511 = vsel %vm1494, %v1478, %v1136
      %v1512 = vsel %vm1494, %v1479, %v1138
      %v1513 = vsel %vm1494, %v1480, %v1140
      %v1514 = vsel %vm1494, %v1481, %v1142
      %v1515 = vsel %vm1494, %v1482, %v1144
      %v1516 = vsel %vm1494, %v1483, %v1146
      %v1517 = vsel %vm1494, %v1484, %v1148
      %v1518 = vsel %vm1494, %v1485, %v1150
      %v1519 = vsel %vm1494, %v1486, %v1152
      %v1520 = vsel %vm1494, %v1487, %v1154
      %v1521 = vsel %vm1494, %v1488, %v1156
      %v1522 = vsel %vm1494, %v1489, %v1158
      %v1523 = vsel %vm1494, %v1490, %v1160
      %v1524 = vsel %vm1494, %v1491, %v1162
      %v1525 = vsel %vm1494, %v1492, %v1164
      %v1526 = vsel %vm1494, %v1493, %v1166
      %vm1527 = vcmask 261120
      %v1528 = vsel %vm1527, %v1495, %v1202
      %v1529 = vsel %vm1527, %v1496, %v1204
      %v1530 = vsel %vm1527, %v1497, %v1206
      %v1531 = vsel %vm1527, %v1498, %v1208
      %v1532 = vsel %vm1527, %v1499, %v1210
      %v1533 = vsel %vm1527, %v1500, %v1212
      %v1534 = vsel %vm1527, %v1501, %v1214
      %v1535 = vsel %vm1527, %v1502, %v1216
      %v1536 = vsel %vm1527, %v1503, %v1218
      %v1537 = vsel %vm1527, %v1504, %v1220
      %v1538 = vsel %vm1527, %v1505, %v1222
      %v1539 = vsel %vm1527, %v1506, %v1224
      %v1540 = vsel %vm1527, %v1507, %v1226
      %v1541 = vsel %vm1527, %v1508, %v1228
      %v1542 = vsel %vm1527, %v1509, %v1230
      %v1543 = vsel %vm1527, %v1510, %v1232
      %v1544 = vsel %vm1527, %v1511, %v1234
      %v1545 = vsel %vm1527, %v1512, %v1236
      %v1546 = vsel %vm1527, %v1513, %v1238
      %v1547 = vsel %vm1527, %v1514, %v1240
      %v1548 = vsel %vm1527, %v1515, %v1242
      %v1549 = vsel %vm1527, %v1516, %v1244
      %v1550 = vsel %vm1527, %v1517, %v1246
      %v1551 = vsel %vm1527, %v1518, %v1248
      %v1552 = vsel %vm1527, %v1519, %v1250
      %v1553 = vsel %vm1527, %v1520, %v1252
      %v1554 = vsel %vm1527, %v1521, %v1254
      %v1555 = vsel %vm1527, %v1522, %v1256
      %v1556 = vsel %vm1527, %v1523, %v1258
      %v1557 = vsel %vm1527, %v1524, %v1260
      %v1558 = vsel %vm1527, %v1525, %v1262
      %v1559 = vsel %vm1527, %v1526, %v1264
      %v1560 = vld [vmem:[%s1] sm:$0xff]
      %v1561 = vld [vmem:[%s1 + $0x8] sm:$0xff]
      %v1562 = vld [vmem:[%s1 + $0x10] sm:$0xff]
      %v1563 = vld [vmem:[%s1 + $0x18] sm:$0xff]
      %v1564 = vld [vmem:[%s1 + $0x20] sm:$0xf]
      %vm1565 = vcmask 293888
      %v1567 = vsel %vm1565, %v1528, 0
      %v1570 = vsel %vm1565, %v1529, 0
      %v1573 = vsel %vm1565, %v1530, 0
      %v1576 = vsel %vm1565, %v1531, 0
      %v1579 = vsel %vm1565, %v1532, 0
      %v1582 = vsel %vm1565, %v1533, 0
      %v1585 = vsel %vm1565, %v1534, 0
      %v1588 = vsel %vm1565, %v1535, 0
      %v1591 = vsel %vm1565, %v1536, 0
      %v1594 = vsel %vm1565, %v1537, 0
      %v1597 = vsel %vm1565, %v1538, 0
      %v1600 = vsel %vm1565, %v1539, 0
      %v1603 = vsel %vm1565, %v1540, 0
      %v1606 = vsel %vm1565, %v1541, 0
      %v1609 = vsel %vm1565, %v1542, 0
      %v1612 = vsel %vm1565, %v1543, 0
      %v1615 = vsel %vm1565, %v1544, 0
      %v1618 = vsel %vm1565, %v1545, 0
      %v1621 = vsel %vm1565, %v1546, 0
      %v1624 = vsel %vm1565, %v1547, 0
      %v1627 = vsel %vm1565, %v1548, 0
      %v1630 = vsel %vm1565, %v1549, 0
      %v1633 = vsel %vm1565, %v1550, 0
      %v1636 = vsel %vm1565, %v1551, 0
      %v1639 = vsel %vm1565, %v1552, 0
      %v1642 = vsel %vm1565, %v1553, 0
      %v1645 = vsel %vm1565, %v1554, 0
      %v1648 = vsel %vm1565, %v1555, 0
      %v1651 = vsel %vm1565, %v1556, 0
      %v1654 = vsel %vm1565, %v1557, 0
      %v1657 = vsel %vm1565, %v1558, 0
      %v1660 = vsel %vm1565, %v1559, 0
      %vm1662 = vcmask 1043456
      %v1664 = vsel %vm1662, %v1564, 0
      %1666 = vmatprep.subr.mxu0 0.0
      %1667 = vmatpush1.msra.mxu0 %v1560
      %1668 = vmatprep.subr.mxu0 0.0
      %1669 = vmatpush1.msra.mxu0 %v1561
      %1670 = vmatprep.subr.mxu0 0.0
      %1671 = vmatpush1.msra.mxu0 %v1562
      %1672 = vmatprep.subr.mxu0 0.0
      %1673 = vmatpush1.msra.mxu0 %v1563
      %1674 = vmatprep.subr.mxu0 0.0
      %1675 = vmatpush1.msra.mxu0 %v1664
      %1676 = vmatprep.subr.mxu0 0.0
      %1677 = vmatpush1.msra.mxu0 0.0
      %1678 = vmatprep.subr.mxu0 0.0
      %1679 = vmatpush1.msra.mxu0 0.0
      %1680 = vmatprep.subr.mxu0 0.0
      %1681 = vmatpush1.msra.mxu0 0.0
      %1682 = vmatprep.subr.mxu0 0.0
      %1683 = vmatpush1.msra.mxu0 0.0
      %1684 = vmatprep.subr.mxu0 0.0
      %1685 = vmatpush1.msra.mxu0 0.0
      %1686 = vmatprep.subr.mxu0 0.0
      %1687 = vmatpush1.msra.mxu0 0.0
      %1688 = vmatprep.subr.mxu0 0.0
      %1689 = vmatpush1.msra.mxu0 0.0
      %1690 = vmatprep.subr.mxu0 0.0
      %1691 = vmatpush1.msra.mxu0 0.0
      %1692 = vmatprep.subr.mxu0 0.0
      %1693 = vmatpush1.msra.mxu0 0.0
      %1694 = vmatprep.subr.mxu0 0.0
      %1695 = vmatpush1.msra.mxu0 0.0
      %1696 = vmatprep.subr.mxu0 0.0
      %1697 = vmatpush1.msra.mxu0 0.0
      %1698 = vmatprep.subr.mxu0 0.0
      %1699 = vmatpush1.msra.mxu0 0.0
      %1700 = vmatprep.subr.mxu0 0.0
      %1701 = vmatpush1.msra.mxu0 0.0
      %1702 = vmatprep.subr.mxu0 0.0
      %1703 = vmatpush1.msra.mxu0 0.0
      %1704 = vmatprep.subr.mxu0 0.0
      %1705 = vmatpush1.msra.mxu0 0.0
      %1706 = vmatprep.subr.mxu0 0.0
      %1707 = vmatpush1.msra.mxu0 0.0
      %1708 = vmatprep.subr.mxu0 0.0
      %1709 = vmatpush1.msra.mxu0 0.0
      %1710 = vmatprep.subr.mxu0 0.0
      %1711 = vmatpush1.msra.mxu0 0.0
      %1712 = vmatprep.subr.mxu0 0.0
      %1713 = vmatpush1.msra.mxu0 0.0
      %1714 = vmatprep.subr.mxu0 0.0
      %1715 = vmatpush1.msra.mxu0 0.0
      %1716 = vmatprep.subr.mxu0 0.0
      %1717 = vmatpush1.msra.mxu0 0.0
      %1718 = vmatprep.subr.mxu0 0.0
      %1719 = vmatpush1.msra.mxu0 0.0
      %1720 = vmatprep.subr.mxu0 0.0
      %1721 = vmatpush1.msra.mxu0 0.0
      %1722 = vmatprep.subr.mxu0 0.0
      %1723 = vmatpush1.msra.mxu0 0.0
      %1724 = vmatprep.subr.mxu0 0.0
      %1725 = vmatpush1.msra.mxu0 0.0
      %1726 = vmatprep.subr.mxu0 0.0
      %1727 = vmatpush1.msra.mxu0 0.0
      %1728 = vmatprep.subr.mxu0 0.0
      %1729 = vmatpush1.msra.mxu0 0.0
      %1730 = vmatprep.mubr.f32.mxu0 0.0
      %1731 = vmatmul.mubr.f32.gmra.mrb[0].mxu0 %v1567
      %v1732 = vpop.f32.mrb[0].mxu0
      %v1733 = vadd.f32 0.0, %v1732
      %v1734 = vpop.f32.mrb[0].mxu0
      %1735 = vmatprep.mubr.f32.mxu0 0.0
      %1736 = vmatmul.mubr.f32.gmra.mrb[0].mxu0 %v1570
      %v1737 = vpop.f32.mrb[0].mxu0
      %v1738 = vadd.f32 0.0, %v1737
      %v1739 = vpop.f32.mrb[0].mxu0
      %1740 = vmatprep.mubr.f32.mxu0 0.0
      %1741 = vmatmul.mubr.f32.gmra.mrb[0].mxu0 %v1573
      %v1742 = vpop.f32.mrb[0].mxu0
      %v1743 = vadd.f32 0.0, %v1742
      %v1744 = vpop.f32.mrb[0].mxu0
      %1745 = vmatprep.mubr.f32.mxu0 0.0
      %1746 = vmatmul.mubr.f32.gmra.mrb[0].mxu0 %v1576
      %v1747 = vpop.f32.mrb[0].mxu0
      %v1748 = vadd.f32 0.0, %v1747
      %v1749 = vpop.f32.mrb[0].mxu0
      %1750 = vmatprep.mubr.f32.mxu0 0.0
      %1751 = vmatmul.mubr.f32.gmra.mrb[0].mxu0 %v1579
      %v1752 = vpop.f32.mrb[0].mxu0
      %v1753 = vadd.f32 0.0, %v1752
      %v1754 = vpop.f32.mrb[0].mxu0
      %1755 = vmatprep.mubr.f32.mxu0 0.0
      %1756 = vmatmul.mubr.f32.gmra.mrb[0].mxu0 %v1582
      %v1757 = vpop.f32.mrb[0].mxu0
      %v1758 = vadd.f32 0.0, %v1757
      %v1759 = vpop.f32.mrb[0].mxu0
      %1760 = vmatprep.mubr.f32.mxu0 0.0
      %1761 = vmatmul.mubr.f32.gmra.mrb[0].mxu0 %v1585
      %v1762 = vpop.f32.mrb[0].mxu0
      %v1763 = vadd.f32 0.0, %v1762
      %v1764 = vpop.f32.mrb[0].mxu0
      %1765 = vmatprep.mubr.f32.mxu0 0.0
      %1766 = vmatmul.mubr.f32.gmra.mrb[0].mxu0 %v1588
      %v1767 = vpop.f32.mrb[0].mxu0
      %v1768 = vadd.f32 0.0, %v1767
      %v1769 = vpop.f32.mrb[0].mxu0
      %1770 = vmatprep.mubr.f32.mxu0 0.0
      %1771 = vmatmul.mubr.f32.gmra.mrb[0].mxu0 %v1591
      %v1772 = vpop.f32.mrb[0].mxu0
      %v1773 = vadd.f32 0.0, %v1772
      %v1774 = vpop.f32.mrb[0].mxu0
      %1775 = vmatprep.mubr.f32.mxu0 0.0
      %1776 = vmatmul.mubr.f32.gmra.mrb[0].mxu0 %v1594
      %v1777 = vpop.f32.mrb[0].mxu0
      %v1778 = vadd.f32 0.0, %v1777
      %v1779 = vpop.f32.mrb[0].mxu0
      %1780 = vmatprep.mubr.f32.mxu0 0.0
      %1781 = vmatmul.mubr.f32.gmra.mrb[0].mxu0 %v1597
      %v1782 = vpop.f32.mrb[0].mxu0
      %v1783 = vadd.f32 0.0, %v1782
      %v1784 = vpop.f32.mrb[0].mxu0
      %1785 = vmatprep.mubr.f32.mxu0 0.0
      %1786 = vmatmul.mubr.f32.gmra.mrb[0].mxu0 %v1600
      %v1787 = vpop.f32.mrb[0].mxu0
      %v1788 = vadd.f32 0.0, %v1787
      %v1789 = vpop.f32.mrb[0].mxu0
      %1790 = vmatprep.mubr.f32.mxu0 0.0
      %1791 = vmatmul.mubr.f32.gmra.mrb[0].mxu0 %v1603
      %v1792 = vpop.f32.mrb[0].mxu0
      %v1793 = vadd.f32 0.0, %v1792
      %v1794 = vpop.f32.mrb[0].mxu0
      %1795 = vmatprep.mubr.f32.mxu0 0.0
      %1796 = vmatmul.mubr.f32.gmra.mrb[0].mxu0 %v1606
      %v1797 = vpop.f32.mrb[0].mxu0
      %v1798 = vadd.f32 0.0, %v1797
      %v1799 = vpop.f32.mrb[0].mxu0
      %1800 = vmatprep.mubr.f32.mxu0 0.0
      %1801 = vmatmul.mubr.f32.gmra.mrb[0].mxu0 %v1609
      %v1802 = vpop.f32.mrb[0].mxu0
      %v1803 = vadd.f32 0.0, %v1802
      %v1804 = vpop.f32.mrb[0].mxu0
      %1805 = vmatprep.mubr.f32.mxu0 0.0
      %1806 = vmatmul.mubr.f32.gmra.mrb[0].mxu0 %v1612
      %v1807 = vpop.f32.mrb[0].mxu0
      %v1808 = vadd.f32 0.0, %v1807
      %v1809 = vpop.f32.mrb[0].mxu0
      %1810 = vmatprep.mubr.f32.mxu0 0.0
      %1811 = vmatmul.mubr.f32.gmra.mrb[0].mxu0 %v1615
      %v1812 = vpop.f32.mrb[0].mxu0
      %v1813 = vadd.f32 0.0, %v1812
      %v1814 = vpop.f32.mrb[0].mxu0
      %1815 = vmatprep.mubr.f32.mxu0 0.0
      %1816 = vmatmul.mubr.f32.gmra.mrb[0].mxu0 %v1618
      %v1817 = vpop.f32.mrb[0].mxu0
      %v1818 = vadd.f32 0.0, %v1817
      %v1819 = vpop.f32.mrb[0].mxu0
      %1820 = vmatprep.mubr.f32.mxu0 0.0
      %1821 = vmatmul.mubr.f32.gmra.mrb[0].mxu0 %v1621
      %v1822 = vpop.f32.mrb[0].mxu0
      %v1823 = vadd.f32 0.0, %v1822
      %v1824 = vpop.f32.mrb[0].mxu0
      %1825 = vmatprep.mubr.f32.mxu0 0.0
      %1826 = vmatmul.mubr.f32.gmra.mrb[0].mxu0 %v1624
      %v1827 = vpop.f32.mrb[0].mxu0
      %v1828 = vadd.f32 0.0, %v1827
      %v1829 = vpop.f32.mrb[0].mxu0
      %1830 = vmatprep.mubr.f32.mxu0 0.0
      %1831 = vmatmul.mubr.f32.gmra.mrb[0].mxu0 %v1627
      %v1832 = vpop.f32.mrb[0].mxu0
      %v1833 = vadd.f32 0.0, %v1832
      %v1834 = vpop.f32.mrb[0].mxu0
      %1835 = vmatprep.mubr.f32.mxu0 0.0
      %1836 = vmatmul.mubr.f32.gmra.mrb[0].mxu0 %v1630
      %v1837 = vpop.f32.mrb[0].mxu0
      %v1838 = vadd.f32 0.0, %v1837
      %v1839 = vpop.f32.mrb[0].mxu0
      %1840 = vmatprep.mubr.f32.mxu0 0.0
      %1841 = vmatmul.mubr.f32.gmra.mrb[0].mxu0 %v1633
      %v1842 = vpop.f32.mrb[0].mxu0
      %v1843 = vadd.f32 0.0, %v1842
      %v1844 = vpop.f32.mrb[0].mxu0
      %1845 = vmatprep.mubr.f32.mxu0 0.0
      %1846 = vmatmul.mubr.f32.gmra.mrb[0].mxu0 %v1636
      %v1847 = vpop.f32.mrb[0].mxu0
      %v1848 = vadd.f32 0.0, %v1847
      %v1849 = vpop.f32.mrb[0].mxu0
      %1850 = vmatprep.mubr.f32.mxu0 0.0
      %1851 = vmatmul.mubr.f32.gmra.mrb[0].mxu0 %v1639
      %v1852 = vpop.f32.mrb[0].mxu0
      %v1853 = vadd.f32 0.0, %v1852
      %v1854 = vpop.f32.mrb[0].mxu0
      %1855 = vmatprep.mubr.f32.mxu0 0.0
      %1856 = vmatmul.mubr.f32.gmra.mrb[0].mxu0 %v1642
      %v1857 = vpop.f32.mrb[0].mxu0
      %v1858 = vadd.f32 0.0, %v1857
      %v1859 = vpop.f32.mrb[0].mxu0
      %1860 = vmatprep.mubr.f32.mxu0 0.0
      %1861 = vmatmul.mubr.f32.gmra.mrb[0].mxu0 %v1645
      %v1862 = vpop.f32.mrb[0].mxu0
      %v1863 = vadd.f32 0.0, %v1862
      %v1864 = vpop.f32.mrb[0].mxu0
      %1865 = vmatprep.mubr.f32.mxu0 0.0
      %1866 = vmatmul.mubr.f32.gmra.mrb[0].mxu0 %v1648
      %v1867 = vpop.f32.mrb[0].mxu0
      %v1868 = vadd.f32 0.0, %v1867
      %v1869 = vpop.f32.mrb[0].mxu0
      %1870 = vmatprep.mubr.f32.mxu0 0.0
      %1871 = vmatmul.mubr.f32.gmra.mrb[0].mxu0 %v1651
      %v1872 = vpop.f32.mrb[0].mxu0
      %v1873 = vadd.f32 0.0, %v1872
      %v1874 = vpop.f32.mrb[0].mxu0
      %1875 = vmatprep.mubr.f32.mxu0 0.0
      %1876 = vmatmul.mubr.f32.gmra.mrb[0].mxu0 %v1654
      %v1877 = vpop.f32.mrb[0].mxu0
      %v1878 = vadd.f32 0.0, %v1877
      %v1879 = vpop.f32.mrb[0].mxu0
      %1880 = vmatprep.mubr.f32.mxu0 0.0
      %1881 = vmatmul.mubr.f32.gmra.mrb[0].mxu0 %v1657
      %v1882 = vpop.f32.mrb[0].mxu0
      %v1883 = vadd.f32 0.0, %v1882
      %v1884 = vpop.f32.mrb[0].mxu0
      %1885 = vmatprep.mubr.f32.mxu0 0.0
      %1886 = vmatmul.mubr.f32.gmra.mrb[0].mxu0 %v1660
      %v1887 = vpop.f32.mrb[0].mxu0
      %v1888 = vadd.f32 0.0, %v1887
      %v1889 = vpop.f32.mrb[0].mxu0
      %1890 = vdwg.mxu0
      %v1891 = vsel %vm204, %v1733, 0.0
      %v1892 = vsel %vm204, %v1738, 0.0
      %v1893 = vadd.f32 %v1891, %v1892
      %v1894 = vsel %vm204, %v1743, 0.0
      %v1895 = vadd.f32 %v1893, %v1894
      %v1896 = vsel %vm204, %v1748, 0.0
      %v1897 = vadd.f32 %v1895, %v1896
      %v1898 = vsel %vm204, %v1753, 0.0
      %v1899 = vadd.f32 %v1897, %v1898
      %v1900 = vsel %vm204, %v1758, 0.0
      %v1901 = vadd.f32 %v1899, %v1900
      %v1902 = vsel %vm204, %v1763, 0.0
      %v1903 = vadd.f32 %v1901, %v1902
      %v1904 = vsel %vm204, %v1768, 0.0
      %v1905 = vadd.f32 %v1903, %v1904
      %v1906 = vsel %vm204, %v1773, 0.0
      %v1907 = vadd.f32 %v1905, %v1906
      %v1908 = vsel %vm204, %v1778, 0.0
      %v1909 = vadd.f32 %v1907, %v1908
      %v1910 = vsel %vm204, %v1783, 0.0
      %v1911 = vadd.f32 %v1909, %v1910
      %v1912 = vsel %vm204, %v1788, 0.0
      %v1913 = vadd.f32 %v1911, %v1912
      %v1914 = vsel %vm204, %v1793, 0.0
      %v1915 = vadd.f32 %v1913, %v1914
      %v1916 = vsel %vm204, %v1798, 0.0
      %v1917 = vadd.f32 %v1915, %v1916
      %v1918 = vsel %vm204, %v1803, 0.0
      %v1919 = vadd.f32 %v1917, %v1918
      %v1920 = vsel %vm204, %v1808, 0.0
      %v1921 = vadd.f32 %v1919, %v1920
      %v1922 = vsel %vm204, %v1813, 0.0
      %v1923 = vadd.f32 %v1921, %v1922
      %v1924 = vsel %vm204, %v1818, 0.0
      %v1925 = vadd.f32 %v1923, %v1924
      %v1926 = vsel %vm204, %v1823, 0.0
      %v1927 = vadd.f32 %v1925, %v1926
      %v1928 = vsel %vm204, %v1828, 0.0
      %v1929 = vadd.f32 %v1927, %v1928
      %v1930 = vsel %vm204, %v1833, 0.0
      %v1931 = vadd.f32 %v1929, %v1930
      %v1932 = vsel %vm204, %v1838, 0.0
      %v1933 = vadd.f32 %v1931, %v1932
      %v1934 = vsel %vm204, %v1843, 0.0
      %v1935 = vadd.f32 %v1933, %v1934
      %v1936 = vsel %vm204, %v1848, 0.0
      %v1937 = vadd.f32 %v1935, %v1936
      %v1938 = vsel %vm204, %v1853, 0.0
      %v1939 = vadd.f32 %v1937, %v1938
      %v1940 = vsel %vm204, %v1858, 0.0
      %v1941 = vadd.f32 %v1939, %v1940
      %v1942 = vsel %vm204, %v1863, 0.0
      %v1943 = vadd.f32 %v1941, %v1942
      %v1944 = vsel %vm204, %v1868, 0.0
      %v1945 = vadd.f32 %v1943, %v1944
      %v1946 = vsel %vm204, %v1873, 0.0
      %v1947 = vadd.f32 %v1945, %v1946
      %v1948 = vsel %vm204, %v1878, 0.0
      %v1949 = vadd.f32 %v1947, %v1948
      %v1950 = vsel %vm204, %v1883, 0.0
      %v1951 = vadd.f32 %v1949, %v1950
      %v1952 = vsel %vm204, %v1888, 0.0
      %v1953 = vadd.f32 %v1951, %v1952
      %v1954 = vrot.slane %v1953, 4
      %v1955 = vadd.f32 %v1953, %v1954
      %v1956 = vrot.slane %v1955, 2
      %v1957 = vadd.f32 %v1955, %v1956
      %v1958 = vrot.slane %v1957, 1
      %v1959 = vadd.f32 %v1957, %v1958
      %v1960 = vmul.f32 %v1959, 0.00390625
      %v1961 = vmul.f32 %v1733, %v1733
      %v1962 = vmul.f32 %v1738, %v1738
      %v1963 = vmul.f32 %v1743, %v1743
      %v1964 = vmul.f32 %v1748, %v1748
      %v1965 = vmul.f32 %v1753, %v1753
      %v1966 = vmul.f32 %v1758, %v1758
      %v1967 = vmul.f32 %v1763, %v1763
      %v1968 = vmul.f32 %v1768, %v1768
      %v1969 = vmul.f32 %v1773, %v1773
      %v1970 = vmul.f32 %v1778, %v1778
      %v1971 = vmul.f32 %v1783, %v1783
      %v1972 = vmul.f32 %v1788, %v1788
      %v1973 = vmul.f32 %v1793, %v1793
      %v1974 = vmul.f32 %v1798, %v1798
      %v1975 = vmul.f32 %v1803, %v1803
      %v1976 = vmul.f32 %v1808, %v1808
      %v1977 = vmul.f32 %v1813, %v1813
      %v1978 = vmul.f32 %v1818, %v1818
      %v1979 = vmul.f32 %v1823, %v1823
      %v1980 = vmul.f32 %v1828, %v1828
      %v1981 = vmul.f32 %v1833, %v1833
      %v1982 = vmul.f32 %v1838, %v1838
      %v1983 = vmul.f32 %v1843, %v1843
      %v1984 = vmul.f32 %v1848, %v1848
      %v1985 = vmul.f32 %v1853, %v1853
      %v1986 = vmul.f32 %v1858, %v1858
      %v1987 = vmul.f32 %v1863, %v1863
      %v1988 = vmul.f32 %v1868, %v1868
      %v1989 = vmul.f32 %v1873, %v1873
      %v1990 = vmul.f32 %v1878, %v1878
      %v1991 = vmul.f32 %v1883, %v1883
      %v1992 = vmul.f32 %v1888, %v1888
      %v1993 = vsel %vm204, %v1961, 0.0
      %v1994 = vsel %vm204, %v1962, 0.0
      %v1995 = vadd.f32 %v1993, %v1994
      %v1996 = vsel %vm204, %v1963, 0.0
      %v1997 = vadd.f32 %v1995, %v1996
      %v1998 = vsel %vm204, %v1964, 0.0
      %v1999 = vadd.f32 %v1997, %v1998
      %v2000 = vsel %vm204, %v1965, 0.0
      %v2001 = vadd.f32 %v1999, %v2000
      %v2002 = vsel %vm204, %v1966, 0.0
      %v2003 = vadd.f32 %v2001, %v2002
      %v2004 = vsel %vm204, %v1967, 0.0
      %v2005 = vadd.f32 %v2003, %v2004
      %v2006 = vsel %vm204, %v1968, 0.0
      %v2007 = vadd.f32 %v2005, %v2006
      %v2008 = vsel %vm204, %v1969, 0.0
      %v2009 = vadd.f32 %v2007, %v2008
      %v2010 = vsel %vm204, %v1970, 0.0
      %v2011 = vadd.f32 %v2009, %v2010
      %v2012 = vsel %vm204, %v1971, 0.0
      %v2013 = vadd.f32 %v2011, %v2012
      %v2014 = vsel %vm204, %v1972, 0.0
      %v2015 = vadd.f32 %v2013, %v2014
      %v2016 = vsel %vm204, %v1973, 0.0
      %v2017 = vadd.f32 %v2015, %v2016
      %v2018 = vsel %vm204, %v1974, 0.0
      %v2019 = vadd.f32 %v2017, %v2018
      %v2020 = vsel %vm204, %v1975, 0.0
      %v2021 = vadd.f32 %v2019, %v2020
      %v2022 = vsel %vm204, %v1976, 0.0
      %v2023 = vadd.f32 %v2021, %v2022
      %v2024 = vsel %vm204, %v1977, 0.0
      %v2025 = vadd.f32 %v2023, %v2024
      %v2026 = vsel %vm204, %v1978, 0.0
      %v2027 = vadd.f32 %v2025, %v2026
      %v2028 = vsel %vm204, %v1979, 0.0
      %v2029 = vadd.f32 %v2027, %v2028
      %v2030 = vsel %vm204, %v1980, 0.0
      %v2031 = vadd.f32 %v2029, %v2030
      %v2032 = vsel %vm204, %v1981, 0.0
      %v2033 = vadd.f32 %v2031, %v2032
      %v2034 = vsel %vm204, %v1982, 0.0
      %v2035 = vadd.f32 %v2033, %v2034
      %v2036 = vsel %vm204, %v1983, 0.0
      %v2037 = vadd.f32 %v2035, %v2036
      %v2038 = vsel %vm204, %v1984, 0.0
      %v2039 = vadd.f32 %v2037, %v2038
      %v2040 = vsel %vm204, %v1985, 0.0
      %v2041 = vadd.f32 %v2039, %v2040
      %v2042 = vsel %vm204, %v1986, 0.0
      %v2043 = vadd.f32 %v2041, %v2042
      %v2044 = vsel %vm204, %v1987, 0.0
      %v2045 = vadd.f32 %v2043, %v2044
      %v2046 = vsel %vm204, %v1988, 0.0
      %v2047 = vadd.f32 %v2045, %v2046
      %v2048 = vsel %vm204, %v1989, 0.0
      %v2049 = vadd.f32 %v2047, %v2048
      %v2050 = vsel %vm204, %v1990, 0.0
      %v2051 = vadd.f32 %v2049, %v2050
      %v2052 = vsel %vm204, %v1991, 0.0
      %v2053 = vadd.f32 %v2051, %v2052
      %v2054 = vsel %vm204, %v1992, 0.0
      %v2055 = vadd.f32 %v2053, %v2054
      %v2056 = vrot.slane %v2055, 4
      %v2057 = vadd.f32 %v2055, %v2056
      %v2058 = vrot.slane %v2057, 2
      %v2059 = vadd.f32 %v2057, %v2058
      %v2060 = vrot.slane %v2059, 1
      %v2061 = vadd.f32 %v2059, %v2060
      %v2062 = vmul.f32 %v2061, 0.00390625
      %v2063 = vmul.f32 %v1960, %v1960
      %v2064 = vsub.f32 %v2062, %v2063
      %v2065 = vmax.f32 %v2064, 0.0
      %v2066 = vadd.f32 %v2065, 1e-05
      %v2067 = vrsqrt.pop %v2066
      %v2068 = vsub.f32 %v1733, %v1960
      %v2069 = vsub.f32 %v1738, %v1960
      %v2070 = vsub.f32 %v1743, %v1960
      %v2071 = vsub.f32 %v1748, %v1960
      %v2072 = vsub.f32 %v1753, %v1960
      %v2073 = vsub.f32 %v1758, %v1960
      %v2074 = vsub.f32 %v1763, %v1960
      %v2075 = vsub.f32 %v1768, %v1960
      %v2076 = vsub.f32 %v1773, %v1960
      %v2077 = vsub.f32 %v1778, %v1960
      %v2078 = vsub.f32 %v1783, %v1960
      %v2079 = vsub.f32 %v1788, %v1960
      %v2080 = vsub.f32 %v1793, %v1960
      %v2081 = vsub.f32 %v1798, %v1960
      %v2082 = vsub.f32 %v1803, %v1960
      %v2083 = vsub.f32 %v1808, %v1960
      %v2084 = vsub.f32 %v1813, %v1960
      %v2085 = vsub.f32 %v1818, %v1960
      %v2086 = vsub.f32 %v1823, %v1960
      %v2087 = vsub.f32 %v1828, %v1960
      %v2088 = vsub.f32 %v1833, %v1960
      %v2089 = vsub.f32 %v1838, %v1960
      %v2090 = vsub.f32 %v1843, %v1960
      %v2091 = vsub.f32 %v1848, %v1960
      %v2092 = vsub.f32 %v1853, %v1960
      %v2093 = vsub.f32 %v1858, %v1960
      %v2094 = vsub.f32 %v1863, %v1960
      %v2095 = vsub.f32 %v1868, %v1960
      %v2096 = vsub.f32 %v1873, %v1960
      %v2097 = vsub.f32 %v1878, %v1960
      %v2098 = vsub.f32 %v1883, %v1960
      %v2099 = vsub.f32 %v1888, %v1960
      %v2100 = vmul.f32 %v2068, %v2067
      %v2101 = vmul.f32 %v2069, %v2067
      %v2102 = vmul.f32 %v2070, %v2067
      %v2103 = vmul.f32 %v2071, %v2067
      %v2104 = vmul.f32 %v2072, %v2067
      %v2105 = vmul.f32 %v2073, %v2067
      %v2106 = vmul.f32 %v2074, %v2067
      %v2107 = vmul.f32 %v2075, %v2067
      %v2108 = vmul.f32 %v2076, %v2067
      %v2109 = vmul.f32 %v2077, %v2067
      %v2110 = vmul.f32 %v2078, %v2067
      %v2111 = vmul.f32 %v2079, %v2067
      %v2112 = vmul.f32 %v2080, %v2067
      %v2113 = vmul.f32 %v2081, %v2067
      %v2114 = vmul.f32 %v2082, %v2067
      %v2115 = vmul.f32 %v2083, %v2067
      %v2116 = vmul.f32 %v2084, %v2067
      %v2117 = vmul.f32 %v2085, %v2067
      %v2118 = vmul.f32 %v2086, %v2067
      %v2119 = vmul.f32 %v2087, %v2067
      %v2120 = vmul.f32 %v2088, %v2067
      %v2121 = vmul.f32 %v2089, %v2067
      %v2122 = vmul.f32 %v2090, %v2067
      %v2123 = vmul.f32 %v2091, %v2067
      %v2124 = vmul.f32 %v2092, %v2067
      %v2125 = vmul.f32 %v2093, %v2067
      %v2126 = vmul.f32 %v2094, %v2067
      %v2127 = vmul.f32 %v2095, %v2067
      %v2128 = vmul.f32 %v2096, %v2067
      %v2129 = vmul.f32 %v2097, %v2067
      %v2130 = vmul.f32 %v2098, %v2067
      %v2131 = vmul.f32 %v2099, %v2067
      %v2132 = vmax.f32 %v2100, 0.0
      %v2133 = vmax.f32 %v2101, 0.0
      %v2134 = vmax.f32 %v2102, 0.0
      %v2135 = vmax.f32 %v2103, 0.0
      %v2136 = vmax.f32 %v2104, 0.0
      %v2137 = vmax.f32 %v2105, 0.0
      %v2138 = vmax.f32 %v2106, 0.0
      %v2139 = vmax.f32 %v2107, 0.0
      %v2140 = vmax.f32 %v2108, 0.0
      %v2141 = vmax.f32 %v2109, 0.0
      %v2142 = vmax.f32 %v2110, 0.0
      %v2143 = vmax.f32 %v2111, 0.0
      %v2144 = vmax.f32 %v2112, 0.0
      %v2145 = vmax.f32 %v2113, 0.0
      %v2146 = vmax.f32 %v2114, 0.0
      %v2147 = vmax.f32 %v2115, 0.0
      %v2148 = vmax.f32 %v2116, 0.0
      %v2149 = vmax.f32 %v2117, 0.0
      %v2150 = vmax.f32 %v2118, 0.0
      %v2151 = vmax.f32 %v2119, 0.0
      %v2152 = vmax.f32 %v2120, 0.0
      %v2153 = vmax.f32 %v2121, 0.0
      %v2154 = vmax.f32 %v2122, 0.0
      %v2155 = vmax.f32 %v2123, 0.0
      %v2156 = vmax.f32 %v2124, 0.0
      %v2157 = vmax.f32 %v2125, 0.0
      %v2158 = vmax.f32 %v2126, 0.0
      %v2159 = vmax.f32 %v2127, 0.0
      %v2160 = vmax.f32 %v2128, 0.0
      %v2161 = vmax.f32 %v2129, 0.0
      %v2162 = vmax.f32 %v2130, 0.0
      %v2163 = vmax.f32 %v2131, 0.0
      %2164 = vst.msk [vmem:[%s203 + $0x8] sm:$0xff] %vm204, %v2132
      %2165 = vst.msk [vmem:[%s203 + $0x10] sm:$0xff] %vm204, %v2133
      %2166 = vst.msk [vmem:[%s203 + $0x28] sm:$0xff] %vm204, %v2134
      %2167 = vst.msk [vmem:[%s203 + $0x30] sm:$0xff] %vm204, %v2135
      %2168 = vst.msk [vmem:[%s203 + $0x48] sm:$0xff] %vm204, %v2136
      %2169 = vst.msk [vmem:[%s203 + $0x50] sm:$0xff] %vm204, %v2137
      %2170 = vst.msk [vmem:[%s203 + $0x68] sm:$0xff] %vm204, %v2138
      %2171 = vst.msk [vmem:[%s203 + $0x70] sm:$0xff] %vm204, %v2139
      %2172 = vst.msk [vmem:[%s203 + $0x88] sm:$0xff] %vm204, %v2140
      %2173 = vst.msk [vmem:[%s203 + $0x90] sm:$0xff] %vm204, %v2141
      %2174 = vst.msk [vmem:[%s203 + $0xa8] sm:$0xff] %vm204, %v2142
      %2175 = vst.msk [vmem:[%s203 + $0xb0] sm:$0xff] %vm204, %v2143
      %2176 = vst.msk [vmem:[%s203 + $0xc8] sm:$0xff] %vm204, %v2144
      %2177 = vst.msk [vmem:[%s203 + $0xd0] sm:$0xff] %vm204, %v2145
      %2178 = vst.msk [vmem:[%s203 + $0xe8] sm:$0xff] %vm204, %v2146
      %2179 = vst.msk [vmem:[%s203 + $0xf0] sm:$0xff] %vm204, %v2147
      %2180 = vst.msk [vmem:[%s203 + $0x108] sm:$0xff] %vm204, %v2148
      %2181 = vst.msk [vmem:[%s203 + $0x110] sm:$0xff] %vm204, %v2149
      %2182 = vst.msk [vmem:[%s203 + $0x128] sm:$0xff] %vm204, %v2150
      %2183 = vst.msk [vmem:[%s203 + $0x130] sm:$0xff] %vm204, %v2151
      %2184 = vst.msk [vmem:[%s203 + $0x148] sm:$0xff] %vm204, %v2152
      %2185 = vst.msk [vmem:[%s203 + $0x150] sm:$0xff] %vm204, %v2153
      %2186 = vst.msk [vmem:[%s203 + $0x168] sm:$0xff] %vm204, %v2154
      %2187 = vst.msk [vmem:[%s203 + $0x170] sm:$0xff] %vm204, %v2155
      %2188 = vst.msk [vmem:[%s203 + $0x188] sm:$0xff] %vm204, %v2156
      %2189 = vst.msk [vmem:[%s203 + $0x190] sm:$0xff] %vm204, %v2157
      %2190 = vst.msk [vmem:[%s203 + $0x1a8] sm:$0xff] %vm204, %v2158
      %2191 = vst.msk [vmem:[%s203 + $0x1b0] sm:$0xff] %vm204, %v2159
      %2192 = vst.msk [vmem:[%s203 + $0x1c8] sm:$0xff] %vm204, %v2160
      %2193 = vst.msk [vmem:[%s203 + $0x1d0] sm:$0xff] %vm204, %v2161
      %2194 = vst.msk [vmem:[%s203 + $0x1e8] sm:$0xff] %vm204, %v2162
      %2195 = vst.msk [vmem:[%s203 + $0x1f0] sm:$0xff] %vm204, %v2163
      %2196 = vst.msk [vmem:[#allocation2 + $0x8] sm:$0xff] %vm204, %v2134
      %2197 = vst.msk [vmem:[#allocation2 + $0x10] sm:$0xff] %vm204, %v2135
      %2198 = vst.msk [vmem:[%s239 + $0x8] sm:$0xff] %vm204, %v2160
      %2199 = vst.msk [vmem:[%s239 + $0x10] sm:$0xff] %vm204, %v2161
      %v2200 = vld [vmem:[#allocation2 + $0x9] sm:$0x1]
      %v2201 = vld [vmem:[#allocation2 + $0x29] sm:$0x1]
      %v2202 = vld [vmem:[#allocation2 + $0x49] sm:$0x1]
      %v2203 = vld [vmem:[#allocation2 + $0x69] sm:$0x1]
      %v2204 = vld [vmem:[#allocation2 + $0x89] sm:$0x1]
      %v2205 = vld [vmem:[#allocation2 + $0xa9] sm:$0x1]
      %v2206 = vld [vmem:[#allocation2 + $0xc9] sm:$0x1]
      %v2207 = vld [vmem:[#allocation2 + $0xe9] sm:$0x1]
      %v2208 = vld [vmem:[#allocation2 + $0x109] sm:$0x1]
      %v2209 = vld [vmem:[#allocation2 + $0x129] sm:$0x1]
      %v2210 = vld [vmem:[#allocation2 + $0x149] sm:$0x1]
      %v2211 = vld [vmem:[#allocation2 + $0x169] sm:$0x1]
      %v2212 = vld [vmem:[#allocation2 + $0x189] sm:$0x1]
      %v2213 = vld [vmem:[#allocation2 + $0x1a9] sm:$0x1]
      %v2214 = vld [vmem:[#allocation2 + $0x1c9] sm:$0x1]
      %v2215 = vld [vmem:[#allocation2 + $0x1e9] sm:$0x1]
      %v2216 = vld [vmem:[#allocation2 + $0x209] sm:$0x1]
      %v2217 = vld [vmem:[#allocation2 + $0x229] sm:$0x1]
      %2218 = vst.msk [vmem:[#allocation2 + $0x7] sm:$0x1] %vm260, %v2200
      %2219 = vst.msk [vmem:[#allocation2 + $0x27] sm:$0x1] %vm260, %v2201
      %2220 = vst.msk [vmem:[#allocation2 + $0x47] sm:$0x1] %vm260, %v2202
      %2221 = vst.msk [vmem:[#allocation2 + $0x67] sm:$0x1] %vm260, %v2203
      %2222 = vst.msk [vmem:[#allocation2 + $0x87] sm:$0x1] %vm260, %v2204
      %2223 = vst.msk [vmem:[#allocation2 + $0xa7] sm:$0x1] %vm260, %v2205
      %2224 = vst.msk [vmem:[#allocation2 + $0xc7] sm:$0x1] %vm260, %v2206
      %2225 = vst.msk [vmem:[#allocation2 + $0xe7] sm:$0x1] %vm260, %v2207
      %2226 = vst.msk [vmem:[#allocation2 + $0x107] sm:$0x1] %vm260, %v2208
      %2227 = vst.msk [vmem:[#allocation2 + $0x127] sm:$0x1] %vm260, %v2209
      %2228 = vst.msk [vmem:[#allocation2 + $0x147] sm:$0x1] %vm260, %v2210
      %2229 = vst.msk [vmem:[#allocation2 + $0x167] sm:$0x1] %vm260, %v2211
      %2230 = vst.msk [vmem:[#allocation2 + $0x187] sm:$0x1] %vm260, %v2212
      %2231 = vst.msk [vmem:[#allocation2 + $0x1a7] sm:$0x1] %vm260, %v2213
      %2232 = vst.msk [vmem:[#allocation2 + $0x1c7] sm:$0x1] %vm260, %v2214
      %2233 = vst.msk [vmem:[#allocation2 + $0x1e7] sm:$0x1] %vm260, %v2215
      %2234 = vst.msk [vmem:[#allocation2 + $0x207] sm:$0x1] %vm260, %v2216
      %2235 = vst.msk [vmem:[#allocation2 + $0x227] sm:$0x1] %vm260, %v2217
      %v2236 = vld [vmem:[#allocation2 + $0x16] sm:$0x1]
      %v2237 = vld [vmem:[#allocation2 + $0x36] sm:$0x1]
      %v2238 = vld [vmem:[#allocation2 + $0x56] sm:$0x1]
      %v2239 = vld [vmem:[#allocation2 + $0x76] sm:$0x1]
      %v2240 = vld [vmem:[#allocation2 + $0x96] sm:$0x1]
      %v2241 = vld [vmem:[#allocation2 + $0xb6] sm:$0x1]
      %v2242 = vld [vmem:[#allocation2 + $0xd6] sm:$0x1]
      %v2243 = vld [vmem:[#allocation2 + $0xf6] sm:$0x1]
      %v2244 = vld [vmem:[#allocation2 + $0x116] sm:$0x1]
      %v2245 = vld [vmem:[#allocation2 + $0x136] sm:$0x1]
      %v2246 = vld [vmem:[#allocation2 + $0x156] sm:$0x1]
      %v2247 = vld [vmem:[#allocation2 + $0x176] sm:$0x1]
      %v2248 = vld [vmem:[#allocation2 + $0x196] sm:$0x1]
      %v2249 = vld [vmem:[#allocation2 + $0x1b6] sm:$0x1]
      %v2250 = vld [vmem:[#allocation2 + $0x1d6] sm:$0x1]
      %v2251 = vld [vmem:[#allocation2 + $0x1f6] sm:$0x1]
      %v2252 = vld [vmem:[#allocation2 + $0x216] sm:$0x1]
      %v2253 = vld [vmem:[#allocation2 + $0x236] sm:$0x1]
      %2254 = vst.msk [vmem:[#allocation2 + $0x18] sm:$0x1] %vm260, %v2236
      %2255 = vst.msk [vmem:[#allocation2 + $0x38] sm:$0x1] %vm260, %v2237
      %2256 = vst.msk [vmem:[#allocation2 + $0x58] sm:$0x1] %vm260, %v2238
      %2257 = vst.msk [vmem:[#allocation2 + $0x78] sm:$0x1] %vm260, %v2239
      %2258 = vst.msk [vmem:[#allocation2 + $0x98] sm:$0x1] %vm260, %v2240
      %2259 = vst.msk [vmem:[#allocation2 + $0xb8] sm:$0x1] %vm260, %v2241
      %2260 = vst.msk [vmem:[#allocation2 + $0xd8] sm:$0x1] %vm260, %v2242
      %2261 = vst.msk [vmem:[#allocation2 + $0xf8] sm:$0x1] %vm260, %v2243
      %2262 = vst.msk [vmem:[#allocation2 + $0x118] sm:$0x1] %vm260, %v2244
      %2263 = vst.msk [vmem:[#allocation2 + $0x138] sm:$0x1] %vm260, %v2245
      %2264 = vst.msk [vmem:[#allocation2 + $0x158] sm:$0x1] %vm260, %v2246
      %2265 = vst.msk [vmem:[#allocation2 + $0x178] sm:$0x1] %vm260, %v2247
      %2266 = vst.msk [vmem:[#allocation2 + $0x198] sm:$0x1] %vm260, %v2248
      %2267 = vst.msk [vmem:[#allocation2 + $0x1b8] sm:$0x1] %vm260, %v2249
      %2268 = vst.msk [vmem:[#allocation2 + $0x1d8] sm:$0x1] %vm260, %v2250
      %2269 = vst.msk [vmem:[#allocation2 + $0x1f8] sm:$0x1] %vm260, %v2251
      %2270 = vst.msk [vmem:[#allocation2 + $0x218] sm:$0x1] %vm260, %v2252
      %2271 = vst.msk [vmem:[#allocation2 + $0x238] sm:$0x1] %vm260, %v2253
      %v2272 = vld [vmem:[#allocation2 + $0x7] sm:$0xff]
      %v2273 = vld [vmem:[#allocation2 + $0xf] sm:$0xff]
      %v2274 = vld [vmem:[#allocation2 + $0x27] sm:$0xff]
      %v2275 = vld [vmem:[#allocation2 + $0x2f] sm:$0xff]
      %v2276 = vld [vmem:[#allocation2 + $0x47] sm:$0xff]
      %v2277 = vld [vmem:[#allocation2 + $0x4f] sm:$0xff]
      %v2278 = vld [vmem:[#allocation2 + $0x67] sm:$0xff]
      %v2279 = vld [vmem:[#allocation2 + $0x6f] sm:$0xff]
      %v2280 = vld [vmem:[#allocation2 + $0x87] sm:$0xff]
      %v2281 = vld [vmem:[#allocation2 + $0x8f] sm:$0xff]
      %v2282 = vld [vmem:[#allocation2 + $0xa7] sm:$0xff]
      %v2283 = vld [vmem:[#allocation2 + $0xaf] sm:$0xff]
      %v2284 = vld [vmem:[#allocation2 + $0xc7] sm:$0xff]
      %v2285 = vld [vmem:[#allocation2 + $0xcf] sm:$0xff]
      %v2286 = vld [vmem:[#allocation2 + $0xe7] sm:$0xff]
      %v2287 = vld [vmem:[#allocation2 + $0xef] sm:$0xff]
      %v2288 = vld [vmem:[#allocation2 + $0x107] sm:$0xff]
      %v2289 = vld [vmem:[#allocation2 + $0x10f] sm:$0xff]
      %v2290 = vld [vmem:[#allocation2 + $0x127] sm:$0xff]
      %v2291 = vld [vmem:[#allocation2 + $0x12f] sm:$0xff]
      %v2292 = vld [vmem:[#allocation2 + $0x147] sm:$0xff]
      %v2293 = vld [vmem:[#allocation2 + $0x14f] sm:$0xff]
      %v2294 = vld [vmem:[#allocation2 + $0x167] sm:$0xff]
      %v2295 = vld [vmem:[#allocation2 + $0x16f] sm:$0xff]
      %v2296 = vld [vmem:[#allocation2 + $0x187] sm:$0xff]
      %v2297 = vld [vmem:[#allocation2 + $0x18f] sm:$0xff]
      %v2298 = vld [vmem:[#allocation2 + $0x1a7] sm:$0xff]
      %v2299 = vld [vmem:[#allocation2 + $0x1af] sm:$0xff]
      %v2300 = vld [vmem:[#allocation2 + $0x1c7] sm:$0xff]
      %v2301 = vld [vmem:[#allocation2 + $0x1cf] sm:$0xff]
      %v2302 = vld [vmem:[#allocation2 + $0x1e7] sm:$0xff]
      %v2303 = vld [vmem:[#allocation2 + $0x1ef] sm:$0xff]
      %v2304 = vld [vmem:[#allocation2 + $0x207] sm:$0xff]
      %v2305 = vld [vmem:[#allocation2 + $0x20f] sm:$0xff]
      %v2306 = vld [vmem:[#allocation2 + $0x227] sm:$0xff]
      %v2307 = vld [vmem:[#allocation2 + $0x22f] sm:$0xff]
      %v2308 = vld [vmem:[#allocation2 + $0x8] sm:$0xff]
      %v2309 = vld [vmem:[#allocation2 + $0x10] sm:$0xff]
      %v2310 = vld [vmem:[#allocation2 + $0x28] sm:$0xff]
      %v2311 = vld [vmem:[#allocation2 + $0x30] sm:$0xff]
      %v2312 = vld [vmem:[#allocation2 + $0x48] sm:$0xff]
      %v2313 = vld [vmem:[#allocation2 + $0x50] sm:$0xff]
      %v2314 = vld [vmem:[#allocation2 + $0x68] sm:$0xff]
      %v2315 = vld [vmem:[#allocation2 + $0x70] sm:$0xff]
      %v2316 = vld [vmem:[#allocation2 + $0x88] sm:$0xff]
      %v2317 = vld [vmem:[#allocation2 + $0x90] sm:$0xff]
      %v2318 = vld [vmem:[#allocation2 + $0xa8] sm:$0xff]
      %v2319 = vld [vmem:[#allocation2 + $0xb0] sm:$0xff]
      %v2320 = vld [vmem:[#allocation2 + $0xc8] sm:$0xff]
      %v2321 = vld [vmem:[#allocation2 + $0xd0] sm:$0xff]
      %v2322 = vld [vmem:[#allocation2 + $0xe8] sm:$0xff]
      %v2323 = vld [vmem:[#allocation2 + $0xf0] sm:$0xff]
      %v2324 = vld [vmem:[#allocation2 + $0x108] sm:$0xff]
      %v2325 = vld [vmem:[#allocation2 + $0x110] sm:$0xff]
      %v2326 = vld [vmem:[#allocation2 + $0x128] sm:$0xff]
      %v2327 = vld [vmem:[#allocation2 + $0x130] sm:$0xff]
      %v2328 = vld [vmem:[#allocation2 + $0x148] sm:$0xff]
      %v2329 = vld [vmem:[#allocation2 + $0x150] sm:$0xff]
      %v2330 = vld [vmem:[#allocation2 + $0x168] sm:$0xff]
      %v2331 = vld [vmem:[#allocation2 + $0x170] sm:$0xff]
      %v2332 = vld [vmem:[#allocation2 + $0x188] sm:$0xff]
      %v2333 = vld [vmem:[#allocation2 + $0x190] sm:$0xff]
      %v2334 = vld [vmem:[#allocation2 + $0x1a8] sm:$0xff]
      %v2335 = vld [vmem:[#allocation2 + $0x1b0] sm:$0xff]
      %v2336 = vld [vmem:[#allocation2 + $0x1c8] sm:$0xff]
      %v2337 = vld [vmem:[#allocation2 + $0x1d0] sm:$0xff]
      %v2338 = vld [vmem:[#allocation2 + $0x1e8] sm:$0xff]
      %v2339 = vld [vmem:[#allocation2 + $0x1f0] sm:$0xff]
      %v2340 = vld [vmem:[#allocation2 + $0x208] sm:$0xff]
      %v2341 = vld [vmem:[#allocation2 + $0x210] sm:$0xff]
      %v2342 = vld [vmem:[#allocation2 + $0x228] sm:$0xff]
      %v2343 = vld [vmem:[#allocation2 + $0x230] sm:$0xff]
      %v2344 = vld [vmem:[#allocation2 + $0x9] sm:$0xff]
      %v2345 = vld [vmem:[#allocation2 + $0x11] sm:$0xff]
      %v2346 = vld [vmem:[#allocation2 + $0x29] sm:$0xff]
      %v2347 = vld [vmem:[#allocation2 + $0x31] sm:$0xff]
      %v2348 = vld [vmem:[#allocation2 + $0x49] sm:$0xff]
      %v2349 = vld [vmem:[#allocation2 + $0x51] sm:$0xff]
      %v2350 = vld [vmem:[#allocation2 + $0x69] sm:$0xff]
      %v2351 = vld [vmem:[#allocation2 + $0x71] sm:$0xff]
      %v2352 = vld [vmem:[#allocation2 + $0x89] sm:$0xff]
      %v2353 = vld [vmem:[#allocation2 + $0x91] sm:$0xff]
      %v2354 = vld [vmem:[#allocation2 + $0xa9] sm:$0xff]
      %v2355 = vld [vmem:[#allocation2 + $0xb1] sm:$0xff]
      %v2356 = vld [vmem:[#allocation2 + $0xc9] sm:$0xff]
      %v2357 = vld [vmem:[#allocation2 + $0xd1] sm:$0xff]
      %v2358 = vld [vmem:[#allocation2 + $0xe9] sm:$0xff]
      %v2359 = vld [vmem:[#allocation2 + $0xf1] sm:$0xff]
      %v2360 = vld [vmem:[#allocation2 + $0x109] sm:$0xff]
      %v2361 = vld [vmem:[#allocation2 + $0x111] sm:$0xff]
      %v2362 = vld [vmem:[#allocation2 + $0x129] sm:$0xff]
      %v2363 = vld [vmem:[#allocation2 + $0x131] sm:$0xff]
      %v2364 = vld [vmem:[#allocation2 + $0x149] sm:$0xff]
      %v2365 = vld [vmem:[#allocation2 + $0x151] sm:$0xff]
      %v2366 = vld [vmem:[#allocation2 + $0x169] sm:$0xff]
      %v2367 = vld [vmem:[#allocation2 + $0x171] sm:$0xff]
      %v2368 = vld [vmem:[#allocation2 + $0x189] sm:$0xff]
      %v2369 = vld [vmem:[#allocation2 + $0x191] sm:$0xff]
      %v2370 = vld [vmem:[#allocation2 + $0x1a9] sm:$0xff]
      %v2371 = vld [vmem:[#allocation2 + $0x1b1] sm:$0xff]
      %v2372 = vld [vmem:[#allocation2 + $0x1c9] sm:$0xff]
      %v2373 = vld [vmem:[#allocation2 + $0x1d1] sm:$0xff]
      %v2374 = vld [vmem:[#allocation2 + $0x1e9] sm:$0xff]
      %v2375 = vld [vmem:[#allocation2 + $0x1f1] sm:$0xff]
      %v2376 = vld [vmem:[#allocation2 + $0x209] sm:$0xff]
      %v2377 = vld [vmem:[#allocation2 + $0x211] sm:$0xff]
      %v2378 = vld [vmem:[#allocation2 + $0x229] sm:$0xff]
      %v2379 = vld [vmem:[#allocation2 + $0x231] sm:$0xff]
      %2412 = vrot.lane.b32.xlu0 %v2308, 4
      %v2413 = vpop.permute.xlu0 %2412
      %2414 = vrot.lane.b32.xlu0 %v2309, 4
      %v2415 = vpop.permute.xlu0 %2414
      %2416 = vrot.lane.b32.xlu0 %v2310, 4
      %v2417 = vpop.permute.xlu0 %2416
      %2418 = vrot.lane.b32.xlu0 %v2311, 4
      %v2419 = vpop.permute.xlu0 %2418
      %2420 = vrot.lane.b32.xlu0 %v2312, 4
      %v2421 = vpop.permute.xlu0 %2420
      %2422 = vrot.lane.b32.xlu0 %v2313, 4
      %v2423 = vpop.permute.xlu0 %2422
      %2424 = vrot.lane.b32.xlu0 %v2314, 4
      %v2425 = vpop.permute.xlu0 %2424
      %2426 = vrot.lane.b32.xlu0 %v2315, 4
      %v2427 = vpop.permute.xlu0 %2426
      %2428 = vrot.lane.b32.xlu0 %v2316, 4
      %v2429 = vpop.permute.xlu0 %2428
      %2430 = vrot.lane.b32.xlu0 %v2317, 4
      %v2431 = vpop.permute.xlu0 %2430
      %2432 = vrot.lane.b32.xlu0 %v2318, 4
      %v2433 = vpop.permute.xlu0 %2432
      %2434 = vrot.lane.b32.xlu0 %v2319, 4
      %v2435 = vpop.permute.xlu0 %2434
      %2436 = vrot.lane.b32.xlu0 %v2320, 4
      %v2437 = vpop.permute.xlu0 %2436
      %2438 = vrot.lane.b32.xlu0 %v2321, 4
      %v2439 = vpop.permute.xlu0 %2438
      %2440 = vrot.lane.b32.xlu0 %v2322, 4
      %v2441 = vpop.permute.xlu0 %2440
      %2442 = vrot.lane.b32.xlu0 %v2323, 4
      %v2443 = vpop.permute.xlu0 %2442
      %2444 = vrot.lane.b32.xlu0 %v2324, 4
      %v2445 = vpop.permute.xlu0 %2444
      %2446 = vrot.lane.b32.xlu0 %v2325, 4
      %v2447 = vpop.permute.xlu0 %2446
      %2448 = vrot.lane.b32.xlu0 %v2326, 4
      %v2449 = vpop.permute.xlu0 %2448
      %2450 = vrot.lane.b32.xlu0 %v2327, 4
      %v2451 = vpop.permute.xlu0 %2450
      %2452 = vrot.lane.b32.xlu0 %v2328, 4
      %v2453 = vpop.permute.xlu0 %2452
      %2454 = vrot.lane.b32.xlu0 %v2329, 4
      %v2455 = vpop.permute.xlu0 %2454
      %2456 = vrot.lane.b32.xlu0 %v2330, 4
      %v2457 = vpop.permute.xlu0 %2456
      %2458 = vrot.lane.b32.xlu0 %v2331, 4
      %v2459 = vpop.permute.xlu0 %2458
      %2460 = vrot.lane.b32.xlu0 %v2332, 4
      %v2461 = vpop.permute.xlu0 %2460
      %2462 = vrot.lane.b32.xlu0 %v2333, 4
      %v2463 = vpop.permute.xlu0 %2462
      %2464 = vrot.lane.b32.xlu0 %v2334, 4
      %v2465 = vpop.permute.xlu0 %2464
      %2466 = vrot.lane.b32.xlu0 %v2335, 4
      %v2467 = vpop.permute.xlu0 %2466
      %2468 = vrot.lane.b32.xlu0 %v2336, 4
      %v2469 = vpop.permute.xlu0 %2468
      %2470 = vrot.lane.b32.xlu0 %v2337, 4
      %v2471 = vpop.permute.xlu0 %2470
      %2472 = vrot.lane.b32.xlu0 %v2338, 4
      %v2473 = vpop.permute.xlu0 %2472
      %2474 = vrot.lane.b32.xlu0 %v2339, 4
      %v2475 = vpop.permute.xlu0 %2474
      %2540 = vrot.lane.b32.xlu0 %v2344, 8
      %v2541 = vpop.permute.xlu0 %2540
      %2542 = vrot.lane.b32.xlu0 %v2345, 8
      %v2543 = vpop.permute.xlu0 %2542
      %2544 = vrot.lane.b32.xlu0 %v2346, 8
      %v2545 = vpop.permute.xlu0 %2544
      %2546 = vrot.lane.b32.xlu0 %v2347, 8
      %v2547 = vpop.permute.xlu0 %2546
      %2548 = vrot.lane.b32.xlu0 %v2348, 8
      %v2549 = vpop.permute.xlu0 %2548
      %2550 = vrot.lane.b32.xlu0 %v2349, 8
      %v2551 = vpop.permute.xlu0 %2550
      %2552 = vrot.lane.b32.xlu0 %v2350, 8
      %v2553 = vpop.permute.xlu0 %2552
      %2554 = vrot.lane.b32.xlu0 %v2351, 8
      %v2555 = vpop.permute.xlu0 %2554
      %2556 = vrot.lane.b32.xlu0 %v2352, 8
      %v2557 = vpop.permute.xlu0 %2556
      %2558 = vrot.lane.b32.xlu0 %v2353, 8
      %v2559 = vpop.permute.xlu0 %2558
      %2560 = vrot.lane.b32.xlu0 %v2354, 8
      %v2561 = vpop.permute.xlu0 %2560
      %2562 = vrot.lane.b32.xlu0 %v2355, 8
      %v2563 = vpop.permute.xlu0 %2562
      %2564 = vrot.lane.b32.xlu0 %v2356, 8
      %v2565 = vpop.permute.xlu0 %2564
      %2566 = vrot.lane.b32.xlu0 %v2357, 8
      %v2567 = vpop.permute.xlu0 %2566
      %2568 = vrot.lane.b32.xlu0 %v2358, 8
      %v2569 = vpop.permute.xlu0 %2568
      %2570 = vrot.lane.b32.xlu0 %v2359, 8
      %v2571 = vpop.permute.xlu0 %2570
      %2572 = vrot.lane.b32.xlu0 %v2360, 8
      %v2573 = vpop.permute.xlu0 %2572
      %2574 = vrot.lane.b32.xlu0 %v2361, 8
      %v2575 = vpop.permute.xlu0 %2574
      %2576 = vrot.lane.b32.xlu0 %v2362, 8
      %v2577 = vpop.permute.xlu0 %2576
      %2578 = vrot.lane.b32.xlu0 %v2363, 8
      %v2579 = vpop.permute.xlu0 %2578
      %2580 = vrot.lane.b32.xlu0 %v2364, 8
      %v2581 = vpop.permute.xlu0 %2580
      %2582 = vrot.lane.b32.xlu0 %v2365, 8
      %v2583 = vpop.permute.xlu0 %2582
      %2584 = vrot.lane.b32.xlu0 %v2366, 8
      %v2585 = vpop.permute.xlu0 %2584
      %2586 = vrot.lane.b32.xlu0 %v2367, 8
      %v2587 = vpop.permute.xlu0 %2586
      %2588 = vrot.lane.b32.xlu0 %v2368, 8
      %v2589 = vpop.permute.xlu0 %2588
      %2590 = vrot.lane.b32.xlu0 %v2369, 8
      %v2591 = vpop.permute.xlu0 %2590
      %2592 = vrot.lane.b32.xlu0 %v2370, 8
      %v2593 = vpop.permute.xlu0 %2592
      %2594 = vrot.lane.b32.xlu0 %v2371, 8
      %v2595 = vpop.permute.xlu0 %2594
      %2596 = vrot.lane.b32.xlu0 %v2372, 8
      %v2597 = vpop.permute.xlu0 %2596
      %2598 = vrot.lane.b32.xlu0 %v2373, 8
      %v2599 = vpop.permute.xlu0 %2598
      %2600 = vrot.lane.b32.xlu0 %v2374, 8
      %v2601 = vpop.permute.xlu0 %2600
      %2602 = vrot.lane.b32.xlu0 %v2375, 8
      %v2603 = vpop.permute.xlu0 %2602
      %2668 = vrot.lane.b32.xlu0 %v2274, 12
      %v2669 = vpop.permute.xlu0 %2668
      %2670 = vrot.lane.b32.xlu0 %v2275, 12
      %v2671 = vpop.permute.xlu0 %2670
      %2672 = vrot.lane.b32.xlu0 %v2276, 12
      %v2673 = vpop.permute.xlu0 %2672
      %2674 = vrot.lane.b32.xlu0 %v2277, 12
      %v2675 = vpop.permute.xlu0 %2674
      %2676 = vrot.lane.b32.xlu0 %v2278, 12
      %v2677 = vpop.permute.xlu0 %2676
      %2678 = vrot.lane.b32.xlu0 %v2279, 12
      %v2679 = vpop.permute.xlu0 %2678
      %2680 = vrot.lane.b32.xlu0 %v2280, 12
      %v2681 = vpop.permute.xlu0 %2680
      %2682 = vrot.lane.b32.xlu0 %v2281, 12
      %v2683 = vpop.permute.xlu0 %2682
      %2684 = vrot.lane.b32.xlu0 %v2282, 12
      %v2685 = vpop.permute.xlu0 %2684
      %2686 = vrot.lane.b32.xlu0 %v2283, 12
      %v2687 = vpop.permute.xlu0 %2686
      %2688 = vrot.lane.b32.xlu0 %v2284, 12
      %v2689 = vpop.permute.xlu0 %2688
      %2690 = vrot.lane.b32.xlu0 %v2285, 12
      %v2691 = vpop.permute.xlu0 %2690
      %2692 = vrot.lane.b32.xlu0 %v2286, 12
      %v2693 = vpop.permute.xlu0 %2692
      %2694 = vrot.lane.b32.xlu0 %v2287, 12
      %v2695 = vpop.permute.xlu0 %2694
      %2696 = vrot.lane.b32.xlu0 %v2288, 12
      %v2697 = vpop.permute.xlu0 %2696
      %2698 = vrot.lane.b32.xlu0 %v2289, 12
      %v2699 = vpop.permute.xlu0 %2698
      %2700 = vrot.lane.b32.xlu0 %v2290, 12
      %v2701 = vpop.permute.xlu0 %2700
      %2702 = vrot.lane.b32.xlu0 %v2291, 12
      %v2703 = vpop.permute.xlu0 %2702
      %2704 = vrot.lane.b32.xlu0 %v2292, 12
      %v2705 = vpop.permute.xlu0 %2704
      %2706 = vrot.lane.b32.xlu0 %v2293, 12
      %v2707 = vpop.permute.xlu0 %2706
      %2708 = vrot.lane.b32.xlu0 %v2294, 12
      %v2709 = vpop.permute.xlu0 %2708
      %2710 = vrot.lane.b32.xlu0 %v2295, 12
      %v2711 = vpop.permute.xlu0 %2710
      %2712 = vrot.lane.b32.xlu0 %v2296, 12
      %v2713 = vpop.permute.xlu0 %2712
      %2714 = vrot.lane.b32.xlu0 %v2297, 12
      %v2715 = vpop.permute.xlu0 %2714
      %2716 = vrot.lane.b32.xlu0 %v2298, 12
      %v2717 = vpop.permute.xlu0 %2716
      %2718 = vrot.lane.b32.xlu0 %v2299, 12
      %v2719 = vpop.permute.xlu0 %2718
      %2720 = vrot.lane.b32.xlu0 %v2300, 12
      %v2721 = vpop.permute.xlu0 %2720
      %2722 = vrot.lane.b32.xlu0 %v2301, 12
      %v2723 = vpop.permute.xlu0 %2722
      %2724 = vrot.lane.b32.xlu0 %v2302, 12
      %v2725 = vpop.permute.xlu0 %2724
      %2726 = vrot.lane.b32.xlu0 %v2303, 12
      %v2727 = vpop.permute.xlu0 %2726
      %2728 = vrot.lane.b32.xlu0 %v2304, 12
      %v2729 = vpop.permute.xlu0 %2728
      %2730 = vrot.lane.b32.xlu0 %v2305, 12
      %v2731 = vpop.permute.xlu0 %2730
      %2766 = vrot.lane.b32.xlu0 %v2310, 16
      %v2767 = vpop.permute.xlu0 %2766
      %2768 = vrot.lane.b32.xlu0 %v2311, 16
      %v2769 = vpop.permute.xlu0 %2768
      %2770 = vrot.lane.b32.xlu0 %v2312, 16
      %v2771 = vpop.permute.xlu0 %2770
      %2772 = vrot.lane.b32.xlu0 %v2313, 16
      %v2773 = vpop.permute.xlu0 %2772
      %2774 = vrot.lane.b32.xlu0 %v2314, 16
      %v2775 = vpop.permute.xlu0 %2774
      %2776 = vrot.lane.b32.xlu0 %v2315, 16
      %v2777 = vpop.permute.xlu0 %2776
      %2778 = vrot.lane.b32.xlu0 %v2316, 16
      %v2779 = vpop.permute.xlu0 %2778
      %2780 = vrot.lane.b32.xlu0 %v2317, 16
      %v2781 = vpop.permute.xlu0 %2780
      %2782 = vrot.lane.b32.xlu0 %v2318, 16
      %v2783 = vpop.permute.xlu0 %2782
      %2784 = vrot.lane.b32.xlu0 %v2319, 16
      %v2785 = vpop.permute.xlu0 %2784
      %2786 = vrot.lane.b32.xlu0 %v2320, 16
      %v2787 = vpop.permute.xlu0 %2786
      %2788 = vrot.lane.b32.xlu0 %v2321, 16
      %v2789 = vpop.permute.xlu0 %2788
      %2790 = vrot.lane.b32.xlu0 %v2322, 16
      %v2791 = vpop.permute.xlu0 %2790
      %2792 = vrot.lane.b32.xlu0 %v2323, 16
      %v2793 = vpop.permute.xlu0 %2792
      %2794 = vrot.lane.b32.xlu0 %v2324, 16
      %v2795 = vpop.permute.xlu0 %2794
      %2796 = vrot.lane.b32.xlu0 %v2325, 16
      %v2797 = vpop.permute.xlu0 %2796
      %2798 = vrot.lane.b32.xlu0 %v2326, 16
      %v2799 = vpop.permute.xlu0 %2798
      %2800 = vrot.lane.b32.xlu0 %v2327, 16
      %v2801 = vpop.permute.xlu0 %2800
      %2802 = vrot.lane.b32.xlu0 %v2328, 16
      %v2803 = vpop.permute.xlu0 %2802
      %2804 = vrot.lane.b32.xlu0 %v2329, 16
      %v2805 = vpop.permute.xlu0 %2804
      %2806 = vrot.lane.b32.xlu0 %v2330, 16
      %v2807 = vpop.permute.xlu0 %2806
      %2808 = vrot.lane.b32.xlu0 %v2331, 16
      %v2809 = vpop.permute.xlu0 %2808
      %2810 = vrot.lane.b32.xlu0 %v2332, 16
      %v2811 = vpop.permute.xlu0 %2810
      %2812 = vrot.lane.b32.xlu0 %v2333, 16
      %v2813 = vpop.permute.xlu0 %2812
      %2814 = vrot.lane.b32.xlu0 %v2334, 16
      %v2815 = vpop.permute.xlu0 %2814
      %2816 = vrot.lane.b32.xlu0 %v2335, 16
      %v2817 = vpop.permute.xlu0 %2816
      %2818 = vrot.lane.b32.xlu0 %v2336, 16
      %v2819 = vpop.permute.xlu0 %2818
      %2820 = vrot.lane.b32.xlu0 %v2337, 16
      %v2821 = vpop.permute.xlu0 %2820
      %2822 = vrot.lane.b32.xlu0 %v2338, 16
      %v2823 = vpop.permute.xlu0 %2822
      %2824 = vrot.lane.b32.xlu0 %v2339, 16
      %v2825 = vpop.permute.xlu0 %2824
      %2826 = vrot.lane.b32.xlu0 %v2340, 16
      %v2827 = vpop.permute.xlu0 %2826
      %2828 = vrot.lane.b32.xlu0 %v2341, 16
      %v2829 = vpop.permute.xlu0 %2828
      %2864 = vrot.lane.b32.xlu0 %v2346, 20
      %v2865 = vpop.permute.xlu0 %2864
      %2866 = vrot.lane.b32.xlu0 %v2347, 20
      %v2867 = vpop.permute.xlu0 %2866
      %2868 = vrot.lane.b32.xlu0 %v2348, 20
      %v2869 = vpop.permute.xlu0 %2868
      %2870 = vrot.lane.b32.xlu0 %v2349, 20
      %v2871 = vpop.permute.xlu0 %2870
      %2872 = vrot.lane.b32.xlu0 %v2350, 20
      %v2873 = vpop.permute.xlu0 %2872
      %2874 = vrot.lane.b32.xlu0 %v2351, 20
      %v2875 = vpop.permute.xlu0 %2874
      %2876 = vrot.lane.b32.xlu0 %v2352, 20
      %v2877 = vpop.permute.xlu0 %2876
      %2878 = vrot.lane.b32.xlu0 %v2353, 20
      %v2879 = vpop.permute.xlu0 %2878
      %2880 = vrot.lane.b32.xlu0 %v2354, 20
      %v2881 = vpop.permute.xlu0 %2880
      %2882 = vrot.lane.b32.xlu0 %v2355, 20
      %v2883 = vpop.permute.xlu0 %2882
      %2884 = vrot.lane.b32.xlu0 %v2356, 20
      %v2885 = vpop.permute.xlu0 %2884
      %2886 = vrot.lane.b32.xlu0 %v2357, 20
      %v2887 = vpop.permute.xlu0 %2886
      %2888 = vrot.lane.b32.xlu0 %v2358, 20
      %v2889 = vpop.permute.xlu0 %2888
      %2890 = vrot.lane.b32.xlu0 %v2359, 20
      %v2891 = vpop.permute.xlu0 %2890
      %2892 = vrot.lane.b32.xlu0 %v2360, 20
      %v2893 = vpop.permute.xlu0 %2892
      %2894 = vrot.lane.b32.xlu0 %v2361, 20
      %v2895 = vpop.permute.xlu0 %2894
      %2896 = vrot.lane.b32.xlu0 %v2362, 20
      %v2897 = vpop.permute.xlu0 %2896
      %2898 = vrot.lane.b32.xlu0 %v2363, 20
      %v2899 = vpop.permute.xlu0 %2898
      %2900 = vrot.lane.b32.xlu0 %v2364, 20
      %v2901 = vpop.permute.xlu0 %2900
      %2902 = vrot.lane.b32.xlu0 %v2365, 20
      %v2903 = vpop.permute.xlu0 %2902
      %2904 = vrot.lane.b32.xlu0 %v2366, 20
      %v2905 = vpop.permute.xlu0 %2904
      %2906 = vrot.lane.b32.xlu0 %v2367, 20
      %v2907 = vpop.permute.xlu0 %2906
      %2908 = vrot.lane.b32.xlu0 %v2368, 20
      %v2909 = vpop.permute.xlu0 %2908
      %2910 = vrot.lane.b32.xlu0 %v2369, 20
      %v2911 = vpop.permute.xlu0 %2910
      %2912 = vrot.lane.b32.xlu0 %v2370, 20
      %v2913 = vpop.permute.xlu0 %2912
      %2914 = vrot.lane.b32.xlu0 %v2371, 20
      %v2915 = vpop.permute.xlu0 %2914
      %2916 = vrot.lane.b32.xlu0 %v2372, 20
      %v2917 = vpop.permute.xlu0 %2916
      %2918 = vrot.lane.b32.xlu0 %v2373, 20
      %v2919 = vpop.permute.xlu0 %2918
      %2920 = vrot.lane.b32.xlu0 %v2374, 20
      %v2921 = vpop.permute.xlu0 %2920
      %2922 = vrot.lane.b32.xlu0 %v2375, 20
      %v2923 = vpop.permute.xlu0 %2922
      %2924 = vrot.lane.b32.xlu0 %v2376, 20
      %v2925 = vpop.permute.xlu0 %2924
      %2926 = vrot.lane.b32.xlu0 %v2377, 20
      %v2927 = vpop.permute.xlu0 %2926
      %2962 = vrot.lane.b32.xlu0 %v2276, 24
      %v2963 = vpop.permute.xlu0 %2962
      %2964 = vrot.lane.b32.xlu0 %v2277, 24
      %v2965 = vpop.permute.xlu0 %2964
      %2966 = vrot.lane.b32.xlu0 %v2278, 24
      %v2967 = vpop.permute.xlu0 %2966
      %2968 = vrot.lane.b32.xlu0 %v2279, 24
      %v2969 = vpop.permute.xlu0 %2968
      %2970 = vrot.lane.b32.xlu0 %v2280, 24
      %v2971 = vpop.permute.xlu0 %2970
      %2972 = vrot.lane.b32.xlu0 %v2281, 24
      %v2973 = vpop.permute.xlu0 %2972
      %2974 = vrot.lane.b32.xlu0 %v2282, 24
      %v2975 = vpop.permute.xlu0 %2974
      %2976 = vrot.lane.b32.xlu0 %v2283, 24
      %v2977 = vpop.permute.xlu0 %2976
      %2978 = vrot.lane.b32.xlu0 %v2284, 24
      %v2979 = vpop.permute.xlu0 %2978
      %2980 = vrot.lane.b32.xlu0 %v2285, 24
      %v2981 = vpop.permute.xlu0 %2980
      %2982 = vrot.lane.b32.xlu0 %v2286, 24
      %v2983 = vpop.permute.xlu0 %2982
      %2984 = vrot.lane.b32.xlu0 %v2287, 24
      %v2985 = vpop.permute.xlu0 %2984
      %2986 = vrot.lane.b32.xlu0 %v2288, 24
      %v2987 = vpop.permute.xlu0 %2986
      %2988 = vrot.lane.b32.xlu0 %v2289, 24
      %v2989 = vpop.permute.xlu0 %2988
      %2990 = vrot.lane.b32.xlu0 %v2290, 24
      %v2991 = vpop.permute.xlu0 %2990
      %2992 = vrot.lane.b32.xlu0 %v2291, 24
      %v2993 = vpop.permute.xlu0 %2992
      %2994 = vrot.lane.b32.xlu0 %v2292, 24
      %v2995 = vpop.permute.xlu0 %2994
      %2996 = vrot.lane.b32.xlu0 %v2293, 24
      %v2997 = vpop.permute.xlu0 %2996
      %2998 = vrot.lane.b32.xlu0 %v2294, 24
      %v2999 = vpop.permute.xlu0 %2998
      %3000 = vrot.lane.b32.xlu0 %v2295, 24
      %v3001 = vpop.permute.xlu0 %3000
      %3002 = vrot.lane.b32.xlu0 %v2296, 24
      %v3003 = vpop.permute.xlu0 %3002
      %3004 = vrot.lane.b32.xlu0 %v2297, 24
      %v3005 = vpop.permute.xlu0 %3004
      %3006 = vrot.lane.b32.xlu0 %v2298, 24
      %v3007 = vpop.permute.xlu0 %3006
      %3008 = vrot.lane.b32.xlu0 %v2299, 24
      %v3009 = vpop.permute.xlu0 %3008
      %3010 = vrot.lane.b32.xlu0 %v2300, 24
      %v3011 = vpop.permute.xlu0 %3010
      %3012 = vrot.lane.b32.xlu0 %v2301, 24
      %v3013 = vpop.permute.xlu0 %3012
      %3014 = vrot.lane.b32.xlu0 %v2302, 24
      %v3015 = vpop.permute.xlu0 %3014
      %3016 = vrot.lane.b32.xlu0 %v2303, 24
      %v3017 = vpop.permute.xlu0 %3016
      %3018 = vrot.lane.b32.xlu0 %v2304, 24
      %v3019 = vpop.permute.xlu0 %3018
      %3020 = vrot.lane.b32.xlu0 %v2305, 24
      %v3021 = vpop.permute.xlu0 %3020
      %3022 = vrot.lane.b32.xlu0 %v2306, 24
      %v3023 = vpop.permute.xlu0 %3022
      %3024 = vrot.lane.b32.xlu0 %v2307, 24
      %v3025 = vpop.permute.xlu0 %3024
      %3060 = vrot.lane.b32.xlu0 %v2312, 28
      %v3061 = vpop.permute.xlu0 %3060
      %3062 = vrot.lane.b32.xlu0 %v2313, 28
      %v3063 = vpop.permute.xlu0 %3062
      %3064 = vrot.lane.b32.xlu0 %v2314, 28
      %v3065 = vpop.permute.xlu0 %3064
      %3066 = vrot.lane.b32.xlu0 %v2315, 28
      %v3067 = vpop.permute.xlu0 %3066
      %3068 = vrot.lane.b32.xlu0 %v2316, 28
      %v3069 = vpop.permute.xlu0 %3068
      %3070 = vrot.lane.b32.xlu0 %v2317, 28
      %v3071 = vpop.permute.xlu0 %3070
      %3072 = vrot.lane.b32.xlu0 %v2318, 28
      %v3073 = vpop.permute.xlu0 %3072
      %3074 = vrot.lane.b32.xlu0 %v2319, 28
      %v3075 = vpop.permute.xlu0 %3074
      %3076 = vrot.lane.b32.xlu0 %v2320, 28
      %v3077 = vpop.permute.xlu0 %3076
      %3078 = vrot.lane.b32.xlu0 %v2321, 28
      %v3079 = vpop.permute.xlu0 %3078
      %3080 = vrot.lane.b32.xlu0 %v2322, 28
      %v3081 = vpop.permute.xlu0 %3080
      %3082 = vrot.lane.b32.xlu0 %v2323, 28
      %v3083 = vpop.permute.xlu0 %3082
      %3084 = vrot.lane.b32.xlu0 %v2324, 28
      %v3085 = vpop.permute.xlu0 %3084
      %3086 = vrot.lane.b32.xlu0 %v2325, 28
      %v3087 = vpop.permute.xlu0 %3086
      %3088 = vrot.lane.b32.xlu0 %v2326, 28
      %v3089 = vpop.permute.xlu0 %3088
      %3090 = vrot.lane.b32.xlu0 %v2327, 28
      %v3091 = vpop.permute.xlu0 %3090
      %3092 = vrot.lane.b32.xlu0 %v2328, 28
      %v3093 = vpop.permute.xlu0 %3092
      %3094 = vrot.lane.b32.xlu0 %v2329, 28
      %v3095 = vpop.permute.xlu0 %3094
      %3096 = vrot.lane.b32.xlu0 %v2330, 28
      %v3097 = vpop.permute.xlu0 %3096
      %3098 = vrot.lane.b32.xlu0 %v2331, 28
      %v3099 = vpop.permute.xlu0 %3098
      %3100 = vrot.lane.b32.xlu0 %v2332, 28
      %v3101 = vpop.permute.xlu0 %3100
      %3102 = vrot.lane.b32.xlu0 %v2333, 28
      %v3103 = vpop.permute.xlu0 %3102
      %3104 = vrot.lane.b32.xlu0 %v2334, 28
      %v3105 = vpop.permute.xlu0 %3104
      %3106 = vrot.lane.b32.xlu0 %v2335, 28
      %v3107 = vpop.permute.xlu0 %3106
      %3108 = vrot.lane.b32.xlu0 %v2336, 28
      %v3109 = vpop.permute.xlu0 %3108
      %3110 = vrot.lane.b32.xlu0 %v2337, 28
      %v3111 = vpop.permute.xlu0 %3110
      %3112 = vrot.lane.b32.xlu0 %v2338, 28
      %v3113 = vpop.permute.xlu0 %3112
      %3114 = vrot.lane.b32.xlu0 %v2339, 28
      %v3115 = vpop.permute.xlu0 %3114
      %3116 = vrot.lane.b32.xlu0 %v2340, 28
      %v3117 = vpop.permute.xlu0 %3116
      %3118 = vrot.lane.b32.xlu0 %v2341, 28
      %v3119 = vpop.permute.xlu0 %3118
      %3120 = vrot.lane.b32.xlu0 %v2342, 28
      %v3121 = vpop.permute.xlu0 %3120
      %3122 = vrot.lane.b32.xlu0 %v2343, 28
      %v3123 = vpop.permute.xlu0 %3122
      %3158 = vrot.lane.b32.xlu0 %v2348, 32
      %v3159 = vpop.permute.xlu0 %3158
      %3160 = vrot.lane.b32.xlu0 %v2349, 32
      %v3161 = vpop.permute.xlu0 %3160
      %3162 = vrot.lane.b32.xlu0 %v2350, 32
      %v3163 = vpop.permute.xlu0 %3162
      %3164 = vrot.lane.b32.xlu0 %v2351, 32
      %v3165 = vpop.permute.xlu0 %3164
      %3166 = vrot.lane.b32.xlu0 %v2352, 32
      %v3167 = vpop.permute.xlu0 %3166
      %3168 = vrot.lane.b32.xlu0 %v2353, 32
      %v3169 = vpop.permute.xlu0 %3168
      %3170 = vrot.lane.b32.xlu0 %v2354, 32
      %v3171 = vpop.permute.xlu0 %3170
      %3172 = vrot.lane.b32.xlu0 %v2355, 32
      %v3173 = vpop.permute.xlu0 %3172
      %3174 = vrot.lane.b32.xlu0 %v2356, 32
      %v3175 = vpop.permute.xlu0 %3174
      %3176 = vrot.lane.b32.xlu0 %v2357, 32
      %v3177 = vpop.permute.xlu0 %3176
      %3178 = vrot.lane.b32.xlu0 %v2358, 32
      %v3179 = vpop.permute.xlu0 %3178
      %3180 = vrot.lane.b32.xlu0 %v2359, 32
      %v3181 = vpop.permute.xlu0 %3180
      %3182 = vrot.lane.b32.xlu0 %v2360, 32
      %v3183 = vpop.permute.xlu0 %3182
      %3184 = vrot.lane.b32.xlu0 %v2361, 32
      %v3185 = vpop.permute.xlu0 %3184
      %3186 = vrot.lane.b32.xlu0 %v2362, 32
      %v3187 = vpop.permute.xlu0 %3186
      %3188 = vrot.lane.b32.xlu0 %v2363, 32
      %v3189 = vpop.permute.xlu0 %3188
      %3190 = vrot.lane.b32.xlu0 %v2364, 32
      %v3191 = vpop.permute.xlu0 %3190
      %3192 = vrot.lane.b32.xlu0 %v2365, 32
      %v3193 = vpop.permute.xlu0 %3192
      %3194 = vrot.lane.b32.xlu0 %v2366, 32
      %v3195 = vpop.permute.xlu0 %3194
      %3196 = vrot.lane.b32.xlu0 %v2367, 32
      %v3197 = vpop.permute.xlu0 %3196
      %3198 = vrot.lane.b32.xlu0 %v2368, 32
      %v3199 = vpop.permute.xlu0 %3198
      %3200 = vrot.lane.b32.xlu0 %v2369, 32
      %v3201 = vpop.permute.xlu0 %3200
      %3202 = vrot.lane.b32.xlu0 %v2370, 32
      %v3203 = vpop.permute.xlu0 %3202
      %3204 = vrot.lane.b32.xlu0 %v2371, 32
      %v3205 = vpop.permute.xlu0 %3204
      %3206 = vrot.lane.b32.xlu0 %v2372, 32
      %v3207 = vpop.permute.xlu0 %3206
      %3208 = vrot.lane.b32.xlu0 %v2373, 32
      %v3209 = vpop.permute.xlu0 %3208
      %3210 = vrot.lane.b32.xlu0 %v2374, 32
      %v3211 = vpop.permute.xlu0 %3210
      %3212 = vrot.lane.b32.xlu0 %v2375, 32
      %v3213 = vpop.permute.xlu0 %3212
      %3214 = vrot.lane.b32.xlu0 %v2376, 32
      %v3215 = vpop.permute.xlu0 %3214
      %3216 = vrot.lane.b32.xlu0 %v2377, 32
      %v3217 = vpop.permute.xlu0 %3216
      %3218 = vrot.lane.b32.xlu0 %v2378, 32
      %v3219 = vpop.permute.xlu0 %3218
      %3220 = vrot.lane.b32.xlu0 %v2379, 32
      %v3221 = vpop.permute.xlu0 %3220
      %v3254 = vsel %vm204, %v2272, %v2413
      %v3255 = vsel %vm204, %v2273, %v2415
      %v3256 = vsel %vm204, %v2274, %v2417
      %v3257 = vsel %vm204, %v2275, %v2419
      %v3258 = vsel %vm204, %v2276, %v2421
      %v3259 = vsel %vm204, %v2277, %v2423
      %v3260 = vsel %vm204, %v2278, %v2425
      %v3261 = vsel %vm204, %v2279, %v2427
      %v3262 = vsel %vm204, %v2280, %v2429
      %v3263 = vsel %vm204, %v2281, %v2431
      %v3264 = vsel %vm204, %v2282, %v2433
      %v3265 = vsel %vm204, %v2283, %v2435
      %v3266 = vsel %vm204, %v2284, %v2437
      %v3267 = vsel %vm204, %v2285, %v2439
      %v3268 = vsel %vm204, %v2286, %v2441
      %v3269 = vsel %vm204, %v2287, %v2443
      %v3270 = vsel %vm204, %v2288, %v2445
      %v3271 = vsel %vm204, %v2289, %v2447
      %v3272 = vsel %vm204, %v2290, %v2449
      %v3273 = vsel %vm204, %v2291, %v2451
      %v3274 = vsel %vm204, %v2292, %v2453
      %v3275 = vsel %vm204, %v2293, %v2455
      %v3276 = vsel %vm204, %v2294, %v2457
      %v3277 = vsel %vm204, %v2295, %v2459
      %v3278 = vsel %vm204, %v2296, %v2461
      %v3279 = vsel %vm204, %v2297, %v2463
      %v3280 = vsel %vm204, %v2298, %v2465
      %v3281 = vsel %vm204, %v2299, %v2467
      %v3282 = vsel %vm204, %v2300, %v2469
      %v3283 = vsel %vm204, %v2301, %v2471
      %v3284 = vsel %vm204, %v2302, %v2473
      %v3285 = vsel %vm204, %v2303, %v2475
      %v3286 = vsel %vm1329, %v3254, %v2541
      %v3287 = vsel %vm1329, %v3255, %v2543
      %v3288 = vsel %vm1329, %v3256, %v2545
      %v3289 = vsel %vm1329, %v3257, %v2547
      %v3290 = vsel %vm1329, %v3258, %v2549
      %v3291 = vsel %vm1329, %v3259, %v2551
      %v3292 = vsel %vm1329, %v3260, %v2553
      %v3293 = vsel %vm1329, %v3261, %v2555
      %v3294 = vsel %vm1329, %v3262, %v2557
      %v3295 = vsel %vm1329, %v3263, %v2559
      %v3296 = vsel %vm1329, %v3264, %v2561
      %v3297 = vsel %vm1329, %v3265, %v2563
      %v3298 = vsel %vm1329, %v3266, %v2565
      %v3299 = vsel %vm1329, %v3267, %v2567
      %v3300 = vsel %vm1329, %v3268, %v2569
      %v3301 = vsel %vm1329, %v3269, %v2571
      %v3302 = vsel %vm1329, %v3270, %v2573
      %v3303 = vsel %vm1329, %v3271, %v2575
      %v3304 = vsel %vm1329, %v3272, %v2577
      %v3305 = vsel %vm1329, %v3273, %v2579
      %v3306 = vsel %vm1329, %v3274, %v2581
      %v3307 = vsel %vm1329, %v3275, %v2583
      %v3308 = vsel %vm1329, %v3276, %v2585
      %v3309 = vsel %vm1329, %v3277, %v2587
      %v3310 = vsel %vm1329, %v3278, %v2589
      %v3311 = vsel %vm1329, %v3279, %v2591
      %v3312 = vsel %vm1329, %v3280, %v2593
      %v3313 = vsel %vm1329, %v3281, %v2595
      %v3314 = vsel %vm1329, %v3282, %v2597
      %v3315 = vsel %vm1329, %v3283, %v2599
      %v3316 = vsel %vm1329, %v3284, %v2601
      %v3317 = vsel %vm1329, %v3285, %v2603
      %v3318 = vsel %vm1362, %v3286, %v2669
      %v3319 = vsel %vm1362, %v3287, %v2671
      %v3320 = vsel %vm1362, %v3288, %v2673
      %v3321 = vsel %vm1362, %v3289, %v2675
      %v3322 = vsel %vm1362, %v3290, %v2677
      %v3323 = vsel %vm1362, %v3291, %v2679
      %v3324 = vsel %vm1362, %v3292, %v2681
      %v3325 = vsel %vm1362, %v3293, %v2683
      %v3326 = vsel %vm1362, %v3294, %v2685
      %v3327 = vsel %vm1362, %v3295, %v2687
      %v3328 = vsel %vm1362, %v3296, %v2689
      %v3329 = vsel %vm1362, %v3297, %v2691
      %v3330 = vsel %vm1362, %v3298, %v2693
      %v3331 = vsel %vm1362, %v3299, %v2695
      %v3332 = vsel %vm1362, %v3300, %v2697
      %v3333 = vsel %vm1362, %v3301, %v2699
      %v3334 = vsel %vm1362, %v3302, %v2701
      %v3335 = vsel %vm1362, %v3303, %v2703
      %v3336 = vsel %vm1362, %v3304, %v2705
      %v3337 = vsel %vm1362, %v3305, %v2707
      %v3338 = vsel %vm1362, %v3306, %v2709
      %v3339 = vsel %vm1362, %v3307, %v2711
      %v3340 = vsel %vm1362, %v3308, %v2713
      %v3341 = vsel %vm1362, %v3309, %v2715
      %v3342 = vsel %vm1362, %v3310, %v2717
      %v3343 = vsel %vm1362, %v3311, %v2719
      %v3344 = vsel %vm1362, %v3312, %v2721
      %v3345 = vsel %vm1362, %v3313, %v2723
      %v3346 = vsel %vm1362, %v3314, %v2725
      %v3347 = vsel %vm1362, %v3315, %v2727
      %v3348 = vsel %vm1362, %v3316, %v2729
      %v3349 = vsel %vm1362, %v3317, %v2731
      %v3350 = vsel %vm1395, %v3318, %v2767
      %v3351 = vsel %vm1395, %v3319, %v2769
      %v3352 = vsel %vm1395, %v3320, %v2771
      %v3353 = vsel %vm1395, %v3321, %v2773
      %v3354 = vsel %vm1395, %v3322, %v2775
      %v3355 = vsel %vm1395, %v3323, %v2777
      %v3356 = vsel %vm1395, %v3324, %v2779
      %v3357 = vsel %vm1395, %v3325, %v2781
      %v3358 = vsel %vm1395, %v3326, %v2783
      %v3359 = vsel %vm1395, %v3327, %v2785
      %v3360 = vsel %vm1395, %v3328, %v2787
      %v3361 = vsel %vm1395, %v3329, %v2789
      %v3362 = vsel %vm1395, %v3330, %v2791
      %v3363 = vsel %vm1395, %v3331, %v2793
      %v3364 = vsel %vm1395, %v3332, %v2795
      %v3365 = vsel %vm1395, %v3333, %v2797
      %v3366 = vsel %vm1395, %v3334, %v2799
      %v3367 = vsel %vm1395, %v3335, %v2801
      %v3368 = vsel %vm1395, %v3336, %v2803
      %v3369 = vsel %vm1395, %v3337, %v2805
      %v3370 = vsel %vm1395, %v3338, %v2807
      %v3371 = vsel %vm1395, %v3339, %v2809
      %v3372 = vsel %vm1395, %v3340, %v2811
      %v3373 = vsel %vm1395, %v3341, %v2813
      %v3374 = vsel %vm1395, %v3342, %v2815
      %v3375 = vsel %vm1395, %v3343, %v2817
      %v3376 = vsel %vm1395, %v3344, %v2819
      %v3377 = vsel %vm1395, %v3345, %v2821
      %v3378 = vsel %vm1395, %v3346, %v2823
      %v3379 = vsel %vm1395, %v3347, %v2825
      %v3380 = vsel %vm1395, %v3348, %v2827
      %v3381 = vsel %vm1395, %v3349, %v2829
      %v3382 = vsel %vm1428, %v3350, %v2865
      %v3383 = vsel %vm1428, %v3351, %v2867
      %v3384 = vsel %vm1428, %v3352, %v2869
      %v3385 = vsel %vm1428, %v3353, %v2871
      %v3386 = vsel %vm1428, %v3354, %v2873
      %v3387 = vsel %vm1428, %v3355, %v2875
      %v3388 = vsel %vm1428, %v3356, %v2877
      %v3389 = vsel %vm1428, %v3357, %v2879
      %v3390 = vsel %vm1428, %v3358, %v2881
      %v3391 = vsel %vm1428, %v3359, %v2883
      %v3392 = vsel %vm1428, %v3360, %v2885
      %v3393 = vsel %vm1428, %v3361, %v2887
      %v3394 = vsel %vm1428, %v3362, %v2889
      %v3395 = vsel %vm1428, %v3363, %v2891
      %v3396 = vsel %vm1428, %v3364, %v2893
      %v3397 = vsel %vm1428, %v3365, %v2895
      %v3398 = vsel %vm1428, %v3366, %v2897
      %v3399 = vsel %vm1428, %v3367, %v2899
      %v3400 = vsel %vm1428, %v3368, %v2901
      %v3401 = vsel %vm1428, %v3369, %v2903
      %v3402 = vsel %vm1428, %v3370, %v2905
      %v3403 = vsel %vm1428, %v3371, %v2907
      %v3404 = vsel %vm1428, %v3372, %v2909
      %v3405 = vsel %vm1428, %v3373, %v2911
      %v3406 = vsel %vm1428, %v3374, %v2913
      %v3407 = vsel %vm1428, %v3375, %v2915
      %v3408 = vsel %vm1428, %v3376, %v2917
      %v3409 = vsel %vm1428, %v3377, %v2919
      %v3410 = vsel %vm1428, %v3378, %v2921
      %v3411 = vsel %vm1428, %v3379, %v2923
      %v3412 = vsel %vm1428, %v3380, %v2925
      %v3413 = vsel %vm1428, %v3381, %v2927
      %v3414 = vsel %vm1461, %v3382, %v2963
      %v3415 = vsel %vm1461, %v3383, %v2965
      %v3416 = vsel %vm1461, %v3384, %v2967
      %v3417 = vsel %vm1461, %v3385, %v2969
      %v3418 = vsel %vm1461, %v3386, %v2971
      %v3419 = vsel %vm1461, %v3387, %v2973
      %v3420 = vsel %vm1461, %v3388, %v2975
      %v3421 = vsel %vm1461, %v3389, %v2977
      %v3422 = vsel %vm1461, %v3390, %v2979
      %v3423 = vsel %vm1461, %v3391, %v2981
      %v3424 = vsel %vm1461, %v3392, %v2983
      %v3425 = vsel %vm1461, %v3393, %v2985
      %v3426 = vsel %vm1461, %v3394, %v2987
      %v3427 = vsel %vm1461, %v3395, %v2989
      %v3428 = vsel %vm1461, %v3396, %v2991
      %v3429 = vsel %vm1461, %v3397, %v2993
      %v3430 = vsel %vm1461, %v3398, %v2995
      %v3431 = vsel %vm1461, %v3399, %v2997
      %v3432 = vsel %vm1461, %v3400, %v2999
      %v3433 = vsel %vm1461, %v3401, %v3001
      %v3434 = vsel %vm1461, %v3402, %v3003
      %v3435 = vsel %vm1461, %v3403, %v3005
      %v3436 = vsel %vm1461, %v3404, %v3007
      %v3437 = vsel %vm1461, %v3405, %v3009
      %v3438 = vsel %vm1461, %v3406, %v3011
      %v3439 = vsel %vm1461, %v3407, %v3013
      %v3440 = vsel %vm1461, %v3408, %v3015
      %v3441 = vsel %vm1461, %v3409, %v3017
      %v3442 = vsel %vm1461, %v3410, %v3019
      %v3443 = vsel %vm1461, %v3411, %v3021
      %v3444 = vsel %vm1461, %v3412, %v3023
      %v3445 = vsel %vm1461, %v3413, %v3025
      %v3446 = vsel %vm1494, %v3414, %v3061
      %v3447 = vsel %vm1494, %v3415, %v3063
      %v3448 = vsel %vm1494, %v3416, %v3065
      %v3449 = vsel %vm1494, %v3417, %v3067
      %v3450 = vsel %vm1494, %v3418, %v3069
      %v3451 = vsel %vm1494, %v3419, %v3071
      %v3452 = vsel %vm1494, %v3420, %v3073
      %v3453 = vsel %vm1494, %v3421, %v3075
      %v3454 = vsel %vm1494, %v3422, %v3077
      %v3455 = vsel %vm1494, %v3423, %v3079
      %v3456 = vsel %vm1494, %v3424, %v3081
      %v3457 = vsel %vm1494, %v3425, %v3083
      %v3458 = vsel %vm1494, %v3426, %v3085
      %v3459 = vsel %vm1494, %v3427, %v3087
      %v3460 = vsel %vm1494, %v3428, %v3089
      %v3461 = vsel %vm1494, %v3429, %v3091
      %v3462 = vsel %vm1494, %v3430, %v3093
      %v3463 = vsel %vm1494, %v3431, %v3095
      %v3464 = vsel %vm1494, %v3432, %v3097
      %v3465 = vsel %vm1494, %v3433, %v3099
      %v3466 = vsel %vm1494, %v3434, %v3101
      %v3467 = vsel %vm1494, %v3435, %v3103
      %v3468 = vsel %vm1494, %v3436, %v3105
      %v3469 = vsel %vm1494, %v3437, %v3107
      %v3470 = vsel %vm1494, %v3438, %v3109
      %v3471 = vsel %vm1494, %v3439, %v3111
      %v3472 = vsel %vm1494, %v3440, %v3113
      %v3473 = vsel %vm1494, %v3441, %v3115
      %v3474 = vsel %vm1494, %v3442, %v3117
      %v3475 = vsel %vm1494, %v3443, %v3119
      %v3476 = vsel %vm1494, %v3444, %v3121
      %v3477 = vsel %vm1494, %v3445, %v3123
      %v3478 = vsel %vm1527, %v3446, %v3159
      %v3479 = vsel %vm1527, %v3447, %v3161
      %v3480 = vsel %vm1527, %v3448, %v3163
      %v3481 = vsel %vm1527, %v3449, %v3165
      %v3482 = vsel %vm1527, %v3450, %v3167
      %v3483 = vsel %vm1527, %v3451, %v3169
      %v3484 = vsel %vm1527, %v3452, %v3171
      %v3485 = vsel %vm1527, %v3453, %v3173
      %v3486 = vsel %vm1527, %v3454, %v3175
      %v3487 = vsel %vm1527, %v3455, %v3177
      %v3488 = vsel %vm1527, %v3456, %v3179
      %v3489 = vsel %vm1527, %v3457, %v3181
      %v3490 = vsel %vm1527, %v3458, %v3183
      %v3491 = vsel %vm1527, %v3459, %v3185
      %v3492 = vsel %vm1527, %v3460, %v3187
      %v3493 = vsel %vm1527, %v3461, %v3189
      %v3494 = vsel %vm1527, %v3462, %v3191
      %v3495 = vsel %vm1527, %v3463, %v3193
      %v3496 = vsel %vm1527, %v3464, %v3195
      %v3497 = vsel %vm1527, %v3465, %v3197
      %v3498 = vsel %vm1527, %v3466, %v3199
      %v3499 = vsel %vm1527, %v3467, %v3201
      %v3500 = vsel %vm1527, %v3468, %v3203
      %v3501 = vsel %vm1527, %v3469, %v3205
      %v3502 = vsel %vm1527, %v3470, %v3207
      %v3503 = vsel %vm1527, %v3471, %v3209
      %v3504 = vsel %vm1527, %v3472, %v3211
      %v3505 = vsel %vm1527, %v3473, %v3213
      %v3506 = vsel %vm1527, %v3474, %v3215
      %v3507 = vsel %vm1527, %v3475, %v3217
      %v3508 = vsel %vm1527, %v3476, %v3219
      %v3509 = vsel %vm1527, %v3477, %v3221
      %v3510 = vld [vmem:[%s2] sm:$0xff]
      %v3511 = vld [vmem:[%s2 + $0x8] sm:$0xff]
      %v3512 = vld [vmem:[%s2 + $0x10] sm:$0xff]
      %v3513 = vld [vmem:[%s2 + $0x18] sm:$0xff]
      %v3514 = vld [vmem:[%s2 + $0x20] sm:$0xf]
      %v3516 = vsel %vm1565, %v3478, 0
      %v3519 = vsel %vm1565, %v3479, 0
      %v3522 = vsel %vm1565, %v3480, 0
      %v3525 = vsel %vm1565, %v3481, 0
      %v3528 = vsel %vm1565, %v3482, 0
      %v3531 = vsel %vm1565, %v3483, 0
      %v3534 = vsel %vm1565, %v3484, 0
      %v3537 = vsel %vm1565, %v3485, 0
      %v3540 = vsel %vm1565, %v3486, 0
      %v3543 = vsel %vm1565, %v3487, 0
      %v3546 = vsel %vm1565, %v3488, 0
      %v3549 = vsel %vm1565, %v3489, 0
      %v3552 = vsel %vm1565, %v3490, 0
      %v3555 = vsel %vm1565, %v3491, 0
      %v3558 = vsel %vm1565, %v3492, 0
      %v3561 = vsel %vm1565, %v3493, 0
      %v3564 = vsel %vm1565, %v3494, 0
      %v3567 = vsel %vm1565, %v3495, 0
      %v3570 = vsel %vm1565, %v3496, 0
      %v3573 = vsel %vm1565, %v3497, 0
      %v3576 = vsel %vm1565, %v3498, 0
      %v3579 = vsel %vm1565, %v3499, 0
      %v3582 = vsel %vm1565, %v3500, 0
      %v3585 = vsel %vm1565, %v3501, 0
      %v3588 = vsel %vm1565, %v3502, 0
      %v3591 = vsel %vm1565, %v3503, 0
      %v3594 = vsel %vm1565, %v3504, 0
      %v3597 = vsel %vm1565, %v3505, 0
      %v3600 = vsel %vm1565, %v3506, 0
      %v3603 = vsel %vm1565, %v3507, 0
      %v3606 = vsel %vm1565, %v3508, 0
      %v3609 = vsel %vm1565, %v3509, 0
      %v3612 = vsel %vm1662, %v3514, 0
      %3614 = vmatprep.subr.mxu0 0.0
      %3615 = vmatpush1.msra.mxu0 %v3510
      %3616 = vmatprep.subr.mxu0 0.0
      %3617 = vmatpush1.msra.mxu0 %v3511
      %3618 = vmatprep.subr.mxu0 0.0
      %3619 = vmatpush1.msra.mxu0 %v3512
      %3620 = vmatprep.subr.mxu0 0.0
      %3621 = vmatpush1.msra.mxu0 %v3513
      %3622 = vmatprep.subr.mxu0 0.0
      %3623 = vmatpush1.msra.mxu0 %v3612
      %3624 = vmatprep.subr.mxu0 0.0
      %3625 = vmatpush1.msra.mxu0 0.0
      %3626 = vmatprep.subr.mxu0 0.0
      %3627 = vmatpush1.msra.mxu0 0.0
      %3628 = vmatprep.subr.mxu0 0.0
      %3629 = vmatpush1.msra.mxu0 0.0
      %3630 = vmatprep.subr.mxu0 0.0
      %3631 = vmatpush1.msra.mxu0 0.0
      %3632 = vmatprep.subr.mxu0 0.0
      %3633 = vmatpush1.msra.mxu0 0.0
      %3634 = vmatprep.subr.mxu0 0.0
      %3635 = vmatpush1.msra.mxu0 0.0
      %3636 = vmatprep.subr.mxu0 0.0
      %3637 = vmatpush1.msra.mxu0 0.0
      %3638 = vmatprep.subr.mxu0 0.0
      %3639 = vmatpush1.msra.mxu0 0.0
      %3640 = vmatprep.subr.mxu0 0.0
      %3641 = vmatpush1.msra.mxu0 0.0
      %3642 = vmatprep.subr.mxu0 0.0
      %3643 = vmatpush1.msra.mxu0 0.0
      %3644 = vmatprep.subr.mxu0 0.0
      %3645 = vmatpush1.msra.mxu0 0.0
      %3646 = vmatprep.subr.mxu0 0.0
      %3647 = vmatpush1.msra.mxu0 0.0
      %3648 = vmatprep.subr.mxu0 0.0
      %3649 = vmatpush1.msra.mxu0 0.0
      %3650 = vmatprep.subr.mxu0 0.0
      %3651 = vmatpush1.msra.mxu0 0.0
      %3652 = vmatprep.subr.mxu0 0.0
      %3653 = vmatpush1.msra.mxu0 0.0
      %3654 = vmatprep.subr.mxu0 0.0
      %3655 = vmatpush1.msra.mxu0 0.0
      %3656 = vmatprep.subr.mxu0 0.0
      %3657 = vmatpush1.msra.mxu0 0.0
      %3658 = vmatprep.subr.mxu0 0.0
      %3659 = vmatpush1.msra.mxu0 0.0
      %3660 = vmatprep.subr.mxu0 0.0
      %3661 = vmatpush1.msra.mxu0 0.0
      %3662 = vmatprep.subr.mxu0 0.0
      %3663 = vmatpush1.msra.mxu0 0.0
      %3664 = vmatprep.subr.mxu0 0.0
      %3665 = vmatpush1.msra.mxu0 0.0
      %3666 = vmatprep.subr.mxu0 0.0
      %3667 = vmatpush1.msra.mxu0 0.0
      %3668 = vmatprep.subr.mxu0 0.0
      %3669 = vmatpush1.msra.mxu0 0.0
      %3670 = vmatprep.subr.mxu0 0.0
      %3671 = vmatpush1.msra.mxu0 0.0
      %3672 = vmatprep.subr.mxu0 0.0
      %3673 = vmatpush1.msra.mxu0 0.0
      %3674 = vmatprep.subr.mxu0 0.0
      %3675 = vmatpush1.msra.mxu0 0.0
      %3676 = vmatprep.subr.mxu0 0.0
      %3677 = vmatpush1.msra.mxu0 0.0
      %3678 = vmatprep.mubr.f32.mxu0 0.0
      %3679 = vmatmul.mubr.f32.gmra.mrb[0].mxu0 %v3516
      %v3680 = vpop.f32.mrb[0].mxu0
      %v3681 = vadd.f32 0.0, %v3680
      %v3682 = vpop.f32.mrb[0].mxu0
      %3683 = vmatprep.mubr.f32.mxu0 0.0
      %3684 = vmatmul.mubr.f32.gmra.mrb[0].mxu0 %v3519
      %v3685 = vpop.f32.mrb[0].mxu0
      %v3686 = vadd.f32 0.0, %v3685
      %v3687 = vpop.f32.mrb[0].mxu0
      %3688 = vmatprep.mubr.f32.mxu0 0.0
      %3689 = vmatmul.mubr.f32.gmra.mrb[0].mxu0 %v3522
      %v3690 = vpop.f32.mrb[0].mxu0
      %v3691 = vadd.f32 0.0, %v3690
      %v3692 = vpop.f32.mrb[0].mxu0
      %3693 = vmatprep.mubr.f32.mxu0 0.0
      %3694 = vmatmul.mubr.f32.gmra.mrb[0].mxu0 %v3525
      %v3695 = vpop.f32.mrb[0].mxu0
      %v3696 = vadd.f32 0.0, %v3695
      %v3697 = vpop.f32.mrb[0].mxu0
      %3698 = vmatprep.mubr.f32.mxu0 0.0
      %3699 = vmatmul.mubr.f32.gmra.mrb[0].mxu0 %v3528
      %v3700 = vpop.f32.mrb[0].mxu0
      %v3701 = vadd.f32 0.0, %v3700
      %v3702 = vpop.f32.mrb[0].mxu0
      %3703 = vmatprep.mubr.f32.mxu0 0.0
      %3704 = vmatmul.mubr.f32.gmra.mrb[0].mxu0 %v3531
      %v3705 = vpop.f32.mrb[0].mxu0
      %v3706 = vadd.f32 0.0, %v3705
      %v3707 = vpop.f32.mrb[0].mxu0
      %3708 = vmatprep.mubr.f32.mxu0 0.0
      %3709 = vmatmul.mubr.f32.gmra.mrb[0].mxu0 %v3534
      %v3710 = vpop.f32.mrb[0].mxu0
      %v3711 = vadd.f32 0.0, %v3710
      %v3712 = vpop.f32.mrb[0].mxu0
      %3713 = vmatprep.mubr.f32.mxu0 0.0
      %3714 = vmatmul.mubr.f32.gmra.mrb[0].mxu0 %v3537
      %v3715 = vpop.f32.mrb[0].mxu0
      %v3716 = vadd.f32 0.0, %v3715
      %v3717 = vpop.f32.mrb[0].mxu0
      %3718 = vmatprep.mubr.f32.mxu0 0.0
      %3719 = vmatmul.mubr.f32.gmra.mrb[0].mxu0 %v3540
      %v3720 = vpop.f32.mrb[0].mxu0
      %v3721 = vadd.f32 0.0, %v3720
      %v3722 = vpop.f32.mrb[0].mxu0
      %3723 = vmatprep.mubr.f32.mxu0 0.0
      %3724 = vmatmul.mubr.f32.gmra.mrb[0].mxu0 %v3543
      %v3725 = vpop.f32.mrb[0].mxu0
      %v3726 = vadd.f32 0.0, %v3725
      %v3727 = vpop.f32.mrb[0].mxu0
      %3728 = vmatprep.mubr.f32.mxu0 0.0
      %3729 = vmatmul.mubr.f32.gmra.mrb[0].mxu0 %v3546
      %v3730 = vpop.f32.mrb[0].mxu0
      %v3731 = vadd.f32 0.0, %v3730
      %v3732 = vpop.f32.mrb[0].mxu0
      %3733 = vmatprep.mubr.f32.mxu0 0.0
      %3734 = vmatmul.mubr.f32.gmra.mrb[0].mxu0 %v3549
      %v3735 = vpop.f32.mrb[0].mxu0
      %v3736 = vadd.f32 0.0, %v3735
      %v3737 = vpop.f32.mrb[0].mxu0
      %3738 = vmatprep.mubr.f32.mxu0 0.0
      %3739 = vmatmul.mubr.f32.gmra.mrb[0].mxu0 %v3552
      %v3740 = vpop.f32.mrb[0].mxu0
      %v3741 = vadd.f32 0.0, %v3740
      %v3742 = vpop.f32.mrb[0].mxu0
      %3743 = vmatprep.mubr.f32.mxu0 0.0
      %3744 = vmatmul.mubr.f32.gmra.mrb[0].mxu0 %v3555
      %v3745 = vpop.f32.mrb[0].mxu0
      %v3746 = vadd.f32 0.0, %v3745
      %v3747 = vpop.f32.mrb[0].mxu0
      %3748 = vmatprep.mubr.f32.mxu0 0.0
      %3749 = vmatmul.mubr.f32.gmra.mrb[0].mxu0 %v3558
      %v3750 = vpop.f32.mrb[0].mxu0
      %v3751 = vadd.f32 0.0, %v3750
      %v3752 = vpop.f32.mrb[0].mxu0
      %3753 = vmatprep.mubr.f32.mxu0 0.0
      %3754 = vmatmul.mubr.f32.gmra.mrb[0].mxu0 %v3561
      %v3755 = vpop.f32.mrb[0].mxu0
      %v3756 = vadd.f32 0.0, %v3755
      %v3757 = vpop.f32.mrb[0].mxu0
      %3758 = vmatprep.mubr.f32.mxu0 0.0
      %3759 = vmatmul.mubr.f32.gmra.mrb[0].mxu0 %v3564
      %v3760 = vpop.f32.mrb[0].mxu0
      %v3761 = vadd.f32 0.0, %v3760
      %v3762 = vpop.f32.mrb[0].mxu0
      %3763 = vmatprep.mubr.f32.mxu0 0.0
      %3764 = vmatmul.mubr.f32.gmra.mrb[0].mxu0 %v3567
      %v3765 = vpop.f32.mrb[0].mxu0
      %v3766 = vadd.f32 0.0, %v3765
      %v3767 = vpop.f32.mrb[0].mxu0
      %3768 = vmatprep.mubr.f32.mxu0 0.0
      %3769 = vmatmul.mubr.f32.gmra.mrb[0].mxu0 %v3570
      %v3770 = vpop.f32.mrb[0].mxu0
      %v3771 = vadd.f32 0.0, %v3770
      %v3772 = vpop.f32.mrb[0].mxu0
      %3773 = vmatprep.mubr.f32.mxu0 0.0
      %3774 = vmatmul.mubr.f32.gmra.mrb[0].mxu0 %v3573
      %v3775 = vpop.f32.mrb[0].mxu0
      %v3776 = vadd.f32 0.0, %v3775
      %v3777 = vpop.f32.mrb[0].mxu0
      %3778 = vmatprep.mubr.f32.mxu0 0.0
      %3779 = vmatmul.mubr.f32.gmra.mrb[0].mxu0 %v3576
      %v3780 = vpop.f32.mrb[0].mxu0
      %v3781 = vadd.f32 0.0, %v3780
      %v3782 = vpop.f32.mrb[0].mxu0
      %3783 = vmatprep.mubr.f32.mxu0 0.0
      %3784 = vmatmul.mubr.f32.gmra.mrb[0].mxu0 %v3579
      %v3785 = vpop.f32.mrb[0].mxu0
      %v3786 = vadd.f32 0.0, %v3785
      %v3787 = vpop.f32.mrb[0].mxu0
      %3788 = vmatprep.mubr.f32.mxu0 0.0
      %3789 = vmatmul.mubr.f32.gmra.mrb[0].mxu0 %v3582
      %v3790 = vpop.f32.mrb[0].mxu0
      %v3791 = vadd.f32 0.0, %v3790
      %v3792 = vpop.f32.mrb[0].mxu0
      %3793 = vmatprep.mubr.f32.mxu0 0.0
      %3794 = vmatmul.mubr.f32.gmra.mrb[0].mxu0 %v3585
      %v3795 = vpop.f32.mrb[0].mxu0
      %v3796 = vadd.f32 0.0, %v3795
      %v3797 = vpop.f32.mrb[0].mxu0
      %3798 = vmatprep.mubr.f32.mxu0 0.0
      %3799 = vmatmul.mubr.f32.gmra.mrb[0].mxu0 %v3588
      %v3800 = vpop.f32.mrb[0].mxu0
      %v3801 = vadd.f32 0.0, %v3800
      %v3802 = vpop.f32.mrb[0].mxu0
      %3803 = vmatprep.mubr.f32.mxu0 0.0
      %3804 = vmatmul.mubr.f32.gmra.mrb[0].mxu0 %v3591
      %v3805 = vpop.f32.mrb[0].mxu0
      %v3806 = vadd.f32 0.0, %v3805
      %v3807 = vpop.f32.mrb[0].mxu0
      %3808 = vmatprep.mubr.f32.mxu0 0.0
      %3809 = vmatmul.mubr.f32.gmra.mrb[0].mxu0 %v3594
      %v3810 = vpop.f32.mrb[0].mxu0
      %v3811 = vadd.f32 0.0, %v3810
      %v3812 = vpop.f32.mrb[0].mxu0
      %3813 = vmatprep.mubr.f32.mxu0 0.0
      %3814 = vmatmul.mubr.f32.gmra.mrb[0].mxu0 %v3597
      %v3815 = vpop.f32.mrb[0].mxu0
      %v3816 = vadd.f32 0.0, %v3815
      %v3817 = vpop.f32.mrb[0].mxu0
      %3818 = vmatprep.mubr.f32.mxu0 0.0
      %3819 = vmatmul.mubr.f32.gmra.mrb[0].mxu0 %v3600
      %v3820 = vpop.f32.mrb[0].mxu0
      %v3821 = vadd.f32 0.0, %v3820
      %v3822 = vpop.f32.mrb[0].mxu0
      %3823 = vmatprep.mubr.f32.mxu0 0.0
      %3824 = vmatmul.mubr.f32.gmra.mrb[0].mxu0 %v3603
      %v3825 = vpop.f32.mrb[0].mxu0
      %v3826 = vadd.f32 0.0, %v3825
      %v3827 = vpop.f32.mrb[0].mxu0
      %3828 = vmatprep.mubr.f32.mxu0 0.0
      %3829 = vmatmul.mubr.f32.gmra.mrb[0].mxu0 %v3606
      %v3830 = vpop.f32.mrb[0].mxu0
      %v3831 = vadd.f32 0.0, %v3830
      %v3832 = vpop.f32.mrb[0].mxu0
      %3833 = vmatprep.mubr.f32.mxu0 0.0
      %3834 = vmatmul.mubr.f32.gmra.mrb[0].mxu0 %v3609
      %v3835 = vpop.f32.mrb[0].mxu0
      %v3836 = vadd.f32 0.0, %v3835
      %v3837 = vpop.f32.mrb[0].mxu0
      %3838 = vdwg.mxu0
      %v3839 = vsel %vm204, %v3681, 0.0
      %v3840 = vsel %vm204, %v3686, 0.0
      %v3841 = vadd.f32 %v3839, %v3840
      %v3842 = vsel %vm204, %v3691, 0.0
      %v3843 = vadd.f32 %v3841, %v3842
      %v3844 = vsel %vm204, %v3696, 0.0
      %v3845 = vadd.f32 %v3843, %v3844
      %v3846 = vsel %vm204, %v3701, 0.0
      %v3847 = vadd.f32 %v3845, %v3846
      %v3848 = vsel %vm204, %v3706, 0.0
      %v3849 = vadd.f32 %v3847, %v3848
      %v3850 = vsel %vm204, %v3711, 0.0
      %v3851 = vadd.f32 %v3849, %v3850
      %v3852 = vsel %vm204, %v3716, 0.0
      %v3853 = vadd.f32 %v3851, %v3852
      %v3854 = vsel %vm204, %v3721, 0.0
      %v3855 = vadd.f32 %v3853, %v3854
      %v3856 = vsel %vm204, %v3726, 0.0
      %v3857 = vadd.f32 %v3855, %v3856
      %v3858 = vsel %vm204, %v3731, 0.0
      %v3859 = vadd.f32 %v3857, %v3858
      %v3860 = vsel %vm204, %v3736, 0.0
      %v3861 = vadd.f32 %v3859, %v3860
      %v3862 = vsel %vm204, %v3741, 0.0
      %v3863 = vadd.f32 %v3861, %v3862
      %v3864 = vsel %vm204, %v3746, 0.0
      %v3865 = vadd.f32 %v3863, %v3864
      %v3866 = vsel %vm204, %v3751, 0.0
      %v3867 = vadd.f32 %v3865, %v3866
      %v3868 = vsel %vm204, %v3756, 0.0
      %v3869 = vadd.f32 %v3867, %v3868
      %v3870 = vsel %vm204, %v3761, 0.0
      %v3871 = vadd.f32 %v3869, %v3870
      %v3872 = vsel %vm204, %v3766, 0.0
      %v3873 = vadd.f32 %v3871, %v3872
      %v3874 = vsel %vm204, %v3771, 0.0
      %v3875 = vadd.f32 %v3873, %v3874
      %v3876 = vsel %vm204, %v3776, 0.0
      %v3877 = vadd.f32 %v3875, %v3876
      %v3878 = vsel %vm204, %v3781, 0.0
      %v3879 = vadd.f32 %v3877, %v3878
      %v3880 = vsel %vm204, %v3786, 0.0
      %v3881 = vadd.f32 %v3879, %v3880
      %v3882 = vsel %vm204, %v3791, 0.0
      %v3883 = vadd.f32 %v3881, %v3882
      %v3884 = vsel %vm204, %v3796, 0.0
      %v3885 = vadd.f32 %v3883, %v3884
      %v3886 = vsel %vm204, %v3801, 0.0
      %v3887 = vadd.f32 %v3885, %v3886
      %v3888 = vsel %vm204, %v3806, 0.0
      %v3889 = vadd.f32 %v3887, %v3888
      %v3890 = vsel %vm204, %v3811, 0.0
      %v3891 = vadd.f32 %v3889, %v3890
      %v3892 = vsel %vm204, %v3816, 0.0
      %v3893 = vadd.f32 %v3891, %v3892
      %v3894 = vsel %vm204, %v3821, 0.0
      %v3895 = vadd.f32 %v3893, %v3894
      %v3896 = vsel %vm204, %v3826, 0.0
      %v3897 = vadd.f32 %v3895, %v3896
      %v3898 = vsel %vm204, %v3831, 0.0
      %v3899 = vadd.f32 %v3897, %v3898
      %v3900 = vsel %vm204, %v3836, 0.0
      %v3901 = vadd.f32 %v3899, %v3900
      %v3902 = vrot.slane %v3901, 4
      %v3903 = vadd.f32 %v3901, %v3902
      %v3904 = vrot.slane %v3903, 2
      %v3905 = vadd.f32 %v3903, %v3904
      %v3906 = vrot.slane %v3905, 1
      %v3907 = vadd.f32 %v3905, %v3906
      %v3908 = vmul.f32 %v3907, 0.00390625
      %v3909 = vmul.f32 %v3681, %v3681
      %v3910 = vmul.f32 %v3686, %v3686
      %v3911 = vmul.f32 %v3691, %v3691
      %v3912 = vmul.f32 %v3696, %v3696
      %v3913 = vmul.f32 %v3701, %v3701
      %v3914 = vmul.f32 %v3706, %v3706
      %v3915 = vmul.f32 %v3711, %v3711
      %v3916 = vmul.f32 %v3716, %v3716
      %v3917 = vmul.f32 %v3721, %v3721
      %v3918 = vmul.f32 %v3726, %v3726
      %v3919 = vmul.f32 %v3731, %v3731
      %v3920 = vmul.f32 %v3736, %v3736
      %v3921 = vmul.f32 %v3741, %v3741
      %v3922 = vmul.f32 %v3746, %v3746
      %v3923 = vmul.f32 %v3751, %v3751
      %v3924 = vmul.f32 %v3756, %v3756
      %v3925 = vmul.f32 %v3761, %v3761
      %v3926 = vmul.f32 %v3766, %v3766
      %v3927 = vmul.f32 %v3771, %v3771
      %v3928 = vmul.f32 %v3776, %v3776
      %v3929 = vmul.f32 %v3781, %v3781
      %v3930 = vmul.f32 %v3786, %v3786
      %v3931 = vmul.f32 %v3791, %v3791
      %v3932 = vmul.f32 %v3796, %v3796
      %v3933 = vmul.f32 %v3801, %v3801
      %v3934 = vmul.f32 %v3806, %v3806
      %v3935 = vmul.f32 %v3811, %v3811
      %v3936 = vmul.f32 %v3816, %v3816
      %v3937 = vmul.f32 %v3821, %v3821
      %v3938 = vmul.f32 %v3826, %v3826
      %v3939 = vmul.f32 %v3831, %v3831
      %v3940 = vmul.f32 %v3836, %v3836
      %v3941 = vsel %vm204, %v3909, 0.0
      %v3942 = vsel %vm204, %v3910, 0.0
      %v3943 = vadd.f32 %v3941, %v3942
      %v3944 = vsel %vm204, %v3911, 0.0
      %v3945 = vadd.f32 %v3943, %v3944
      %v3946 = vsel %vm204, %v3912, 0.0
      %v3947 = vadd.f32 %v3945, %v3946
      %v3948 = vsel %vm204, %v3913, 0.0
      %v3949 = vadd.f32 %v3947, %v3948
      %v3950 = vsel %vm204, %v3914, 0.0
      %v3951 = vadd.f32 %v3949, %v3950
      %v3952 = vsel %vm204, %v3915, 0.0
      %v3953 = vadd.f32 %v3951, %v3952
      %v3954 = vsel %vm204, %v3916, 0.0
      %v3955 = vadd.f32 %v3953, %v3954
      %v3956 = vsel %vm204, %v3917, 0.0
      %v3957 = vadd.f32 %v3955, %v3956
      %v3958 = vsel %vm204, %v3918, 0.0
      %v3959 = vadd.f32 %v3957, %v3958
      %v3960 = vsel %vm204, %v3919, 0.0
      %v3961 = vadd.f32 %v3959, %v3960
      %v3962 = vsel %vm204, %v3920, 0.0
      %v3963 = vadd.f32 %v3961, %v3962
      %v3964 = vsel %vm204, %v3921, 0.0
      %v3965 = vadd.f32 %v3963, %v3964
      %v3966 = vsel %vm204, %v3922, 0.0
      %v3967 = vadd.f32 %v3965, %v3966
      %v3968 = vsel %vm204, %v3923, 0.0
      %v3969 = vadd.f32 %v3967, %v3968
      %v3970 = vsel %vm204, %v3924, 0.0
      %v3971 = vadd.f32 %v3969, %v3970
      %v3972 = vsel %vm204, %v3925, 0.0
      %v3973 = vadd.f32 %v3971, %v3972
      %v3974 = vsel %vm204, %v3926, 0.0
      %v3975 = vadd.f32 %v3973, %v3974
      %v3976 = vsel %vm204, %v3927, 0.0
      %v3977 = vadd.f32 %v3975, %v3976
      %v3978 = vsel %vm204, %v3928, 0.0
      %v3979 = vadd.f32 %v3977, %v3978
      %v3980 = vsel %vm204, %v3929, 0.0
      %v3981 = vadd.f32 %v3979, %v3980
      %v3982 = vsel %vm204, %v3930, 0.0
      %v3983 = vadd.f32 %v3981, %v3982
      %v3984 = vsel %vm204, %v3931, 0.0
      %v3985 = vadd.f32 %v3983, %v3984
      %v3986 = vsel %vm204, %v3932, 0.0
      %v3987 = vadd.f32 %v3985, %v3986
      %v3988 = vsel %vm204, %v3933, 0.0
      %v3989 = vadd.f32 %v3987, %v3988
      %v3990 = vsel %vm204, %v3934, 0.0
      %v3991 = vadd.f32 %v3989, %v3990
      %v3992 = vsel %vm204, %v3935, 0.0
      %v3993 = vadd.f32 %v3991, %v3992
      %v3994 = vsel %vm204, %v3936, 0.0
      %v3995 = vadd.f32 %v3993, %v3994
      %v3996 = vsel %vm204, %v3937, 0.0
      %v3997 = vadd.f32 %v3995, %v3996
      %v3998 = vsel %vm204, %v3938, 0.0
      %v3999 = vadd.f32 %v3997, %v3998
      %v4000 = vsel %vm204, %v3939, 0.0
      %v4001 = vadd.f32 %v3999, %v4000
      %v4002 = vsel %vm204, %v3940, 0.0
      %v4003 = vadd.f32 %v4001, %v4002
      %v4004 = vrot.slane %v4003, 4
      %v4005 = vadd.f32 %v4003, %v4004
      %v4006 = vrot.slane %v4005, 2
      %v4007 = vadd.f32 %v4005, %v4006
      %v4008 = vrot.slane %v4007, 1
      %v4009 = vadd.f32 %v4007, %v4008
      %v4010 = vmul.f32 %v4009, 0.00390625
      %v4011 = vmul.f32 %v3908, %v3908
      %v4012 = vsub.f32 %v4010, %v4011
      %v4013 = vmax.f32 %v4012, 0.0
      %v4014 = vadd.f32 %v4013, 1e-05
      %v4015 = vrsqrt.pop %v4014
      %v4016 = vsub.f32 %v3681, %v3908
      %v4017 = vsub.f32 %v3686, %v3908
      %v4018 = vsub.f32 %v3691, %v3908
      %v4019 = vsub.f32 %v3696, %v3908
      %v4020 = vsub.f32 %v3701, %v3908
      %v4021 = vsub.f32 %v3706, %v3908
      %v4022 = vsub.f32 %v3711, %v3908
      %v4023 = vsub.f32 %v3716, %v3908
      %v4024 = vsub.f32 %v3721, %v3908
      %v4025 = vsub.f32 %v3726, %v3908
      %v4026 = vsub.f32 %v3731, %v3908
      %v4027 = vsub.f32 %v3736, %v3908
      %v4028 = vsub.f32 %v3741, %v3908
      %v4029 = vsub.f32 %v3746, %v3908
      %v4030 = vsub.f32 %v3751, %v3908
      %v4031 = vsub.f32 %v3756, %v3908
      %v4032 = vsub.f32 %v3761, %v3908
      %v4033 = vsub.f32 %v3766, %v3908
      %v4034 = vsub.f32 %v3771, %v3908
      %v4035 = vsub.f32 %v3776, %v3908
      %v4036 = vsub.f32 %v3781, %v3908
      %v4037 = vsub.f32 %v3786, %v3908
      %v4038 = vsub.f32 %v3791, %v3908
      %v4039 = vsub.f32 %v3796, %v3908
      %v4040 = vsub.f32 %v3801, %v3908
      %v4041 = vsub.f32 %v3806, %v3908
      %v4042 = vsub.f32 %v3811, %v3908
      %v4043 = vsub.f32 %v3816, %v3908
      %v4044 = vsub.f32 %v3821, %v3908
      %v4045 = vsub.f32 %v3826, %v3908
      %v4046 = vsub.f32 %v3831, %v3908
      %v4047 = vsub.f32 %v3836, %v3908
      %v4048 = vmul.f32 %v4016, %v4015
      %v4049 = vmul.f32 %v4017, %v4015
      %v4050 = vmul.f32 %v4018, %v4015
      %v4051 = vmul.f32 %v4019, %v4015
      %v4052 = vmul.f32 %v4020, %v4015
      %v4053 = vmul.f32 %v4021, %v4015
      %v4054 = vmul.f32 %v4022, %v4015
      %v4055 = vmul.f32 %v4023, %v4015
      %v4056 = vmul.f32 %v4024, %v4015
      %v4057 = vmul.f32 %v4025, %v4015
      %v4058 = vmul.f32 %v4026, %v4015
      %v4059 = vmul.f32 %v4027, %v4015
      %v4060 = vmul.f32 %v4028, %v4015
      %v4061 = vmul.f32 %v4029, %v4015
      %v4062 = vmul.f32 %v4030, %v4015
      %v4063 = vmul.f32 %v4031, %v4015
      %v4064 = vmul.f32 %v4032, %v4015
      %v4065 = vmul.f32 %v4033, %v4015
      %v4066 = vmul.f32 %v4034, %v4015
      %v4067 = vmul.f32 %v4035, %v4015
      %v4068 = vmul.f32 %v4036, %v4015
      %v4069 = vmul.f32 %v4037, %v4015
      %v4070 = vmul.f32 %v4038, %v4015
      %v4071 = vmul.f32 %v4039, %v4015
      %v4072 = vmul.f32 %v4040, %v4015
      %v4073 = vmul.f32 %v4041, %v4015
      %v4074 = vmul.f32 %v4042, %v4015
      %v4075 = vmul.f32 %v4043, %v4015
      %v4076 = vmul.f32 %v4044, %v4015
      %v4077 = vmul.f32 %v4045, %v4015
      %v4078 = vmul.f32 %v4046, %v4015
      %v4079 = vmul.f32 %v4047, %v4015
      %v4080 = vadd.f32 %v171, %v4048
      %v4081 = vadd.f32 %v172, %v4049
      %v4082 = vadd.f32 %v173, %v4050
      %v4083 = vadd.f32 %v174, %v4051
      %v4084 = vadd.f32 %v175, %v4052
      %v4085 = vadd.f32 %v176, %v4053
      %v4086 = vadd.f32 %v177, %v4054
      %v4087 = vadd.f32 %v178, %v4055
      %v4088 = vadd.f32 %v179, %v4056
      %v4089 = vadd.f32 %v180, %v4057
      %v4090 = vadd.f32 %v181, %v4058
      %v4091 = vadd.f32 %v182, %v4059
      %v4092 = vadd.f32 %v183, %v4060
      %v4093 = vadd.f32 %v184, %v4061
      %v4094 = vadd.f32 %v185, %v4062
      %v4095 = vadd.f32 %v186, %v4063
      %v4096 = vadd.f32 %v187, %v4064
      %v4097 = vadd.f32 %v188, %v4065
      %v4098 = vadd.f32 %v189, %v4066
      %v4099 = vadd.f32 %v190, %v4067
      %v4100 = vadd.f32 %v191, %v4068
      %v4101 = vadd.f32 %v192, %v4069
      %v4102 = vadd.f32 %v193, %v4070
      %v4103 = vadd.f32 %v194, %v4071
      %v4104 = vadd.f32 %v195, %v4072
      %v4105 = vadd.f32 %v196, %v4073
      %v4106 = vadd.f32 %v197, %v4074
      %v4107 = vadd.f32 %v198, %v4075
      %v4108 = vadd.f32 %v199, %v4076
      %v4109 = vadd.f32 %v200, %v4077
      %v4110 = vadd.f32 %v201, %v4078
      %v4111 = vadd.f32 %v202, %v4079
      %4112 = vst.msk [vmem:[%s170] sm:$0xff] %vm204, %v4080
      %4113 = vst.msk [vmem:[%s170 + $0x8] sm:$0xff] %vm204, %v4081
      %4114 = vst.msk [vmem:[%s170 + $0x10] sm:$0xff] %vm204, %v4082
      %4115 = vst.msk [vmem:[%s170 + $0x18] sm:$0xff] %vm204, %v4083
      %4116 = vst.msk [vmem:[%s170 + $0x20] sm:$0xff] %vm204, %v4084
      %4117 = vst.msk [vmem:[%s170 + $0x28] sm:$0xff] %vm204, %v4085
      %4118 = vst.msk [vmem:[%s170 + $0x30] sm:$0xff] %vm204, %v4086
      %4119 = vst.msk [vmem:[%s170 + $0x38] sm:$0xff] %vm204, %v4087
      %4120 = vst.msk [vmem:[%s170 + $0x40] sm:$0xff] %vm204, %v4088
      %4121 = vst.msk [vmem:[%s170 + $0x48] sm:$0xff] %vm204, %v4089
      %4122 = vst.msk [vmem:[%s170 + $0x50] sm:$0xff] %vm204, %v4090
      %4123 = vst.msk [vmem:[%s170 + $0x58] sm:$0xff] %vm204, %v4091
      %4124 = vst.msk [vmem:[%s170 + $0x60] sm:$0xff] %vm204, %v4092
      %4125 = vst.msk [vmem:[%s170 + $0x68] sm:$0xff] %vm204, %v4093
      %4126 = vst.msk [vmem:[%s170 + $0x70] sm:$0xff] %vm204, %v4094
      %4127 = vst.msk [vmem:[%s170 + $0x78] sm:$0xff] %vm204, %v4095
      %4128 = vst.msk [vmem:[%s170 + $0x80] sm:$0xff] %vm204, %v4096
      %4129 = vst.msk [vmem:[%s170 + $0x88] sm:$0xff] %vm204, %v4097
      %4130 = vst.msk [vmem:[%s170 + $0x90] sm:$0xff] %vm204, %v4098
      %4131 = vst.msk [vmem:[%s170 + $0x98] sm:$0xff] %vm204, %v4099
      %4132 = vst.msk [vmem:[%s170 + $0xa0] sm:$0xff] %vm204, %v4100
      %4133 = vst.msk [vmem:[%s170 + $0xa8] sm:$0xff] %vm204, %v4101
      %4134 = vst.msk [vmem:[%s170 + $0xb0] sm:$0xff] %vm204, %v4102
      %4135 = vst.msk [vmem:[%s170 + $0xb8] sm:$0xff] %vm204, %v4103
      %4136 = vst.msk [vmem:[%s170 + $0xc0] sm:$0xff] %vm204, %v4104
      %4137 = vst.msk [vmem:[%s170 + $0xc8] sm:$0xff] %vm204, %v4105
      %4138 = vst.msk [vmem:[%s170 + $0xd0] sm:$0xff] %vm204, %v4106
      %4139 = vst.msk [vmem:[%s170 + $0xd8] sm:$0xff] %vm204, %v4107
      %4140 = vst.msk [vmem:[%s170 + $0xe0] sm:$0xff] %vm204, %v4108
      %4141 = vst.msk [vmem:[%s170 + $0xe8] sm:$0xff] %vm204, %v4109
      %4142 = vst.msk [vmem:[%s170 + $0xf0] sm:$0xff] %vm204, %v4110
      %4143 = vst.msk [vmem:[%s170 + $0xf8] sm:$0xff] %vm204, %v4111
      %p4144 = scmp.lt.s32.totalorder %s14, 1
      %s4145 = scalar_select %p4144, %s14, 1
      %s4146 = smul.addr %s4145, 32
      %s4147 = smul.addr %s4146, 8
      %s4148 = scalar_lea.vmem %s3, %s4147
      // Predicated region
      $region33: #{tpu_custom_call.1} parent=31 // pred_check
        %p4149 = pneg %p100
      $region34: #{tpu_custom_call.1} parent=31 // pred_check_branch
        %4151 = sbr.rel (%p4149) target = $region36
      $region35: #{tpu_custom_call.1} parent=31 // pred_region
        _
      $region36: #{tpu_custom_call.1} parent=31 // pred_fallthru
        _
    $region32: #{tpu_custom_call.1} parent=5 // pred_fallthru
      _
    %p4152 = scmp.le.s32.totalorder 2, %s9
    // Predicated region
    $region37: #{tpu_custom_call.1} parent=5 // pred_check
      %p4153 = pneg %p4152
    $region38: #{tpu_custom_call.1} parent=5 // pred_check_branch
      %4155 = sbr.rel (%p4153) target = $region40
    $region39: #{tpu_custom_call.1} parent=5 // pred_region
      %s4156 = ssub.s32 %s9, 2
      // Predicated region
      $region41: #{tpu_custom_call.1} parent=39 // pred_check
        %p4157 = pneg %p106
      $region42: #{tpu_custom_call.1} parent=39 // pred_check_branch
        %4159 = sbr.rel (%p4157) target = $region44
      $region43: #{tpu_custom_call.1} parent=39 // pred_region
        %p4160 = scmp.lt.s32.totalorder %s15, 1
        %s4161 = scalar_select %p4160, %s15, 1
        %s4162 = smul.addr %s4161, 32
        %s4163 = smul.addr %s4162, 8
        %s4164 = scalar_lea.vmem %s3, %s4163
      $region44: #{tpu_custom_call.1} parent=39 // pred_fallthru
        _
    $region40: #{tpu_custom_call.1} parent=5 // pred_fallthru
      _
  $region6: #{tpu_custom_call.1} parent=0 // loop_footer
    %s13 = sadd.s32 1, %s9
  $region7: #{tpu_custom_call.1} parent=0 // loop_footer_branch
    %8 = sbr.rel target = $region3
  $region8: #{tpu_custom_call.1} parent=0 // loop_exit
    _

</llo_original>
